<compile_context>
chip_gen: v7x
topology: tpu7x:2x2x1
jax: 0.10.0
libtpu: 0.0.40
codegen_flags: <defaults>
</compile_context>

<pallas_src>
import functools

import jax
import jax.numpy as jnp
from jax.experimental import pallas as pl
from jax.experimental.pallas import tpu as pltpu


def _focus_kernel(x_ref, l_ref, s_ref, b_ref, o_ref, *, h_total):
    """One (batch, row-tile) step of the fused Focus op.

    x_ref: (1, C, 2T, W)     original NCHW rows for this tile (streamed)
    l_ref: (C, 2, OC*T, 2T)  banded: row-parity select + channel mix + BN scale
    s_ref: (2, W, Wo)        0/1 column (lane) de-interleave matrices
    b_ref: (OC*T, 1)         BN bias repeated per output row (f32)
    o_ref: (1, OC, T, Wo), or (1, OC*Ho, Wo) when there is a single row tile
    """
    num_c = x_ref.shape[1]
    two_t = x_ref.shape[2]
    oc_t = l_ref.shape[2]
    wo = s_ref.shape[2]

    # Zero rows that fall beyond H (ragged last tile): keeps 0 * garbage out of
    # the matmuls so valid output rows can never see Inf/NaN contamination.
    r_iota = jax.lax.broadcasted_iota(jnp.int32, (two_t, 1), 0)
    row_valid = (pl.program_id(1) * two_t + r_iota) < h_total

    acc = jnp.zeros((oc_t, wo), dtype=jnp.float32)
    for c in range(num_c):
        xc = jnp.where(row_valid, x_ref[0, c], 0.0)            # (2T, W)
        for wp in range(2):
            # lane de-interleave on the MXU: g[r, wo] = x[c, r, 2*wo + wp]
            g = jnp.dot(xc, s_ref[wp])                         # (2T, Wo)
            # row de-interleave + channel contraction + BN scale (banded L),
            # accumulated in f32 on the MXU.
            acc = acc + jnp.dot(l_ref[c, wp], g,
                                preferred_element_type=jnp.float32)

    y = acc + b_ref[...]                                       # BN bias
    # SiLU with a single EUP push: y*sigmoid(y) == 0.5*y*(1 + tanh(y/2))
    y = y * (0.5 * (jnp.tanh(0.5 * y) + 1.0))

    if len(o_ref.shape) == 4:                                  # (1, OC, T, Wo)
        y = y.reshape(o_ref.shape[1], o_ref.shape[2], o_ref.shape[3])
    o_ref[0] = y.astype(o_ref.dtype)


def _pick_row_tile(n, ho, row_tile_target):
    """Output-row tile T; multiples of 8 keep in-kernel reshapes layout-preserving."""
    if ho <= 8:
        return ho                       # single tile -> merged output path (no reshape)
    t = max(8, (min(row_tile_target, ho) // 8) * 8)
    if n == 1 and pl.cdiv(ho, t) < 2:   # v7x: give both TensorCores a block
        t = max(8, ((ho // 2) // 8) * 8)
    return t


def focus_forward(x, conv_w, gamma, beta, running_mean, running_var,
                  eps=1e-5, row_tile=32, out_dtype=None):
    """Fused Focus forward.

    x:      (N, C, H, W)      f32 or bf16 (whatever the network streams in)
    conv_w: (OC, 4*C, 1, 1)   PyTorch OIHW 1x1 weight, concat order (tl, bl, tr, br)
    Returns (N, OC, H//2, W//2) in `out_dtype` (default: x.dtype).
    """
    N, C, H, W = x.shape
    OC = conv_w.shape[0]
    assert conv_w.shape[1] == 4 * C and H % 2 == 0 and W % 2 == 0
    Ho, Wo = H // 2, W // 2
    out_dtype = x.dtype if out_dtype is None else out_dtype
    cdt = x.dtype                       # MXU input dtype (bf16 x => bf16 matmuls)

    T = _pick_row_tile(N, Ho, row_tile)
    row_tiles = pl.cdiv(Ho, T)
    merged = (row_tiles == 1)           # then T == Ho -> 2D output block, no reshape

    # ---- fold BN scale + PyTorch (tl, bl, tr, br) concat order into constants ----
    # TODO(synk): training-mode BatchNorm (batch statistics) not implemented;
    # inference-mode running-stat BN is folded into the weights/bias.
    f32 = jnp.float32
    scale = gamma.astype(f32) / jnp.sqrt(running_var.astype(f32) + eps)      # (OC,)
    bias = beta.astype(f32) - running_mean.astype(f32) * scale               # (OC,)
    # group g = 2*wp + hp: 0=tl, 1=bl, 2=tr, 3=br  (matches torch.cat order)
    w4 = conv_w.reshape(OC, 4, C).astype(f32) * scale[:, None, None]         # (OC, g, C)

    # Banded "row-parity + channel-mix" matrices L[c, wp] : (OC*T, 2T)
    #   L[c, wp][oc*T + ho, r] = scale[oc] * W[oc, g=2*wp+hp, c]  iff r == 2*ho + hp
    rows = jnp.arange(OC * T)
    oc_of_row = rows // T
    ho_of_row = rows % T
    cols = jnp.arange(2 * T)
    l_parts = []
    for c in range(C):
        per_wp = []
        for wp in range(2):
            m = jnp.zeros((OC * T, 2 * T), f32)
            for hp in range(2):
                hit = (cols[None, :] == (2 * ho_of_row + hp)[:, None]).astype(f32)
                m = m + hit * w4[oc_of_row, 2 * wp + hp, c][:, None]
            per_wp.append(m)
        l_parts.append(jnp.stack(per_wp))
    l_mat = jnp.stack(l_parts).astype(cdt)                   # (C, 2, OC*T, 2T)

    # Column (lane) de-interleave matrices S[wp] : (W, Wo), S[wp][2*wo+wp, wo] = 1
    w_idx = jnp.arange(W)[:, None]
    wo_idx = jnp.arange(Wo)[None, :]
    s_mat = jnp.stack([(w_idx == 2 * wo_idx + wp).astype(f32)
                       for wp in range(2)]).astype(cdt)      # (2, W, Wo)

    b_col = jnp.repeat(bias, T)[:, None]                     # (OC*T, 1), f32

    # ---- output spec: NCHW written directly (last block may be ragged/masked) ----
    if merged:
        out_shape = jax.ShapeDtypeStruct((N, OC * Ho, Wo), out_dtype)
        out_spec = pl.BlockSpec((1, OC * Ho, Wo), lambda n, t: (n, 0, 0))
    else:
        out_shape = jax.ShapeDtypeStruct((N, OC, Ho, Wo), out_dtype)
        out_spec = pl.BlockSpec((1, OC, T, Wo), lambda n, t: (n, 0, t, 0))

    # Explicit scoped-VMEM budget (v5e default is only 16 MiB).
    itemsize_in = jnp.dtype(cdt).itemsize
    itemsize_out = jnp.dtype(out_dtype).itemsize
    x_blk = 2 * C * 2 * T * W * itemsize_in                  # double-buffered
    o_blk = 2 * OC * T * Wo * itemsize_out
    const_b = (l_mat.size + s_mat.size) * itemsize_in + b_col.size * 4
    acc_b = 2 * OC * T * Wo * 4
    vmem_limit = int(min(96 * 1024 * 1024,
                         max(16 * 1024 * 1024,
                             2 * (x_blk + o_blk + const_b + acc_b))))

    sel_macs = 2 * N * C * H * W * Wo                        # lane-select matmuls
    mix_macs = 4 * N * C * OC * T * Ho * Wo                  # banded weight matmuls
    cost = pl.CostEstimate(
        flops=2 * (sel_macs + mix_macs),
        transcendentals=N * OC * Ho * Wo,
        bytes_accessed=x.size * itemsize_in + N * OC * Ho * Wo * itemsize_out + const_b,
    )

    out = pl.pallas_call(
        functools.partial(_focus_kernel, h_total=H),
        out_shape=out_shape,
        grid=(N, row_tiles),
        in_specs=[
            pl.BlockSpec((1, C, 2 * T, W), lambda n, t: (n, 0, t, 0)),       # streamed
            pl.BlockSpec((C, 2, OC * T, 2 * T), lambda n, t: (0, 0, 0, 0)),  # resident
            pl.BlockSpec((2, W, Wo), lambda n, t: (0, 0, 0)),                # resident
            pl.BlockSpec((OC * T, 1), lambda n, t: (0, 0)),                  # resident
        ],
        out_specs=out_spec,
        compiler_params=pltpu.CompilerParams(
            dimension_semantics=("parallel", "parallel"),
            vmem_limit_bytes=vmem_limit),
        cost_estimate=cost,
    )(x, l_mat, s_mat, b_col)

    return out.reshape(N, OC, Ho, Wo)    # free metadata reshape (already NCHW order)


def reference_forward(x, conv_w, gamma, beta, running_mean, running_var, eps=1e-5):
    """Pure-JAX reference of Focus forward (eval-mode BN)."""
    tl = x[..., ::2, ::2]
    tr = x[..., ::2, 1::2]
    bl = x[..., 1::2, ::2]
    br = x[..., 1::2, 1::2]
    xc = jnp.concatenate((tl, bl, tr, br), axis=1)
    y = jax.lax.conv_general_dilated(
        xc, conv_w, window_strides=(1, 1), padding="VALID",
        dimension_numbers=("NCHW", "OIHW", "NCHW"),
    )
    scale = (gamma / jnp.sqrt(running_var + eps))[None, :, None, None]
    bias = (beta - running_mean * gamma / jnp.sqrt(running_var + eps))[None, :, None, None]
    y = y * scale + bias
    return y * jax.nn.sigmoid(y)


if __name__ == "__main__":
    key = jax.random.PRNGKey(0)
    k_x, k_w, k_g, k_b, k_m, k_v, k_x2 = jax.random.split(key, 7)

    # --- primary test: (2, 4, 16, 16), single row tile (merged output path) ---
    N, C, H, W = 2, 4, 16, 16
    OC = 32  # Focus ksize=1, stride=1 (defaults)

    x = jax.random.normal(k_x, (N, C, H, W), dtype=jnp.float32)
    conv_w = jax.random.normal(k_w, (OC, 4 * C, 1, 1), dtype=jnp.float32) * 0.1
    gamma = 1.0 + 0.1 * jax.random.normal(k_g, (OC,), dtype=jnp.float32)
    beta = 0.1 * jax.random.normal(k_b, (OC,), dtype=jnp.float32)
    running_mean = 0.1 * jax.random.normal(k_m, (OC,), dtype=jnp.float32)
    running_var = jnp.abs(1.0 + 0.1 * jax.random.normal(k_v, (OC,), dtype=jnp.float32))

    out = jax.block_until_ready(
        focus_forward(x, conv_w, gamma, beta, running_mean, running_var))
    ref = reference_forward(x, conv_w, gamma, beta, running_mean, running_var)
    assert out.shape == (N, OC, H // 2, W // 2), out.shape
    assert jnp.allclose(out, ref, atol=1e-4, rtol=1e-4), float(jnp.abs(out - ref).max())

    # --- multi-row-tile (production-like) path: grid (1, 2), C=3 like YOLOX stem ---
    x2 = jax.random.normal(k_x2, (1, 3, 32, 32), dtype=jnp.float32)
    conv_w2 = conv_w[:, :12]  # (OC, 4*3, 1, 1)
    out2 = jax.block_until_ready(
        focus_forward(x2, conv_w2, gamma, beta, running_mean, running_var, row_tile=8))
    ref2 = reference_forward(x2, conv_w2, gamma, beta, running_mean, running_var)
    assert out2.shape == (1, OC, 16, 16), out2.shape
    assert jnp.allclose(out2, ref2, atol=1e-4, rtol=1e-4), float(jnp.abs(out2 - ref2).max())

    # --- bf16 output knob (halves the dominant HBM stream; f32 accumulation kept) ---
    out3 = jax.block_until_ready(
        focus_forward(x, conv_w, gamma, beta, running_mean, running_var,
                      out_dtype=jnp.bfloat16))
    assert jnp.allclose(out3.astype(jnp.float32), ref, atol=5e-2, rtol=5e-2), \
        float(jnp.abs(out3.astype(jnp.float32) - ref).max())

    print("KERNEL_OK")
</pallas_src>

<mosaic_0001>
module attributes {stable_mosaic.version = 11 : i64} {
  func.func @_focus_kernel(%arg0: i32, %arg1: i32, %arg2: memref<1x4x16x16xf32, #tpu.memory_space<vmem>>, %arg3: memref<4x2x256x16xf32, #tpu.memory_space<vmem>>, %arg4: memref<2x16x8xf32, #tpu.memory_space<vmem>>, %arg5: memref<256x1xf32, #tpu.memory_space<vmem>>, %arg6: memref<1x256x8xf32, #tpu.memory_space<vmem>>) attributes {dimension_semantics = [#tpu.dimension_semantics<parallel>, #tpu.dimension_semantics<parallel>], iteration_bounds = array<i64: 2, 1>, scalar_prefetch = 0 : i64, scratch_operands = 0 : i64, tpu.core_type = #tpu.core_type<tc>, window_params = [{transform_indices = @transform_0, window_bounds = array<i64: 1, 4, 16, 16>}, {pipeline_mode = #tpu.pipeline_mode<synchronous>, transform_indices = @transform_1, window_bounds = array<i64: 4, 2, 256, 16>}, {pipeline_mode = #tpu.pipeline_mode<synchronous>, transform_indices = @transform_2, window_bounds = array<i64: 2, 16, 8>}, {pipeline_mode = #tpu.pipeline_mode<synchronous>, transform_indices = @transform_3, window_bounds = array<i64: 256, 1>}, {transform_indices = @transform_4, window_bounds = array<i64: 1, 256, 8>}]} {
    %0 = tpu.iota {dimensions = array<i32: 0>} : vector<16x1xi32>
    %c16_i32 = arith.constant 16 : i32
    %1 = arith.muli %arg1, %c16_i32 : i32
    %2 = vector.broadcast %1 : i32 to vector<16x1xi32>
    %3 = arith.addi %2, %0 : vector<16x1xi32>
    %c16_i32_0 = arith.constant 16 : i32
    %4 = vector.broadcast %c16_i32_0 : i32 to vector<16x1xi32>
    %5 = arith.cmpi slt, %3, %4 : vector<16x1xi32>
    %cst = arith.constant 0.000000e+00 : f32
    %6 = vector.broadcast %cst : f32 to vector<256x8xf32>
    %c0 = arith.constant 0 : index
    %c0_1 = arith.constant 0 : index
    %c0_2 = arith.constant 0 : index
    %c0_3 = arith.constant 0 : index
    %7 = vector.load %arg2[%c0, %c0_1, %c0_2, %c0_3] : memref<1x4x16x16xf32, #tpu.memory_space<vmem>>, vector<1x1x16x16xf32>
    %8 = vector.shape_cast %7 : vector<1x1x16x16xf32> to vector<16x16xf32>
    %cst_4 = arith.constant 0.000000e+00 : f32
    %9 = vector.shape_cast %5 : vector<16x1xi1> to vector<16x1xi1>
    %10 = vector.broadcast %9 : vector<16x1xi1> to vector<16x16xi1>
    %11 = vector.broadcast %cst_4 : f32 to vector<16x16xf32>
    %12 = arith.select %10, %8, %11 : vector<16x16xi1>, vector<16x16xf32>
    %c0_5 = arith.constant 0 : index
    %c0_6 = arith.constant 0 : index
    %c0_7 = arith.constant 0 : index
    %13 = vector.load %arg4[%c0_5, %c0_6, %c0_7] : memref<2x16x8xf32, #tpu.memory_space<vmem>>, vector<1x16x8xf32>
    %14 = vector.shape_cast %13 : vector<1x16x8xf32> to vector<16x8xf32>
    %cst_8 = arith.constant dense<0.000000e+00> : vector<16x8xf32>
    %15 = tpu.matmul %12, %14, %cst_8 {dimension_numbers = #tpu.dot_dimension_numbers<[1], [0], [0], [1], [0, 0, 1, 1], [], []>} : vector<16x16xf32>, vector<16x8xf32>, vector<16x8xf32> -> vector<16x8xf32>
    %c0_9 = arith.constant 0 : index
    %c0_10 = arith.constant 0 : index
    %c0_11 = arith.constant 0 : index
    %c0_12 = arith.constant 0 : index
    %16 = vector.load %arg3[%c0_9, %c0_10, %c0_11, %c0_12] : memref<4x2x256x16xf32, #tpu.memory_space<vmem>>, vector<1x1x256x16xf32>
    %17 = vector.shape_cast %16 : vector<1x1x256x16xf32> to vector<256x16xf32>
    %cst_13 = arith.constant dense<0.000000e+00> : vector<256x8xf32>
    %18 = tpu.matmul %17, %15, %cst_13 {dimension_numbers = #tpu.dot_dimension_numbers<[1], [0], [0], [1], [0, 0, 1, 1], [], []>} : vector<256x16xf32>, vector<16x8xf32>, vector<256x8xf32> -> vector<256x8xf32>
    %19 = arith.addf %6, %18 : vector<256x8xf32>
    %c1 = arith.constant 1 : index
    %c0_14 = arith.constant 0 : index
    %c0_15 = arith.constant 0 : index
    %20 = vector.load %arg4[%c1, %c0_14, %c0_15] : memref<2x16x8xf32, #tpu.memory_space<vmem>>, vector<1x16x8xf32>
    %21 = vector.shape_cast %20 : vector<1x16x8xf32> to vector<16x8xf32>
    %cst_16 = arith.constant dense<0.000000e+00> : vector<16x8xf32>
    %22 = tpu.matmul %12, %21, %cst_16 {dimension_numbers = #tpu.dot_dimension_numbers<[1], [0], [0], [1], [0, 0, 1, 1], [], []>} : vector<16x16xf32>, vector<16x8xf32>, vector<16x8xf32> -> vector<16x8xf32>
    %c0_17 = arith.constant 0 : index
    %c1_18 = arith.constant 1 : index
    %c0_19 = arith.constant 0 : index
    %c0_20 = arith.constant 0 : index
    %23 = vector.load %arg3[%c0_17, %c1_18, %c0_19, %c0_20] : memref<4x2x256x16xf32, #tpu.memory_space<vmem>>, vector<1x1x256x16xf32>
    %24 = vector.shape_cast %23 : vector<1x1x256x16xf32> to vector<256x16xf32>
    %cst_21 = arith.constant dense<0.000000e+00> : vector<256x8xf32>
    %25 = tpu.matmul %24, %22, %cst_21 {dimension_numbers = #tpu.dot_dimension_numbers<[1], [0], [0], [1], [0, 0, 1, 1], [], []>} : vector<256x16xf32>, vector<16x8xf32>, vector<256x8xf32> -> vector<256x8xf32>
    %26 = arith.addf %19, %25 : vector<256x8xf32>
    %c0_22 = arith.constant 0 : index
    %c1_23 = arith.constant 1 : index
    %c0_24 = arith.constant 0 : index
    %c0_25 = arith.constant 0 : index
    %27 = vector.load %arg2[%c0_22, %c1_23, %c0_24, %c0_25] : memref<1x4x16x16xf32, #tpu.memory_space<vmem>>, vector<1x1x16x16xf32>
    %28 = vector.shape_cast %27 : vector<1x1x16x16xf32> to vector<16x16xf32>
    %cst_26 = arith.constant 0.000000e+00 : f32
    %29 = vector.shape_cast %5 : vector<16x1xi1> to vector<16x1xi1>
    %30 = vector.broadcast %29 : vector<16x1xi1> to vector<16x16xi1>
    %31 = vector.broadcast %cst_26 : f32 to vector<16x16xf32>
    %32 = arith.select %30, %28, %31 : vector<16x16xi1>, vector<16x16xf32>
    %c0_27 = arith.constant 0 : index
    %c0_28 = arith.constant 0 : index
    %c0_29 = arith.constant 0 : index
    %33 = vector.load %arg4[%c0_27, %c0_28, %c0_29] : memref<2x16x8xf32, #tpu.memory_space<vmem>>, vector<1x16x8xf32>
    %34 = vector.shape_cast %33 : vector<1x16x8xf32> to vector<16x8xf32>
    %cst_30 = arith.constant dense<0.000000e+00> : vector<16x8xf32>
    %35 = tpu.matmul %32, %34, %cst_30 {dimension_numbers = #tpu.dot_dimension_numbers<[1], [0], [0], [1], [0, 0, 1, 1], [], []>} : vector<16x16xf32>, vector<16x8xf32>, vector<16x8xf32> -> vector<16x8xf32>
    %c1_31 = arith.constant 1 : index
    %c0_32 = arith.constant 0 : index
    %c0_33 = arith.constant 0 : index
    %c0_34 = arith.constant 0 : index
    %36 = vector.load %arg3[%c1_31, %c0_32, %c0_33, %c0_34] : memref<4x2x256x16xf32, #tpu.memory_space<vmem>>, vector<1x1x256x16xf32>
    %37 = vector.shape_cast %36 : vector<1x1x256x16xf32> to vector<256x16xf32>
    %cst_35 = arith.constant dense<0.000000e+00> : vector<256x8xf32>
    %38 = tpu.matmul %37, %35, %cst_35 {dimension_numbers = #tpu.dot_dimension_numbers<[1], [0], [0], [1], [0, 0, 1, 1], [], []>} : vector<256x16xf32>, vector<16x8xf32>, vector<256x8xf32> -> vector<256x8xf32>
    %39 = arith.addf %26, %38 : vector<256x8xf32>
    %c1_36 = arith.constant 1 : index
    %c0_37 = arith.constant 0 : index
    %c0_38 = arith.constant 0 : index
    %40 = vector.load %arg4[%c1_36, %c0_37, %c0_38] : memref<2x16x8xf32, #tpu.memory_space<vmem>>, vector<1x16x8xf32>
    %41 = vector.shape_cast %40 : vector<1x16x8xf32> to vector<16x8xf32>
    %cst_39 = arith.constant dense<0.000000e+00> : vector<16x8xf32>
    %42 = tpu.matmul %32, %41, %cst_39 {dimension_numbers = #tpu.dot_dimension_numbers<[1], [0], [0], [1], [0, 0, 1, 1], [], []>} : vector<16x16xf32>, vector<16x8xf32>, vector<16x8xf32> -> vector<16x8xf32>
    %c1_40 = arith.constant 1 : index
    %c1_41 = arith.constant 1 : index
    %c0_42 = arith.constant 0 : index
    %c0_43 = arith.constant 0 : index
    %43 = vector.load %arg3[%c1_40, %c1_41, %c0_42, %c0_43] : memref<4x2x256x16xf32, #tpu.memory_space<vmem>>, vector<1x1x256x16xf32>
    %44 = vector.shape_cast %43 : vector<1x1x256x16xf32> to vector<256x16xf32>
    %cst_44 = arith.constant dense<0.000000e+00> : vector<256x8xf32>
    %45 = tpu.matmul %44, %42, %cst_44 {dimension_numbers = #tpu.dot_dimension_numbers<[1], [0], [0], [1], [0, 0, 1, 1], [], []>} : vector<256x16xf32>, vector<16x8xf32>, vector<256x8xf32> -> vector<256x8xf32>
    %46 = arith.addf %39, %45 : vector<256x8xf32>
    %c0_45 = arith.constant 0 : index
    %c2 = arith.constant 2 : index
    %c0_46 = arith.constant 0 : index
    %c0_47 = arith.constant 0 : index
    %47 = vector.load %arg2[%c0_45, %c2, %c0_46, %c0_47] : memref<1x4x16x16xf32, #tpu.memory_space<vmem>>, vector<1x1x16x16xf32>
    %48 = vector.shape_cast %47 : vector<1x1x16x16xf32> to vector<16x16xf32>
    %cst_48 = arith.constant 0.000000e+00 : f32
    %49 = vector.shape_cast %5 : vector<16x1xi1> to vector<16x1xi1>
    %50 = vector.broadcast %49 : vector<16x1xi1> to vector<16x16xi1>
    %51 = vector.broadcast %cst_48 : f32 to vector<16x16xf32>
    %52 = arith.select %50, %48, %51 : vector<16x16xi1>, vector<16x16xf32>
    %c0_49 = arith.constant 0 : index
    %c0_50 = arith.constant 0 : index
    %c0_51 = arith.constant 0 : index
    %53 = vector.load %arg4[%c0_49, %c0_50, %c0_51] : memref<2x16x8xf32, #tpu.memory_space<vmem>>, vector<1x16x8xf32>
    %54 = vector.shape_cast %53 : vector<1x16x8xf32> to vector<16x8xf32>
    %cst_52 = arith.constant dense<0.000000e+00> : vector<16x8xf32>
    %55 = tpu.matmul %52, %54, %cst_52 {dimension_numbers = #tpu.dot_dimension_numbers<[1], [0], [0], [1], [0, 0, 1, 1], [], []>} : vector<16x16xf32>, vector<16x8xf32>, vector<16x8xf32> -> vector<16x8xf32>
    %c2_53 = arith.constant 2 : index
    %c0_54 = arith.constant 0 : index
    %c0_55 = arith.constant 0 : index
    %c0_56 = arith.constant 0 : index
    %56 = vector.load %arg3[%c2_53, %c0_54, %c0_55, %c0_56] : memref<4x2x256x16xf32, #tpu.memory_space<vmem>>, vector<1x1x256x16xf32>
    %57 = vector.shape_cast %56 : vector<1x1x256x16xf32> to vector<256x16xf32>
    %cst_57 = arith.constant dense<0.000000e+00> : vector<256x8xf32>
    %58 = tpu.matmul %57, %55, %cst_57 {dimension_numbers = #tpu.dot_dimension_numbers<[1], [0], [0], [1], [0, 0, 1, 1], [], []>} : vector<256x16xf32>, vector<16x8xf32>, vector<256x8xf32> -> vector<256x8xf32>
    %59 = arith.addf %46, %58 : vector<256x8xf32>
    %c1_58 = arith.constant 1 : index
    %c0_59 = arith.constant 0 : index
    %c0_60 = arith.constant 0 : index
    %60 = vector.load %arg4[%c1_58, %c0_59, %c0_60] : memref<2x16x8xf32, #tpu.memory_space<vmem>>, vector<1x16x8xf32>
    %61 = vector.shape_cast %60 : vector<1x16x8xf32> to vector<16x8xf32>
    %cst_61 = arith.constant dense<0.000000e+00> : vector<16x8xf32>
    %62 = tpu.matmul %52, %61, %cst_61 {dimension_numbers = #tpu.dot_dimension_numbers<[1], [0], [0], [1], [0, 0, 1, 1], [], []>} : vector<16x16xf32>, vector<16x8xf32>, vector<16x8xf32> -> vector<16x8xf32>
    %c2_62 = arith.constant 2 : index
    %c1_63 = arith.constant 1 : index
    %c0_64 = arith.constant 0 : index
    %c0_65 = arith.constant 0 : index
    %63 = vector.load %arg3[%c2_62, %c1_63, %c0_64, %c0_65] : memref<4x2x256x16xf32, #tpu.memory_space<vmem>>, vector<1x1x256x16xf32>
    %64 = vector.shape_cast %63 : vector<1x1x256x16xf32> to vector<256x16xf32>
    %cst_66 = arith.constant dense<0.000000e+00> : vector<256x8xf32>
    %65 = tpu.matmul %64, %62, %cst_66 {dimension_numbers = #tpu.dot_dimension_numbers<[1], [0], [0], [1], [0, 0, 1, 1], [], []>} : vector<256x16xf32>, vector<16x8xf32>, vector<256x8xf32> -> vector<256x8xf32>
    %66 = arith.addf %59, %65 : vector<256x8xf32>
    %c0_67 = arith.constant 0 : index
    %c3 = arith.constant 3 : index
    %c0_68 = arith.constant 0 : index
    %c0_69 = arith.constant 0 : index
    %67 = vector.load %arg2[%c0_67, %c3, %c0_68, %c0_69] : memref<1x4x16x16xf32, #tpu.memory_space<vmem>>, vector<1x1x16x16xf32>
    %68 = vector.shape_cast %67 : vector<1x1x16x16xf32> to vector<16x16xf32>
    %cst_70 = arith.constant 0.000000e+00 : f32
    %69 = vector.shape_cast %5 : vector<16x1xi1> to vector<16x1xi1>
    %70 = vector.broadcast %69 : vector<16x1xi1> to vector<16x16xi1>
    %71 = vector.broadcast %cst_70 : f32 to vector<16x16xf32>
    %72 = arith.select %70, %68, %71 : vector<16x16xi1>, vector<16x16xf32>
    %c0_71 = arith.constant 0 : index
    %c0_72 = arith.constant 0 : index
    %c0_73 = arith.constant 0 : index
    %73 = vector.load %arg4[%c0_71, %c0_72, %c0_73] : memref<2x16x8xf32, #tpu.memory_space<vmem>>, vector<1x16x8xf32>
    %74 = vector.shape_cast %73 : vector<1x16x8xf32> to vector<16x8xf32>
    %cst_74 = arith.constant dense<0.000000e+00> : vector<16x8xf32>
    %75 = tpu.matmul %72, %74, %cst_74 {dimension_numbers = #tpu.dot_dimension_numbers<[1], [0], [0], [1], [0, 0, 1, 1], [], []>} : vector<16x16xf32>, vector<16x8xf32>, vector<16x8xf32> -> vector<16x8xf32>
    %c3_75 = arith.constant 3 : index
    %c0_76 = arith.constant 0 : index
    %c0_77 = arith.constant 0 : index
    %c0_78 = arith.constant 0 : index
    %76 = vector.load %arg3[%c3_75, %c0_76, %c0_77, %c0_78] : memref<4x2x256x16xf32, #tpu.memory_space<vmem>>, vector<1x1x256x16xf32>
    %77 = vector.shape_cast %76 : vector<1x1x256x16xf32> to vector<256x16xf32>
    %cst_79 = arith.constant dense<0.000000e+00> : vector<256x8xf32>
    %78 = tpu.matmul %77, %75, %cst_79 {dimension_numbers = #tpu.dot_dimension_numbers<[1], [0], [0], [1], [0, 0, 1, 1], [], []>} : vector<256x16xf32>, vector<16x8xf32>, vector<256x8xf32> -> vector<256x8xf32>
    %79 = arith.addf %66, %78 : vector<256x8xf32>
    %c1_80 = arith.constant 1 : index
    %c0_81 = arith.constant 0 : index
    %c0_82 = arith.constant 0 : index
    %80 = vector.load %arg4[%c1_80, %c0_81, %c0_82] : memref<2x16x8xf32, #tpu.memory_space<vmem>>, vector<1x16x8xf32>
    %81 = vector.shape_cast %80 : vector<1x16x8xf32> to vector<16x8xf32>
    %cst_83 = arith.constant dense<0.000000e+00> : vector<16x8xf32>
    %82 = tpu.matmul %72, %81, %cst_83 {dimension_numbers = #tpu.dot_dimension_numbers<[1], [0], [0], [1], [0, 0, 1, 1], [], []>} : vector<16x16xf32>, vector<16x8xf32>, vector<16x8xf32> -> vector<16x8xf32>
    %c3_84 = arith.constant 3 : index
    %c1_85 = arith.constant 1 : index
    %c0_86 = arith.constant 0 : index
    %c0_87 = arith.constant 0 : index
    %83 = vector.load %arg3[%c3_84, %c1_85, %c0_86, %c0_87] : memref<4x2x256x16xf32, #tpu.memory_space<vmem>>, vector<1x1x256x16xf32>
    %84 = vector.shape_cast %83 : vector<1x1x256x16xf32> to vector<256x16xf32>
    %cst_88 = arith.constant dense<0.000000e+00> : vector<256x8xf32>
    %85 = tpu.matmul %84, %82, %cst_88 {dimension_numbers = #tpu.dot_dimension_numbers<[1], [0], [0], [1], [0, 0, 1, 1], [], []>} : vector<256x16xf32>, vector<16x8xf32>, vector<256x8xf32> -> vector<256x8xf32>
    %86 = arith.addf %79, %85 : vector<256x8xf32>
    %c0_89 = arith.constant 0 : index
    %c0_90 = arith.constant 0 : index
    %87 = vector.load %arg5[%c0_89, %c0_90] : memref<256x1xf32, #tpu.memory_space<vmem>>, vector<256x1xf32>
    %88 = vector.broadcast %87 : vector<256x1xf32> to vector<256x8xf32>
    %89 = arith.addf %86, %88 : vector<256x8xf32>
    %cst_91 = arith.constant 5.000000e-01 : f32
    %90 = vector.broadcast %cst_91 : f32 to vector<256x8xf32>
    %91 = arith.mulf %90, %89 : vector<256x8xf32>
    %92 = math.tanh %91 : vector<256x8xf32>
    %cst_92 = arith.constant 1.000000e+00 : f32
    %93 = vector.broadcast %cst_92 : f32 to vector<256x8xf32>
    %94 = arith.addf %92, %93 : vector<256x8xf32>
    %cst_93 = arith.constant 5.000000e-01 : f32
    %95 = vector.broadcast %cst_93 : f32 to vector<256x8xf32>
    %96 = arith.mulf %95, %94 : vector<256x8xf32>
    %97 = arith.mulf %89, %96 : vector<256x8xf32>
    %c0_94 = arith.constant 0 : index
    %c0_95 = arith.constant 0 : index
    %c0_96 = arith.constant 0 : index
    %98 = vector.load %arg6[%c0_94, %c0_95, %c0_96] : memref<1x256x8xf32, #tpu.memory_space<vmem>>, vector<1x256x8xf32>
    %99 = vector.shape_cast %98 : vector<1x256x8xf32> to vector<256x8xf32>
    %100 = vector.shape_cast %97 : vector<256x8xf32> to vector<1x256x8xf32>
    tpu.vector_store %arg6[%c0_94, %c0_95, %c0_96], %100 {strides = array<i32>} : memref<1x256x8xf32, #tpu.memory_space<vmem>>, vector<1x256x8xf32>,
    return
  }
  func.func @transform_0(%arg0: i32, %arg1: i32) -> (i32, i32, i32, i32) {
    %c0_i32 = arith.constant 0 : i32
    %c0_i32_0 = arith.constant 0 : i32
    %c0_i32_1 = arith.constant 0 : i32
    return %arg0, %c0_i32, %arg1, %c0_i32_0 : i32, i32, i32, i32
  }
  func.func @transform_1(%arg0: i32, %arg1: i32) -> (i32, i32, i32, i32) {
    %c0_i32 = arith.constant 0 : i32
    %c0_i32_0 = arith.constant 0 : i32
    %c0_i32_1 = arith.constant 0 : i32
    %c0_i32_2 = arith.constant 0 : i32
    %c0_i32_3 = arith.constant 0 : i32
    return %c0_i32, %c0_i32_0, %c0_i32_1, %c0_i32_2 : i32, i32, i32, i32
  }
  func.func @transform_2(%arg0: i32, %arg1: i32) -> (i32, i32, i32) {
    %c0_i32 = arith.constant 0 : i32
    %c0_i32_0 = arith.constant 0 : i32
    %c0_i32_1 = arith.constant 0 : i32
    %c0_i32_2 = arith.constant 0 : i32
    return %c0_i32, %c0_i32_0, %c0_i32_1 : i32, i32, i32
  }
  func.func @transform_3(%arg0: i32, %arg1: i32) -> (i32, i32) {
    %c0_i32 = arith.constant 0 : i32
    %c0_i32_0 = arith.constant 0 : i32
    %c0_i32_1 = arith.constant 0 : i32
    return %c0_i32, %c0_i32_0 : i32, i32
  }
  func.func @transform_4(%arg0: i32, %arg1: i32) -> (i32, i32, i32) {
    %c0_i32 = arith.constant 0 : i32
    %c0_i32_0 = arith.constant 0 : i32
    %c0_i32_1 = arith.constant 0 : i32
    return %arg0, %c0_i32, %c0_i32_0 : i32, i32, i32
  }
}

</mosaic_0001>

<llo_original>
// kernel: tpu_custom_call.1
$region0: #{tpu_custom_call.1}
  #allocation0 [shape = 'u32[]', space=smem, size = 0x4, offset = 0x4, fixed_abs, tag = 'smem constant byte address 0x4 - core index']
  #allocation1 [shape = 'u32[144,128]{1,0:T(1,128)}', space=vmem, size = 0x12000, scoped, tag = 'internal scratch']
  %s0 = inlined_call_operand.vmem [shape: f32[2,4,16,16], index: 0, kind: input, shape index: {}]
  %s1 = inlined_call_operand.vmem [shape: f32[4,2,256,16], index: 1, kind: input, shape index: {}]
  %s2 = inlined_call_operand.vmem [shape: f32[2,16,8], index: 2, kind: input, shape index: {}]
  %s3 = inlined_call_operand.vmem [shape: f32[256,1], index: 3, kind: input, shape index: {}]
  %s4 = inlined_call_operand.vmem [shape: f32[2,256,8], index: 4, kind: output, shape index: {}]
  %s5 = sld [smem:[#allocation0]]
  $region49: #{tpu_custom_call.1} parent=0
    _
  %s7 = ssub.s32 1, %s5
  %s8 = scalar_select 0, %s7, %s5
  loop: start=0, step=1, limit=4
  $region2: #{tpu_custom_call.1} parent=0 // loop_pre_header
    _
  $region3: #{tpu_custom_call.1} parent=0 // loop_header
    %s10 = sphi 0, %s14
    %p11 = scmp.ge.s32.totalorder %s10, 4
    %s17 = sphi 0, %s29
    %s18 = sphi 0, %s25
    %s19 = sphi 0, %s17
    %s20 = sphi 0, %s18
    %s21 = sphi 0, %s19
    %s22 = sphi 0, %s20
    %s34 = sphi 0, %s36
    %s37 = sphi 0, %s34
    %s38 = sphi 0, %s37
    %s54 = sphi 0, %s38
    %s58 = sphi 0, %s58
    %s60 = sphi 0, %s58
    %s61 = sphi 0, %s60
    %s75 = sphi 0, %s61
    %s79 = sphi 0, %s79
    %s81 = sphi 0, %s79
    %s82 = sphi 0, %s81
    %s96 = sphi 0, %s82
    %s100 = sphi 0, %s100
    %s102 = sphi 0, %s100
    %s103 = sphi 0, %s102
    %s117 = sphi 0, %s103
    %s123 = sphi 0, %s125
    %s126 = sphi 0, %s123
    %s127 = sphi 0, %s126
    %s143 = sphi 0, %s127
  $region4: #{tpu_custom_call.1} parent=0 // loop_header_branch
    %13 = sbr.rel (%p11) target = $region8
  $region5: #{tpu_custom_call.1} parent=0 // loop_body
    %s15 = ssub.s32 %s10, 1
    %s16 = ssub.s32 %s10, 2
    %s23 = sadd.s32 1, %s18
    %p24 = scmp.ge.s32.totalorder %s23, 1
    %s25 = scalar_select %p24, 0, %s23
    %s26 = sadd.s32 1, %s17
    %s27 = scalar_select %p24, %s26, %s17
    %p28 = scmp.ge.s32.totalorder %s27, 2
    %s29 = scalar_select %p28, 0, %s27
    %s30 = ssub.s32 %s17, %s29
    %s31 = ssub.s32 %s18, %s25
    %s32 = sor.u32 %s30, %s31
    %p33 = scmp.eq.s32.totalorder %s32, 0
    %s35 = sadd.s32 %s34, 1
    %s36 = scalar_select %p33, %s34, %s35
    %p39 = pneg %p33
    %p40 = scmp.eq.s32.totalorder %s10, 1
    %p41 = por %p39, %p40
    %p42 = scmp.ne.s32.totalorder %s34, %s37
    %p43 = scmp.eq.s32.totalorder %s10, 0
    %p44 = por %p42, %p43
    %p45 = scmp.ne.s32.totalorder %s34, %s37
    %p46 = scmp.eq.s32.totalorder %s15, 1
    %p47 = por %p45, %p46
    %p48 = scmp.ne.s32.totalorder %s37, %s38
    %p49 = scmp.eq.s32.totalorder %s15, 0
    %p50 = por %p48, %p49
    %p51 = scmp.ne.s32.totalorder %s37, %s38
    %p52 = scmp.eq.s32.totalorder %s16, 1
    %p53 = por %p51, %p52
    %p55 = scmp.ne.s32.totalorder %s38, %s54
    %p56 = scmp.eq.s32.totalorder %s16, 0
    %p57 = por %p55, %p56
    %s59 = sadd.s32 %s58, 1
    %p62 = scmp.eq.s32.totalorder %s10, 1
    %p63 = scmp.ne.s32.totalorder %s58, %s60
    %p64 = scmp.eq.s32.totalorder %s10, 0
    %p65 = por %p63, %p64
    %p66 = scmp.ne.s32.totalorder %s58, %s60
    %p67 = scmp.eq.s32.totalorder %s15, 1
    %p68 = por %p66, %p67
    %p69 = scmp.ne.s32.totalorder %s60, %s61
    %p70 = scmp.eq.s32.totalorder %s15, 0
    %p71 = por %p69, %p70
    %p72 = scmp.ne.s32.totalorder %s60, %s61
    %p73 = scmp.eq.s32.totalorder %s16, 1
    %p74 = por %p72, %p73
    %p76 = scmp.ne.s32.totalorder %s61, %s75
    %p77 = scmp.eq.s32.totalorder %s16, 0
    %p78 = por %p76, %p77
    %s80 = sadd.s32 %s79, 1
    %p83 = scmp.eq.s32.totalorder %s10, 1
    %p84 = scmp.ne.s32.totalorder %s79, %s81
    %p85 = scmp.eq.s32.totalorder %s10, 0
    %p86 = por %p84, %p85
    %p87 = scmp.ne.s32.totalorder %s79, %s81
    %p88 = scmp.eq.s32.totalorder %s15, 1
    %p89 = por %p87, %p88
    %p90 = scmp.ne.s32.totalorder %s81, %s82
    %p91 = scmp.eq.s32.totalorder %s15, 0
    %p92 = por %p90, %p91
    %p93 = scmp.ne.s32.totalorder %s81, %s82
    %p94 = scmp.eq.s32.totalorder %s16, 1
    %p95 = por %p93, %p94
    %p97 = scmp.ne.s32.totalorder %s82, %s96
    %p98 = scmp.eq.s32.totalorder %s16, 0
    %p99 = por %p97, %p98
    %s101 = sadd.s32 %s100, 1
    %p104 = scmp.eq.s32.totalorder %s10, 1
    %p105 = scmp.ne.s32.totalorder %s100, %s102
    %p106 = scmp.eq.s32.totalorder %s10, 0
    %p107 = por %p105, %p106
    %p108 = scmp.ne.s32.totalorder %s100, %s102
    %p109 = scmp.eq.s32.totalorder %s15, 1
    %p110 = por %p108, %p109
    %p111 = scmp.ne.s32.totalorder %s102, %s103
    %p112 = scmp.eq.s32.totalorder %s15, 0
    %p113 = por %p111, %p112
    %p114 = scmp.ne.s32.totalorder %s102, %s103
    %p115 = scmp.eq.s32.totalorder %s16, 1
    %p116 = por %p114, %p115
    %p118 = scmp.ne.s32.totalorder %s103, %s117
    %p119 = scmp.eq.s32.totalorder %s16, 0
    %p120 = por %p118, %p119
    %s121 = ssub.s32 %s17, %s29
    %p122 = scmp.eq.s32.totalorder %s121, 0
    %s124 = sadd.s32 %s123, 1
    %s125 = scalar_select %p122, %s123, %s124
    %p128 = pneg %p122
    %p129 = scmp.eq.s32.totalorder %s10, 1
    %p130 = por %p128, %p129
    %p131 = scmp.ne.s32.totalorder %s123, %s126
    %p132 = scmp.eq.s32.totalorder %s10, 0
    %p133 = por %p131, %p132
    %p134 = scmp.ne.s32.totalorder %s123, %s126
    %p135 = scmp.eq.s32.totalorder %s15, 1
    %p136 = por %p134, %p135
    %p137 = scmp.ne.s32.totalorder %s126, %s127
    %p138 = scmp.eq.s32.totalorder %s15, 0
    %p139 = por %p137, %p138
    %p140 = scmp.ne.s32.totalorder %s126, %s127
    %p141 = scmp.eq.s32.totalorder %s16, 1
    %p142 = por %p140, %p141
    %p144 = scmp.ne.s32.totalorder %s127, %s143
    %p145 = scmp.eq.s32.totalorder %s16, 0
    %p146 = por %p144, %p145
    %p147 = scmp.le.s32.totalorder 1, %s10
    %p148 = scmp.lt.s32.totalorder %s10, 3
    %p149 = pnand %p147, %p148
    %p150 = pneg %p149
    // Predicated region
    $region9: #{tpu_custom_call.1} parent=5 // pred_check
      _
    $region10: #{tpu_custom_call.1} parent=5 // pred_check_branch
      %152 = sbr.rel (%p149) target = $region12
    $region11: #{tpu_custom_call.1} parent=5 // pred_region
      %s153 = ssub.s32 %s10, 1
      // Predicated region
      $region13: #{tpu_custom_call.1} parent=11 // pred_check
        %p154 = pneg %p71
      $region14: #{tpu_custom_call.1} parent=11 // pred_check_branch
        %156 = sbr.rel (%p154) target = $region16
      $region15: #{tpu_custom_call.1} parent=11 // pred_region
        _
      $region16: #{tpu_custom_call.1} parent=11 // pred_fallthru
        _
      // Predicated region
      $region17: #{tpu_custom_call.1} parent=11 // pred_check
        %p157 = pneg %p92
      $region18: #{tpu_custom_call.1} parent=11 // pred_check_branch
        %159 = sbr.rel (%p157) target = $region20
      $region19: #{tpu_custom_call.1} parent=11 // pred_region
        _
      $region20: #{tpu_custom_call.1} parent=11 // pred_fallthru
        _
      // Predicated region
      $region21: #{tpu_custom_call.1} parent=11 // pred_check
        %p160 = pneg %p113
      $region22: #{tpu_custom_call.1} parent=11 // pred_check_branch
        %162 = sbr.rel (%p160) target = $region24
      $region23: #{tpu_custom_call.1} parent=11 // pred_region
        _
      $region24: #{tpu_custom_call.1} parent=11 // pred_fallthru
        _
    $region12: #{tpu_custom_call.1} parent=5 // pred_fallthru
      _
    %p163 = scmp.lt.s32.totalorder %s10, 2
    // Predicated region
    $region25: #{tpu_custom_call.1} parent=5 // pred_check
      %p164 = pneg %p163
    $region26: #{tpu_custom_call.1} parent=5 // pred_check_branch
      %166 = sbr.rel (%p164) target = $region28
    $region27: #{tpu_custom_call.1} parent=5 // pred_region
      // Predicated region
      $region29: #{tpu_custom_call.1} parent=27 // pred_check
        %p167 = pneg %p44
      $region30: #{tpu_custom_call.1} parent=27 // pred_check_branch
        %169 = sbr.rel (%p167) target = $region32
      $region31: #{tpu_custom_call.1} parent=27 // pred_region
        %s170 = smul.u32 2, %s18
        %p171 = scmp.lt.s32.totalorder %s17, 1
        %s172 = scalar_select %p171, %s17, 1
        %p173 = scmp.lt.s32.totalorder %s170, 1
        %s174 = scalar_select %p173, %s170, 1
        %s175 = smul.addr %s172, 8
        %s176 = sadd.s32 %s174, %s175
        %s177 = smul.addr %s176, 8
        %s178 = scalar_lea.vmem %s0, %s177
        %s179 = smul.u32 2, %s18
      $region32: #{tpu_custom_call.1} parent=27 // pred_fallthru
        _
    $region28: #{tpu_custom_call.1} parent=5 // pred_fallthru
      _
    %p180 = scmp.le.s32.totalorder 1, %s10
    %p181 = scmp.lt.s32.totalorder %s10, 3
    %p182 = pnand %p180, %p181
    %p183 = pneg %p182
    // Predicated region
    $region33: #{tpu_custom_call.1} parent=5 // pred_check
      _
    $region34: #{tpu_custom_call.1} parent=5 // pred_check_branch
      %185 = sbr.rel (%p182) target = $region36
    $region35: #{tpu_custom_call.1} parent=5 // pred_region
      %s186 = ssub.s32 %s10, 1
      %s187 = smul.u32 2, %s20
      %p188 = scmp.lt.s32.totalorder %s19, 1
      %s189 = scalar_select %p188, %s19, 1
      %p190 = scmp.lt.s32.totalorder %s187, 1
      %s191 = scalar_select %p190, %s187, 1
      %s192 = smul.addr %s189, 8
      %s193 = sadd.s32 %s191, %s192
      %s194 = smul.addr %s193, 8
      %s195 = scalar_lea.vmem %s0, %s194
      %p196 = pneg %p50
      %p197 = pneg %p47
      %p198 = pneg %p71
      %p199 = pneg %p68
      %p200 = pneg %p92
      %p201 = pneg %p89
      %p202 = pneg %p113
      %p203 = pneg %p110
      %p204 = pneg %p139
      %p205 = pneg %p136
      %p206 = scmp.lt.s32.totalorder %s19, 1
      %s207 = scalar_select %p206, %s19, 1
      %s208 = smul.addr %s207, 32
      %s209 = smul.addr %s208, 8
      %s210 = scalar_lea.vmem %s4, %s209
      %s211 = smul.u32 2, %s20
      %p212 = scmp.lt.s32.totalorder %s19, 1
      %s213 = scalar_select %p212, %s19, 1
      %p214 = scmp.lt.s32.totalorder %s211, 1
      %s215 = scalar_select %p214, %s211, 1
      %s216 = smul.addr %s213, 8
      %s217 = sadd.s32 %s215, %s216
      %s218 = smul.addr %s217, 8
      %s219 = scalar_lea.vmem %s0, %s218
      %s220 = smul.u32 2, %s20
      %p221 = scmp.lt.s32.totalorder %s19, 1
      %s222 = scalar_select %p221, %s19, 1
      %s223 = smul.addr %s222, 32
      %s224 = smul.addr %s223, 8
      %s225 = scalar_lea.vmem %s4, %s224
      %v226 = vlaneseq
      %v227 = vshrl.u32 %v226, 7
      %v228 = vadd.s32 %v227, 8
      %s229 = smul.u32 %s20, 16
      %v230 = vstv %s229
      %v231 = vadd.s32 %v230, %v227
      %v232 = vadd.s32 %v230, %v228
      %vm233 = vcmp.lt.s32.totalorder %v231, 16
      %vm234 = vcmp.lt.s32.totalorder %v232, 16
      %v235 = vld [vmem:[%s219] sm:$0xff]
      %v236 = vld [vmem:[%s219 + $0x8] sm:$0xff]
      %v237 = vsel %vm233, 1, 0
      %v238 = vsel %vm234, 1, 0
      %vm239 = vcmp.eq.s32.totalorder %v237, 1
      %vm240 = vcmp.eq.s32.totalorder %v238, 1
      %v241 = vsel %vm239, %v235, 0.0
      %v242 = vsel %vm240, %v236, 0.0
      %v243 = vld [vmem:[%s2] sm:$0xff]
      %v244 = vld [vmem:[%s2 + $0x8] sm:$0xff]
      %vm245 = vcmask 130048
      %v247 = vsel %vm245, %v241, 0
      %v250 = vsel %vm245, %v242, 0
      %252 = vmatprep.subr.mxu0 0.0
      %253 = vmatpush1.msra.mxu0 %v243
      %254 = vmatprep.subr.mxu0 0.0
      %255 = vmatpush1.msra.mxu0 %v244
      %256 = vmatprep.subr.mxu0 0.0
      %257 = vmatpush1.msra.mxu0 0.0
      %258 = vmatprep.subr.mxu0 0.0
      %259 = vmatpush1.msra.mxu0 0.0
      %260 = vmatprep.subr.mxu0 0.0
      %261 = vmatpush1.msra.mxu0 0.0
      %262 = vmatprep.subr.mxu0 0.0
      %263 = vmatpush1.msra.mxu0 0.0
      %264 = vmatprep.subr.mxu0 0.0
      %265 = vmatpush1.msra.mxu0 0.0
      %266 = vmatprep.subr.mxu0 0.0
      %267 = vmatpush1.msra.mxu0 0.0
      %268 = vmatprep.subr.mxu0 0.0
      %269 = vmatpush1.msra.mxu0 0.0
      %270 = vmatprep.subr.mxu0 0.0
      %271 = vmatpush1.msra.mxu0 0.0
      %272 = vmatprep.subr.mxu0 0.0
      %273 = vmatpush1.msra.mxu0 0.0
      %274 = vmatprep.subr.mxu0 0.0
      %275 = vmatpush1.msra.mxu0 0.0
      %276 = vmatprep.subr.mxu0 0.0
      %277 = vmatpush1.msra.mxu0 0.0
      %278 = vmatprep.subr.mxu0 0.0
      %279 = vmatpush1.msra.mxu0 0.0
      %280 = vmatprep.subr.mxu0 0.0
      %281 = vmatpush1.msra.mxu0 0.0
      %282 = vmatprep.subr.mxu0 0.0
      %283 = vmatpush1.msra.mxu0 0.0
      %284 = vmatprep.subr.mxu0 0.0
      %285 = vmatpush1.msra.mxu0 0.0
      %286 = vmatprep.subr.mxu0 0.0
      %287 = vmatpush1.msra.mxu0 0.0
      %288 = vmatprep.subr.mxu0 0.0
      %289 = vmatpush1.msra.mxu0 0.0
      %290 = vmatprep.subr.mxu0 0.0
      %291 = vmatpush1.msra.mxu0 0.0
      %292 = vmatprep.subr.mxu0 0.0
      %293 = vmatpush1.msra.mxu0 0.0
      %294 = vmatprep.subr.mxu0 0.0
      %295 = vmatpush1.msra.mxu0 0.0
      %296 = vmatprep.subr.mxu0 0.0
      %297 = vmatpush1.msra.mxu0 0.0
      %298 = vmatprep.subr.mxu0 0.0
      %299 = vmatpush1.msra.mxu0 0.0
      %300 = vmatprep.subr.mxu0 0.0
      %301 = vmatpush1.msra.mxu0 0.0
      %302 = vmatprep.subr.mxu0 0.0
      %303 = vmatpush1.msra.mxu0 0.0
      %304 = vmatprep.subr.mxu0 0.0
      %305 = vmatpush1.msra.mxu0 0.0
      %306 = vmatprep.subr.mxu0 0.0
      %307 = vmatpush1.msra.mxu0 0.0
      %308 = vmatprep.subr.mxu0 0.0
      %309 = vmatpush1.msra.mxu0 0.0
      %310 = vmatprep.subr.mxu0 0.0
      %311 = vmatpush1.msra.mxu0 0.0
      %312 = vmatprep.subr.mxu0 0.0
      %313 = vmatpush1.msra.mxu0 0.0
      %314 = vmatprep.subr.mxu0 0.0
      %315 = vmatpush1.msra.mxu0 0.0
      %316 = vmatprep.mubr.f32.mxu0 0.0
      %317 = vmatmul.mubr.f32.gmra.mrb[0].mxu0 %v247
      %v318 = vpop.f32.mrb[0].mxu0
      %v319 = vadd.f32 0.0, %v318
      %v320 = vpop.f32.mrb[0].mxu0
      %321 = vmatprep.mubr.f32.mxu0 0.0
      %322 = vmatmul.mubr.f32.gmra.mrb[0].mxu0 %v250
      %v323 = vpop.f32.mrb[0].mxu0
      %v324 = vadd.f32 0.0, %v323
      %v325 = vpop.f32.mrb[0].mxu0
      %326 = vdwg.mxu0
      %v327 = vld [vmem:[%s1] sm:$0xff]
      %v328 = vld [vmem:[%s1 + $0x8] sm:$0xff]
      %v329 = vld [vmem:[%s1 + $0x10] sm:$0xff]
      %v330 = vld [vmem:[%s1 + $0x18] sm:$0xff]
      %v331 = vld [vmem:[%s1 + $0x20] sm:$0xff]
      %v332 = vld [vmem:[%s1 + $0x28] sm:$0xff]
      %v333 = vld [vmem:[%s1 + $0x30] sm:$0xff]
      %v334 = vld [vmem:[%s1 + $0x38] sm:$0xff]
      %v335 = vld [vmem:[%s1 + $0x40] sm:$0xff]
      %v336 = vld [vmem:[%s1 + $0x48] sm:$0xff]
      %v337 = vld [vmem:[%s1 + $0x50] sm:$0xff]
      %v338 = vld [vmem:[%s1 + $0x58] sm:$0xff]
      %v339 = vld [vmem:[%s1 + $0x60] sm:$0xff]
      %v340 = vld [vmem:[%s1 + $0x68] sm:$0xff]
      %v341 = vld [vmem:[%s1 + $0x70] sm:$0xff]
      %v342 = vld [vmem:[%s1 + $0x78] sm:$0xff]
      %v343 = vld [vmem:[%s1 + $0x80] sm:$0xff]
      %v344 = vld [vmem:[%s1 + $0x88] sm:$0xff]
      %v345 = vld [vmem:[%s1 + $0x90] sm:$0xff]
      %v346 = vld [vmem:[%s1 + $0x98] sm:$0xff]
      %v347 = vld [vmem:[%s1 + $0xa0] sm:$0xff]
      %v348 = vld [vmem:[%s1 + $0xa8] sm:$0xff]
      %v349 = vld [vmem:[%s1 + $0xb0] sm:$0xff]
      %v350 = vld [vmem:[%s1 + $0xb8] sm:$0xff]
      %v351 = vld [vmem:[%s1 + $0xc0] sm:$0xff]
      %v352 = vld [vmem:[%s1 + $0xc8] sm:$0xff]
      %v353 = vld [vmem:[%s1 + $0xd0] sm:$0xff]
      %v354 = vld [vmem:[%s1 + $0xd8] sm:$0xff]
      %v355 = vld [vmem:[%s1 + $0xe0] sm:$0xff]
      %v356 = vld [vmem:[%s1 + $0xe8] sm:$0xff]
      %v357 = vld [vmem:[%s1 + $0xf0] sm:$0xff]
      %v358 = vld [vmem:[%s1 + $0xf8] sm:$0xff]
      %s359 = scalar_lea.vmem %s2, 16
      %v360 = vld [vmem:[%s359] sm:$0xff]
      %v361 = vld [vmem:[%s359 + $0x8] sm:$0xff]
      %362 = vmatprep.subr.mxu0 0.0
      %363 = vmatpush1.msra.mxu0 %v360
      %364 = vmatprep.subr.mxu0 0.0
      %365 = vmatpush1.msra.mxu0 %v361
      %366 = vmatprep.subr.mxu0 0.0
      %367 = vmatpush1.msra.mxu0 0.0
      %368 = vmatprep.subr.mxu0 0.0
      %369 = vmatpush1.msra.mxu0 0.0
      %370 = vmatprep.subr.mxu0 0.0
      %371 = vmatpush1.msra.mxu0 0.0
      %372 = vmatprep.subr.mxu0 0.0
      %373 = vmatpush1.msra.mxu0 0.0
      %374 = vmatprep.subr.mxu0 0.0
      %375 = vmatpush1.msra.mxu0 0.0
      %376 = vmatprep.subr.mxu0 0.0
      %377 = vmatpush1.msra.mxu0 0.0
      %378 = vmatprep.subr.mxu0 0.0
      %379 = vmatpush1.msra.mxu0 0.0
      %380 = vmatprep.subr.mxu0 0.0
      %381 = vmatpush1.msra.mxu0 0.0
      %382 = vmatprep.subr.mxu0 0.0
      %383 = vmatpush1.msra.mxu0 0.0
      %384 = vmatprep.subr.mxu0 0.0
      %385 = vmatpush1.msra.mxu0 0.0
      %386 = vmatprep.subr.mxu0 0.0
      %387 = vmatpush1.msra.mxu0 0.0
      %388 = vmatprep.subr.mxu0 0.0
      %389 = vmatpush1.msra.mxu0 0.0
      %390 = vmatprep.subr.mxu0 0.0
      %391 = vmatpush1.msra.mxu0 0.0
      %392 = vmatprep.subr.mxu0 0.0
      %393 = vmatpush1.msra.mxu0 0.0
      %394 = vmatprep.subr.mxu0 0.0
      %395 = vmatpush1.msra.mxu0 0.0
      %396 = vmatprep.subr.mxu0 0.0
      %397 = vmatpush1.msra.mxu0 0.0
      %398 = vmatprep.subr.mxu0 0.0
      %399 = vmatpush1.msra.mxu0 0.0
      %400 = vmatprep.subr.mxu0 0.0
      %401 = vmatpush1.msra.mxu0 0.0
      %402 = vmatprep.subr.mxu0 0.0
      %403 = vmatpush1.msra.mxu0 0.0
      %404 = vmatprep.subr.mxu0 0.0
      %405 = vmatpush1.msra.mxu0 0.0
      %406 = vmatprep.subr.mxu0 0.0
      %407 = vmatpush1.msra.mxu0 0.0
      %408 = vmatprep.subr.mxu0 0.0
      %409 = vmatpush1.msra.mxu0 0.0
      %410 = vmatprep.subr.mxu0 0.0
      %411 = vmatpush1.msra.mxu0 0.0
      %412 = vmatprep.subr.mxu0 0.0
      %413 = vmatpush1.msra.mxu0 0.0
      %414 = vmatprep.subr.mxu0 0.0
      %415 = vmatpush1.msra.mxu0 0.0
      %416 = vmatprep.subr.mxu0 0.0
      %417 = vmatpush1.msra.mxu0 0.0
      %418 = vmatprep.subr.mxu0 0.0
      %419 = vmatpush1.msra.mxu0 0.0
      %420 = vmatprep.subr.mxu0 0.0
      %421 = vmatpush1.msra.mxu0 0.0
      %422 = vmatprep.subr.mxu0 0.0
      %423 = vmatpush1.msra.mxu0 0.0
      %424 = vmatprep.subr.mxu0 0.0
      %425 = vmatpush1.msra.mxu0 0.0
      %426 = vmatprep.mubr.f32.mxu0 0.0
      %427 = vmatmul.mubr.f32.gmra.mrb[0].mxu0 %v247
      %v428 = vpop.f32.mrb[0].mxu0
      %v429 = vadd.f32 0.0, %v428
      %v430 = vpop.f32.mrb[0].mxu0
      %431 = vmatprep.mubr.f32.mxu0 0.0
      %432 = vmatmul.mubr.f32.gmra.mrb[0].mxu0 %v250
      %v433 = vpop.f32.mrb[0].mxu0
      %v434 = vadd.f32 0.0, %v433
      %v435 = vpop.f32.mrb[0].mxu0
      %436 = vdwg.mxu0
      %s437 = scalar_lea.vmem %s1, 256
      %v438 = vld [vmem:[%s437] sm:$0xff]
      %v439 = vld [vmem:[%s437 + $0x8] sm:$0xff]
      %v440 = vld [vmem:[%s437 + $0x10] sm:$0xff]
      %v441 = vld [vmem:[%s437 + $0x18] sm:$0xff]
      %v442 = vld [vmem:[%s437 + $0x20] sm:$0xff]
      %v443 = vld [vmem:[%s437 + $0x28] sm:$0xff]
      %v444 = vld [vmem:[%s437 + $0x30] sm:$0xff]
      %v445 = vld [vmem:[%s437 + $0x38] sm:$0xff]
      %v446 = vld [vmem:[%s437 + $0x40] sm:$0xff]
      %v447 = vld [vmem:[%s437 + $0x48] sm:$0xff]
      %v448 = vld [vmem:[%s437 + $0x50] sm:$0xff]
      %v449 = vld [vmem:[%s437 + $0x58] sm:$0xff]
      %v450 = vld [vmem:[%s437 + $0x60] sm:$0xff]
      %v451 = vld [vmem:[%s437 + $0x68] sm:$0xff]
      %v452 = vld [vmem:[%s437 + $0x70] sm:$0xff]
      %v453 = vld [vmem:[%s437 + $0x78] sm:$0xff]
      %v454 = vld [vmem:[%s437 + $0x80] sm:$0xff]
      %v455 = vld [vmem:[%s437 + $0x88] sm:$0xff]
      %v456 = vld [vmem:[%s437 + $0x90] sm:$0xff]
      %v457 = vld [vmem:[%s437 + $0x98] sm:$0xff]
      %v458 = vld [vmem:[%s437 + $0xa0] sm:$0xff]
      %v459 = vld [vmem:[%s437 + $0xa8] sm:$0xff]
      %v460 = vld [vmem:[%s437 + $0xb0] sm:$0xff]
      %v461 = vld [vmem:[%s437 + $0xb8] sm:$0xff]
      %v462 = vld [vmem:[%s437 + $0xc0] sm:$0xff]
      %v463 = vld [vmem:[%s437 + $0xc8] sm:$0xff]
      %v464 = vld [vmem:[%s437 + $0xd0] sm:$0xff]
      %v465 = vld [vmem:[%s437 + $0xd8] sm:$0xff]
      %v466 = vld [vmem:[%s437 + $0xe0] sm:$0xff]
      %v467 = vld [vmem:[%s437 + $0xe8] sm:$0xff]
      %v468 = vld [vmem:[%s437 + $0xf0] sm:$0xff]
      %v469 = vld [vmem:[%s437 + $0xf8] sm:$0xff]
      %v471 = vsel %vm245, %v438, 0
      %v474 = vsel %vm245, %v439, 0
      %v477 = vsel %vm245, %v440, 0
      %v480 = vsel %vm245, %v441, 0
      %v483 = vsel %vm245, %v442, 0
      %v486 = vsel %vm245, %v443, 0
      %v489 = vsel %vm245, %v444, 0
      %v492 = vsel %vm245, %v445, 0
      %v495 = vsel %vm245, %v446, 0
      %v498 = vsel %vm245, %v447, 0
      %v501 = vsel %vm245, %v448, 0
      %v504 = vsel %vm245, %v449, 0
      %v507 = vsel %vm245, %v450, 0
      %v510 = vsel %vm245, %v451, 0
      %v513 = vsel %vm245, %v452, 0
      %v516 = vsel %vm245, %v453, 0
      %v519 = vsel %vm245, %v454, 0
      %v522 = vsel %vm245, %v455, 0
      %v525 = vsel %vm245, %v456, 0
      %v528 = vsel %vm245, %v457, 0
      %v531 = vsel %vm245, %v458, 0
      %v534 = vsel %vm245, %v459, 0
      %v537 = vsel %vm245, %v460, 0
      %v540 = vsel %vm245, %v461, 0
      %v543 = vsel %vm245, %v462, 0
      %v546 = vsel %vm245, %v463, 0
      %v549 = vsel %vm245, %v464, 0
      %v552 = vsel %vm245, %v465, 0
      %v555 = vsel %vm245, %v466, 0
      %v558 = vsel %vm245, %v467, 0
      %v561 = vsel %vm245, %v468, 0
      %v564 = vsel %vm245, %v469, 0
      %566 = vmatprep.subr.mxu0 0.0
      %567 = vmatpush1.msra.mxu0 %v429
      %568 = vmatprep.subr.mxu0 0.0
      %569 = vmatpush1.msra.mxu0 %v434
      %570 = vmatprep.subr.mxu0 0.0
      %571 = vmatpush1.msra.mxu0 0.0
      %572 = vmatprep.subr.mxu0 0.0
      %573 = vmatpush1.msra.mxu0 0.0
      %574 = vmatprep.subr.mxu0 0.0
      %575 = vmatpush1.msra.mxu0 0.0
      %576 = vmatprep.subr.mxu0 0.0
      %577 = vmatpush1.msra.mxu0 0.0
      %578 = vmatprep.subr.mxu0 0.0
      %579 = vmatpush1.msra.mxu0 0.0
      %580 = vmatprep.subr.mxu0 0.0
      %581 = vmatpush1.msra.mxu0 0.0
      %582 = vmatprep.subr.mxu0 0.0
      %583 = vmatpush1.msra.mxu0 0.0
      %584 = vmatprep.subr.mxu0 0.0
      %585 = vmatpush1.msra.mxu0 0.0
      %586 = vmatprep.subr.mxu0 0.0
      %587 = vmatpush1.msra.mxu0 0.0
      %588 = vmatprep.subr.mxu0 0.0
      %589 = vmatpush1.msra.mxu0 0.0
      %590 = vmatprep.subr.mxu0 0.0
      %591 = vmatpush1.msra.mxu0 0.0
      %592 = vmatprep.subr.mxu0 0.0
      %593 = vmatpush1.msra.mxu0 0.0
      %594 = vmatprep.subr.mxu0 0.0
      %595 = vmatpush1.msra.mxu0 0.0
      %596 = vmatprep.subr.mxu0 0.0
      %597 = vmatpush1.msra.mxu0 0.0
      %598 = vmatprep.subr.mxu0 0.0
      %599 = vmatpush1.msra.mxu0 0.0
      %600 = vmatprep.subr.mxu0 0.0
      %601 = vmatpush1.msra.mxu0 0.0
      %602 = vmatprep.subr.mxu0 0.0
      %603 = vmatpush1.msra.mxu0 0.0
      %604 = vmatprep.subr.mxu0 0.0
      %605 = vmatpush1.msra.mxu0 0.0
      %606 = vmatprep.subr.mxu0 0.0
      %607 = vmatpush1.msra.mxu0 0.0
      %608 = vmatprep.subr.mxu0 0.0
      %609 = vmatpush1.msra.mxu0 0.0
      %610 = vmatprep.subr.mxu0 0.0
      %611 = vmatpush1.msra.mxu0 0.0
      %612 = vmatprep.subr.mxu0 0.0
      %613 = vmatpush1.msra.mxu0 0.0
      %614 = vmatprep.subr.mxu0 0.0
      %615 = vmatpush1.msra.mxu0 0.0
      %616 = vmatprep.subr.mxu0 0.0
      %617 = vmatpush1.msra.mxu0 0.0
      %618 = vmatprep.subr.mxu0 0.0
      %619 = vmatpush1.msra.mxu0 0.0
      %620 = vmatprep.subr.mxu0 0.0
      %621 = vmatpush1.msra.mxu0 0.0
      %622 = vmatprep.subr.mxu0 0.0
      %623 = vmatpush1.msra.mxu0 0.0
      %624 = vmatprep.subr.mxu0 0.0
      %625 = vmatpush1.msra.mxu0 0.0
      %626 = vmatprep.subr.mxu0 0.0
      %627 = vmatpush1.msra.mxu0 0.0
      %628 = vmatprep.subr.mxu0 0.0
      %629 = vmatpush1.msra.mxu0 0.0
      %630 = vmatprep.mubr.f32.mxu0 0.0
      %631 = vmatmul.mubr.f32.gmra.mrb[0].mxu0 %v471
      %v632 = vpop.f32.mrb[0].mxu0
      %v633 = vadd.f32 0.0, %v632
      %v634 = vpop.f32.mrb[0].mxu0
      %635 = vmatprep.mubr.f32.mxu0 0.0
      %636 = vmatmul.mubr.f32.gmra.mrb[0].mxu0 %v474
      %v637 = vpop.f32.mrb[0].mxu0
      %v638 = vadd.f32 0.0, %v637
      %v639 = vpop.f32.mrb[0].mxu0
      %640 = vmatprep.mubr.f32.mxu0 0.0
      %641 = vmatmul.mubr.f32.gmra.mrb[0].mxu0 %v477
      %v642 = vpop.f32.mrb[0].mxu0
      %v643 = vadd.f32 0.0, %v642
      %v644 = vpop.f32.mrb[0].mxu0
      %645 = vmatprep.mubr.f32.mxu0 0.0
      %646 = vmatmul.mubr.f32.gmra.mrb[0].mxu0 %v480
      %v647 = vpop.f32.mrb[0].mxu0
      %v648 = vadd.f32 0.0, %v647
      %v649 = vpop.f32.mrb[0].mxu0
      %650 = vmatprep.mubr.f32.mxu0 0.0
      %651 = vmatmul.mubr.f32.gmra.mrb[0].mxu0 %v483
      %v652 = vpop.f32.mrb[0].mxu0
      %v653 = vadd.f32 0.0, %v652
      %v654 = vpop.f32.mrb[0].mxu0
      %655 = vmatprep.mubr.f32.mxu0 0.0
      %656 = vmatmul.mubr.f32.gmra.mrb[0].mxu0 %v486
      %v657 = vpop.f32.mrb[0].mxu0
      %v658 = vadd.f32 0.0, %v657
      %v659 = vpop.f32.mrb[0].mxu0
      %660 = vmatprep.mubr.f32.mxu0 0.0
      %661 = vmatmul.mubr.f32.gmra.mrb[0].mxu0 %v489
      %v662 = vpop.f32.mrb[0].mxu0
      %v663 = vadd.f32 0.0, %v662
      %v664 = vpop.f32.mrb[0].mxu0
      %665 = vmatprep.mubr.f32.mxu0 0.0
      %666 = vmatmul.mubr.f32.gmra.mrb[0].mxu0 %v492
      %v667 = vpop.f32.mrb[0].mxu0
      %v668 = vadd.f32 0.0, %v667
      %v669 = vpop.f32.mrb[0].mxu0
      %670 = vmatprep.mubr.f32.mxu0 0.0
      %671 = vmatmul.mubr.f32.gmra.mrb[0].mxu0 %v495
      %v672 = vpop.f32.mrb[0].mxu0
      %v673 = vadd.f32 0.0, %v672
      %v674 = vpop.f32.mrb[0].mxu0
      %675 = vmatprep.mubr.f32.mxu0 0.0
      %676 = vmatmul.mubr.f32.gmra.mrb[0].mxu0 %v498
      %v677 = vpop.f32.mrb[0].mxu0
      %v678 = vadd.f32 0.0, %v677
      %v679 = vpop.f32.mrb[0].mxu0
      %680 = vmatprep.mubr.f32.mxu0 0.0
      %681 = vmatmul.mubr.f32.gmra.mrb[0].mxu0 %v501
      %v682 = vpop.f32.mrb[0].mxu0
      %v683 = vadd.f32 0.0, %v682
      %v684 = vpop.f32.mrb[0].mxu0
      %685 = vmatprep.mubr.f32.mxu0 0.0
      %686 = vmatmul.mubr.f32.gmra.mrb[0].mxu0 %v504
      %v687 = vpop.f32.mrb[0].mxu0
      %v688 = vadd.f32 0.0, %v687
      %v689 = vpop.f32.mrb[0].mxu0
      %690 = vmatprep.mubr.f32.mxu0 0.0
      %691 = vmatmul.mubr.f32.gmra.mrb[0].mxu0 %v507
      %v692 = vpop.f32.mrb[0].mxu0
      %v693 = vadd.f32 0.0, %v692
      %v694 = vpop.f32.mrb[0].mxu0
      %695 = vmatprep.mubr.f32.mxu0 0.0
      %696 = vmatmul.mubr.f32.gmra.mrb[0].mxu0 %v510
      %v697 = vpop.f32.mrb[0].mxu0
      %v698 = vadd.f32 0.0, %v697
      %v699 = vpop.f32.mrb[0].mxu0
      %700 = vmatprep.mubr.f32.mxu0 0.0
      %701 = vmatmul.mubr.f32.gmra.mrb[0].mxu0 %v513
      %v702 = vpop.f32.mrb[0].mxu0
      %v703 = vadd.f32 0.0, %v702
      %v704 = vpop.f32.mrb[0].mxu0
      %705 = vmatprep.mubr.f32.mxu0 0.0
      %706 = vmatmul.mubr.f32.gmra.mrb[0].mxu0 %v516
      %v707 = vpop.f32.mrb[0].mxu0
      %v708 = vadd.f32 0.0, %v707
      %v709 = vpop.f32.mrb[0].mxu0
      %710 = vmatprep.mubr.f32.mxu0 0.0
      %711 = vmatmul.mubr.f32.gmra.mrb[0].mxu0 %v519
      %v712 = vpop.f32.mrb[0].mxu0
      %v713 = vadd.f32 0.0, %v712
      %v714 = vpop.f32.mrb[0].mxu0
      %715 = vmatprep.mubr.f32.mxu0 0.0
      %716 = vmatmul.mubr.f32.gmra.mrb[0].mxu0 %v522
      %v717 = vpop.f32.mrb[0].mxu0
      %v718 = vadd.f32 0.0, %v717
      %v719 = vpop.f32.mrb[0].mxu0
      %720 = vmatprep.mubr.f32.mxu0 0.0
      %721 = vmatmul.mubr.f32.gmra.mrb[0].mxu0 %v525
      %v722 = vpop.f32.mrb[0].mxu0
      %v723 = vadd.f32 0.0, %v722
      %v724 = vpop.f32.mrb[0].mxu0
      %725 = vmatprep.mubr.f32.mxu0 0.0
      %726 = vmatmul.mubr.f32.gmra.mrb[0].mxu0 %v528
      %v727 = vpop.f32.mrb[0].mxu0
      %v728 = vadd.f32 0.0, %v727
      %v729 = vpop.f32.mrb[0].mxu0
      %730 = vmatprep.mubr.f32.mxu0 0.0
      %731 = vmatmul.mubr.f32.gmra.mrb[0].mxu0 %v531
      %v732 = vpop.f32.mrb[0].mxu0
      %v733 = vadd.f32 0.0, %v732
      %v734 = vpop.f32.mrb[0].mxu0
      %735 = vmatprep.mubr.f32.mxu0 0.0
      %736 = vmatmul.mubr.f32.gmra.mrb[0].mxu0 %v534
      %v737 = vpop.f32.mrb[0].mxu0
      %v738 = vadd.f32 0.0, %v737
      %v739 = vpop.f32.mrb[0].mxu0
      %740 = vmatprep.mubr.f32.mxu0 0.0
      %741 = vmatmul.mubr.f32.gmra.mrb[0].mxu0 %v537
      %v742 = vpop.f32.mrb[0].mxu0
      %v743 = vadd.f32 0.0, %v742
      %v744 = vpop.f32.mrb[0].mxu0
      %745 = vmatprep.mubr.f32.mxu0 0.0
      %746 = vmatmul.mubr.f32.gmra.mrb[0].mxu0 %v540
      %v747 = vpop.f32.mrb[0].mxu0
      %v748 = vadd.f32 0.0, %v747
      %v749 = vpop.f32.mrb[0].mxu0
      %750 = vmatprep.mubr.f32.mxu0 0.0
      %751 = vmatmul.mubr.f32.gmra.mrb[0].mxu0 %v543
      %v752 = vpop.f32.mrb[0].mxu0
      %v753 = vadd.f32 0.0, %v752
      %v754 = vpop.f32.mrb[0].mxu0
      %755 = vmatprep.mubr.f32.mxu0 0.0
      %756 = vmatmul.mubr.f32.gmra.mrb[0].mxu0 %v546
      %v757 = vpop.f32.mrb[0].mxu0
      %v758 = vadd.f32 0.0, %v757
      %v759 = vpop.f32.mrb[0].mxu0
      %760 = vmatprep.mubr.f32.mxu0 0.0
      %761 = vmatmul.mubr.f32.gmra.mrb[0].mxu0 %v549
      %v762 = vpop.f32.mrb[0].mxu0
      %v763 = vadd.f32 0.0, %v762
      %v764 = vpop.f32.mrb[0].mxu0
      %765 = vmatprep.mubr.f32.mxu0 0.0
      %766 = vmatmul.mubr.f32.gmra.mrb[0].mxu0 %v552
      %v767 = vpop.f32.mrb[0].mxu0
      %v768 = vadd.f32 0.0, %v767
      %v769 = vpop.f32.mrb[0].mxu0
      %770 = vmatprep.mubr.f32.mxu0 0.0
      %771 = vmatmul.mubr.f32.gmra.mrb[0].mxu0 %v555
      %v772 = vpop.f32.mrb[0].mxu0
      %v773 = vadd.f32 0.0, %v772
      %v774 = vpop.f32.mrb[0].mxu0
      %775 = vmatprep.mubr.f32.mxu0 0.0
      %776 = vmatmul.mubr.f32.gmra.mrb[0].mxu0 %v558
      %v777 = vpop.f32.mrb[0].mxu0
      %v778 = vadd.f32 0.0, %v777
      %v779 = vpop.f32.mrb[0].mxu0
      %780 = vmatprep.mubr.f32.mxu0 0.0
      %781 = vmatmul.mubr.f32.gmra.mrb[0].mxu0 %v561
      %v782 = vpop.f32.mrb[0].mxu0
      %v783 = vadd.f32 0.0, %v782
      %v784 = vpop.f32.mrb[0].mxu0
      %785 = vmatprep.mubr.f32.mxu0 0.0
      %786 = vmatmul.mubr.f32.gmra.mrb[0].mxu0 %v564
      %v787 = vpop.f32.mrb[0].mxu0
      %v788 = vadd.f32 0.0, %v787
      %v789 = vpop.f32.mrb[0].mxu0
      %790 = vdwg.mxu0
      %v792 = vsel %vm245, %v327, 0
      %v795 = vsel %vm245, %v328, 0
      %v798 = vsel %vm245, %v329, 0
      %v801 = vsel %vm245, %v330, 0
      %v804 = vsel %vm245, %v331, 0
      %v807 = vsel %vm245, %v332, 0
      %v810 = vsel %vm245, %v333, 0
      %v813 = vsel %vm245, %v334, 0
      %v816 = vsel %vm245, %v335, 0
      %v819 = vsel %vm245, %v336, 0
      %v822 = vsel %vm245, %v337, 0
      %v825 = vsel %vm245, %v338, 0
      %v828 = vsel %vm245, %v339, 0
      %v831 = vsel %vm245, %v340, 0
      %v834 = vsel %vm245, %v341, 0
      %v837 = vsel %vm245, %v342, 0
      %v840 = vsel %vm245, %v343, 0
      %v843 = vsel %vm245, %v344, 0
      %v846 = vsel %vm245, %v345, 0
      %v849 = vsel %vm245, %v346, 0
      %v852 = vsel %vm245, %v347, 0
      %v855 = vsel %vm245, %v348, 0
      %v858 = vsel %vm245, %v349, 0
      %v861 = vsel %vm245, %v350, 0
      %v864 = vsel %vm245, %v351, 0
      %v867 = vsel %vm245, %v352, 0
      %v870 = vsel %vm245, %v353, 0
      %v873 = vsel %vm245, %v354, 0
      %v876 = vsel %vm245, %v355, 0
      %v879 = vsel %vm245, %v356, 0
      %v882 = vsel %vm245, %v357, 0
      %v885 = vsel %vm245, %v358, 0
      %887 = vmatprep.subr.mxu0 0.0
      %888 = vmatpush1.msra.mxu0 %v319
      %889 = vmatprep.subr.mxu0 0.0
      %890 = vmatpush1.msra.mxu0 %v324
      %891 = vmatprep.subr.mxu0 0.0
      %892 = vmatpush1.msra.mxu0 0.0
      %893 = vmatprep.subr.mxu0 0.0
      %894 = vmatpush1.msra.mxu0 0.0
      %895 = vmatprep.subr.mxu0 0.0
      %896 = vmatpush1.msra.mxu0 0.0
      %897 = vmatprep.subr.mxu0 0.0
      %898 = vmatpush1.msra.mxu0 0.0
      %899 = vmatprep.subr.mxu0 0.0
      %900 = vmatpush1.msra.mxu0 0.0
      %901 = vmatprep.subr.mxu0 0.0
      %902 = vmatpush1.msra.mxu0 0.0
      %903 = vmatprep.subr.mxu0 0.0
      %904 = vmatpush1.msra.mxu0 0.0
      %905 = vmatprep.subr.mxu0 0.0
      %906 = vmatpush1.msra.mxu0 0.0
      %907 = vmatprep.subr.mxu0 0.0
      %908 = vmatpush1.msra.mxu0 0.0
      %909 = vmatprep.subr.mxu0 0.0
      %910 = vmatpush1.msra.mxu0 0.0
      %911 = vmatprep.subr.mxu0 0.0
      %912 = vmatpush1.msra.mxu0 0.0
      %913 = vmatprep.subr.mxu0 0.0
      %914 = vmatpush1.msra.mxu0 0.0
      %915 = vmatprep.subr.mxu0 0.0
      %916 = vmatpush1.msra.mxu0 0.0
      %917 = vmatprep.subr.mxu0 0.0
      %918 = vmatpush1.msra.mxu0 0.0
      %919 = vmatprep.subr.mxu0 0.0
      %920 = vmatpush1.msra.mxu0 0.0
      %921 = vmatprep.subr.mxu0 0.0
      %922 = vmatpush1.msra.mxu0 0.0
      %923 = vmatprep.subr.mxu0 0.0
      %924 = vmatpush1.msra.mxu0 0.0
      %925 = vmatprep.subr.mxu0 0.0
      %926 = vmatpush1.msra.mxu0 0.0
      %927 = vmatprep.subr.mxu0 0.0
      %928 = vmatpush1.msra.mxu0 0.0
      %929 = vmatprep.subr.mxu0 0.0
      %930 = vmatpush1.msra.mxu0 0.0
      %931 = vmatprep.subr.mxu0 0.0
      %932 = vmatpush1.msra.mxu0 0.0
      %933 = vmatprep.subr.mxu0 0.0
      %934 = vmatpush1.msra.mxu0 0.0
      %935 = vmatprep.subr.mxu0 0.0
      %936 = vmatpush1.msra.mxu0 0.0
      %937 = vmatprep.subr.mxu0 0.0
      %938 = vmatpush1.msra.mxu0 0.0
      %939 = vmatprep.subr.mxu0 0.0
      %940 = vmatpush1.msra.mxu0 0.0
      %941 = vmatprep.subr.mxu0 0.0
      %942 = vmatpush1.msra.mxu0 0.0
      %943 = vmatprep.subr.mxu0 0.0
      %944 = vmatpush1.msra.mxu0 0.0
      %945 = vmatprep.subr.mxu0 0.0
      %946 = vmatpush1.msra.mxu0 0.0
      %947 = vmatprep.subr.mxu0 0.0
      %948 = vmatpush1.msra.mxu0 0.0
      %949 = vmatprep.subr.mxu0 0.0
      %950 = vmatpush1.msra.mxu0 0.0
      %951 = vmatprep.mubr.f32.mxu0 0.0
      %952 = vmatmul.mubr.f32.gmra.mrb[0].mxu0 %v792
      %v953 = vpop.f32.mrb[0].mxu0
      %v954 = vadd.f32 %v633, %v953
      %v955 = vpop.f32.mrb[0].mxu0
      %956 = vmatprep.mubr.f32.mxu0 0.0
      %957 = vmatmul.mubr.f32.gmra.mrb[0].mxu0 %v795
      %v958 = vpop.f32.mrb[0].mxu0
      %v959 = vadd.f32 %v638, %v958
      %v960 = vpop.f32.mrb[0].mxu0
      %961 = vmatprep.mubr.f32.mxu0 0.0
      %962 = vmatmul.mubr.f32.gmra.mrb[0].mxu0 %v798
      %v963 = vpop.f32.mrb[0].mxu0
      %v964 = vadd.f32 %v643, %v963
      %v965 = vpop.f32.mrb[0].mxu0
      %966 = vmatprep.mubr.f32.mxu0 0.0
      %967 = vmatmul.mubr.f32.gmra.mrb[0].mxu0 %v801
      %v968 = vpop.f32.mrb[0].mxu0
      %v969 = vadd.f32 %v648, %v968
      %v970 = vpop.f32.mrb[0].mxu0
      %971 = vmatprep.mubr.f32.mxu0 0.0
      %972 = vmatmul.mubr.f32.gmra.mrb[0].mxu0 %v804
      %v973 = vpop.f32.mrb[0].mxu0
      %v974 = vadd.f32 %v653, %v973
      %v975 = vpop.f32.mrb[0].mxu0
      %976 = vmatprep.mubr.f32.mxu0 0.0
      %977 = vmatmul.mubr.f32.gmra.mrb[0].mxu0 %v807
      %v978 = vpop.f32.mrb[0].mxu0
      %v979 = vadd.f32 %v658, %v978
      %v980 = vpop.f32.mrb[0].mxu0
      %981 = vmatprep.mubr.f32.mxu0 0.0
      %982 = vmatmul.mubr.f32.gmra.mrb[0].mxu0 %v810
      %v983 = vpop.f32.mrb[0].mxu0
      %v984 = vadd.f32 %v663, %v983
      %v985 = vpop.f32.mrb[0].mxu0
      %986 = vmatprep.mubr.f32.mxu0 0.0
      %987 = vmatmul.mubr.f32.gmra.mrb[0].mxu0 %v813
      %v988 = vpop.f32.mrb[0].mxu0
      %v989 = vadd.f32 %v668, %v988
      %v990 = vpop.f32.mrb[0].mxu0
      %991 = vmatprep.mubr.f32.mxu0 0.0
      %992 = vmatmul.mubr.f32.gmra.mrb[0].mxu0 %v816
      %v993 = vpop.f32.mrb[0].mxu0
      %v994 = vadd.f32 %v673, %v993
      %v995 = vpop.f32.mrb[0].mxu0
      %996 = vmatprep.mubr.f32.mxu0 0.0
      %997 = vmatmul.mubr.f32.gmra.mrb[0].mxu0 %v819
      %v998 = vpop.f32.mrb[0].mxu0
      %v999 = vadd.f32 %v678, %v998
      %v1000 = vpop.f32.mrb[0].mxu0
      %1001 = vmatprep.mubr.f32.mxu0 0.0
      %1002 = vmatmul.mubr.f32.gmra.mrb[0].mxu0 %v822
      %v1003 = vpop.f32.mrb[0].mxu0
      %v1004 = vadd.f32 %v683, %v1003
      %v1005 = vpop.f32.mrb[0].mxu0
      %1006 = vmatprep.mubr.f32.mxu0 0.0
      %1007 = vmatmul.mubr.f32.gmra.mrb[0].mxu0 %v825
      %v1008 = vpop.f32.mrb[0].mxu0
      %v1009 = vadd.f32 %v688, %v1008
      %v1010 = vpop.f32.mrb[0].mxu0
      %1011 = vmatprep.mubr.f32.mxu0 0.0
      %1012 = vmatmul.mubr.f32.gmra.mrb[0].mxu0 %v828
      %v1013 = vpop.f32.mrb[0].mxu0
      %v1014 = vadd.f32 %v693, %v1013
      %v1015 = vpop.f32.mrb[0].mxu0
      %1016 = vmatprep.mubr.f32.mxu0 0.0
      %1017 = vmatmul.mubr.f32.gmra.mrb[0].mxu0 %v831
      %v1018 = vpop.f32.mrb[0].mxu0
      %v1019 = vadd.f32 %v698, %v1018
      %v1020 = vpop.f32.mrb[0].mxu0
      %1021 = vmatprep.mubr.f32.mxu0 0.0
      %1022 = vmatmul.mubr.f32.gmra.mrb[0].mxu0 %v834
      %v1023 = vpop.f32.mrb[0].mxu0
      %v1024 = vadd.f32 %v703, %v1023
      %v1025 = vpop.f32.mrb[0].mxu0
      %1026 = vmatprep.mubr.f32.mxu0 0.0
      %1027 = vmatmul.mubr.f32.gmra.mrb[0].mxu0 %v837
      %v1028 = vpop.f32.mrb[0].mxu0
      %v1029 = vadd.f32 %v708, %v1028
      %v1030 = vpop.f32.mrb[0].mxu0
      %1031 = vmatprep.mubr.f32.mxu0 0.0
      %1032 = vmatmul.mubr.f32.gmra.mrb[0].mxu0 %v840
      %v1033 = vpop.f32.mrb[0].mxu0
      %v1034 = vadd.f32 %v713, %v1033
      %v1035 = vpop.f32.mrb[0].mxu0
      %1036 = vmatprep.mubr.f32.mxu0 0.0
      %1037 = vmatmul.mubr.f32.gmra.mrb[0].mxu0 %v843
      %v1038 = vpop.f32.mrb[0].mxu0
      %v1039 = vadd.f32 %v718, %v1038
      %v1040 = vpop.f32.mrb[0].mxu0
      %1041 = vmatprep.mubr.f32.mxu0 0.0
      %1042 = vmatmul.mubr.f32.gmra.mrb[0].mxu0 %v846
      %v1043 = vpop.f32.mrb[0].mxu0
      %v1044 = vadd.f32 %v723, %v1043
      %v1045 = vpop.f32.mrb[0].mxu0
      %1046 = vmatprep.mubr.f32.mxu0 0.0
      %1047 = vmatmul.mubr.f32.gmra.mrb[0].mxu0 %v849
      %v1048 = vpop.f32.mrb[0].mxu0
      %v1049 = vadd.f32 %v728, %v1048
      %v1050 = vpop.f32.mrb[0].mxu0
      %1051 = vmatprep.mubr.f32.mxu0 0.0
      %1052 = vmatmul.mubr.f32.gmra.mrb[0].mxu0 %v852
      %v1053 = vpop.f32.mrb[0].mxu0
      %v1054 = vadd.f32 %v733, %v1053
      %v1055 = vpop.f32.mrb[0].mxu0
      %1056 = vmatprep.mubr.f32.mxu0 0.0
      %1057 = vmatmul.mubr.f32.gmra.mrb[0].mxu0 %v855
      %v1058 = vpop.f32.mrb[0].mxu0
      %v1059 = vadd.f32 %v738, %v1058
      %v1060 = vpop.f32.mrb[0].mxu0
      %1061 = vmatprep.mubr.f32.mxu0 0.0
      %1062 = vmatmul.mubr.f32.gmra.mrb[0].mxu0 %v858
      %v1063 = vpop.f32.mrb[0].mxu0
      %v1064 = vadd.f32 %v743, %v1063
      %v1065 = vpop.f32.mrb[0].mxu0
      %1066 = vmatprep.mubr.f32.mxu0 0.0
      %1067 = vmatmul.mubr.f32.gmra.mrb[0].mxu0 %v861
      %v1068 = vpop.f32.mrb[0].mxu0
      %v1069 = vadd.f32 %v748, %v1068
      %v1070 = vpop.f32.mrb[0].mxu0
      %1071 = vmatprep.mubr.f32.mxu0 0.0
      %1072 = vmatmul.mubr.f32.gmra.mrb[0].mxu0 %v864
      %v1073 = vpop.f32.mrb[0].mxu0
      %v1074 = vadd.f32 %v753, %v1073
      %v1075 = vpop.f32.mrb[0].mxu0
      %1076 = vmatprep.mubr.f32.mxu0 0.0
      %1077 = vmatmul.mubr.f32.gmra.mrb[0].mxu0 %v867
      %v1078 = vpop.f32.mrb[0].mxu0
      %v1079 = vadd.f32 %v758, %v1078
      %v1080 = vpop.f32.mrb[0].mxu0
      %1081 = vmatprep.mubr.f32.mxu0 0.0
      %1082 = vmatmul.mubr.f32.gmra.mrb[0].mxu0 %v870
      %v1083 = vpop.f32.mrb[0].mxu0
      %v1084 = vadd.f32 %v763, %v1083
      %v1085 = vpop.f32.mrb[0].mxu0
      %1086 = vmatprep.mubr.f32.mxu0 0.0
      %1087 = vmatmul.mubr.f32.gmra.mrb[0].mxu0 %v873
      %v1088 = vpop.f32.mrb[0].mxu0
      %v1089 = vadd.f32 %v768, %v1088
      %v1090 = vpop.f32.mrb[0].mxu0
      %1091 = vmatprep.mubr.f32.mxu0 0.0
      %1092 = vmatmul.mubr.f32.gmra.mrb[0].mxu0 %v876
      %v1093 = vpop.f32.mrb[0].mxu0
      %v1094 = vadd.f32 %v773, %v1093
      %v1095 = vpop.f32.mrb[0].mxu0
      %1096 = vmatprep.mubr.f32.mxu0 0.0
      %1097 = vmatmul.mubr.f32.gmra.mrb[0].mxu0 %v879
      %v1098 = vpop.f32.mrb[0].mxu0
      %v1099 = vadd.f32 %v778, %v1098
      %v1100 = vpop.f32.mrb[0].mxu0
      %1101 = vmatprep.mubr.f32.mxu0 0.0
      %1102 = vmatmul.mubr.f32.gmra.mrb[0].mxu0 %v882
      %v1103 = vpop.f32.mrb[0].mxu0
      %v1104 = vadd.f32 %v783, %v1103
      %v1105 = vpop.f32.mrb[0].mxu0
      %1106 = vmatprep.mubr.f32.mxu0 0.0
      %1107 = vmatmul.mubr.f32.gmra.mrb[0].mxu0 %v885
      %v1108 = vpop.f32.mrb[0].mxu0
      %v1109 = vadd.f32 %v788, %v1108
      %v1110 = vpop.f32.mrb[0].mxu0
      %1111 = vdwg.mxu0
      %s1112 = scalar_lea.vmem %s219, 16
      %v1113 = vld [vmem:[%s1112] sm:$0xff]
      %v1114 = vld [vmem:[%s1112 + $0x8] sm:$0xff]
      %v1115 = vsel %vm239, %v1113, 0.0
      %v1116 = vsel %vm240, %v1114, 0.0
      %v1118 = vsel %vm245, %v1115, 0
      %v1121 = vsel %vm245, %v1116, 0
      %1123 = vmatprep.subr.mxu0 0.0
      %1124 = vmatpush1.msra.mxu0 %v243
      %1125 = vmatprep.subr.mxu0 0.0
      %1126 = vmatpush1.msra.mxu0 %v244
      %1127 = vmatprep.subr.mxu0 0.0
      %1128 = vmatpush1.msra.mxu0 0.0
      %1129 = vmatprep.subr.mxu0 0.0
      %1130 = vmatpush1.msra.mxu0 0.0
      %1131 = vmatprep.subr.mxu0 0.0
      %1132 = vmatpush1.msra.mxu0 0.0
      %1133 = vmatprep.subr.mxu0 0.0
      %1134 = vmatpush1.msra.mxu0 0.0
      %1135 = vmatprep.subr.mxu0 0.0
      %1136 = vmatpush1.msra.mxu0 0.0
      %1137 = vmatprep.subr.mxu0 0.0
      %1138 = vmatpush1.msra.mxu0 0.0
      %1139 = vmatprep.subr.mxu0 0.0
      %1140 = vmatpush1.msra.mxu0 0.0
      %1141 = vmatprep.subr.mxu0 0.0
      %1142 = vmatpush1.msra.mxu0 0.0
      %1143 = vmatprep.subr.mxu0 0.0
      %1144 = vmatpush1.msra.mxu0 0.0
      %1145 = vmatprep.subr.mxu0 0.0
      %1146 = vmatpush1.msra.mxu0 0.0
      %1147 = vmatprep.subr.mxu0 0.0
      %1148 = vmatpush1.msra.mxu0 0.0
      %1149 = vmatprep.subr.mxu0 0.0
      %1150 = vmatpush1.msra.mxu0 0.0
      %1151 = vmatprep.subr.mxu0 0.0
      %1152 = vmatpush1.msra.mxu0 0.0
      %1153 = vmatprep.subr.mxu0 0.0
      %1154 = vmatpush1.msra.mxu0 0.0
      %1155 = vmatprep.subr.mxu0 0.0
      %1156 = vmatpush1.msra.mxu0 0.0
      %1157 = vmatprep.subr.mxu0 0.0
      %1158 = vmatpush1.msra.mxu0 0.0
      %1159 = vmatprep.subr.mxu0 0.0
      %1160 = vmatpush1.msra.mxu0 0.0
      %1161 = vmatprep.subr.mxu0 0.0
      %1162 = vmatpush1.msra.mxu0 0.0
      %1163 = vmatprep.subr.mxu0 0.0
      %1164 = vmatpush1.msra.mxu0 0.0
      %1165 = vmatprep.subr.mxu0 0.0
      %1166 = vmatpush1.msra.mxu0 0.0
      %1167 = vmatprep.subr.mxu0 0.0
      %1168 = vmatpush1.msra.mxu0 0.0
      %1169 = vmatprep.subr.mxu0 0.0
      %1170 = vmatpush1.msra.mxu0 0.0
      %1171 = vmatprep.subr.mxu0 0.0
      %1172 = vmatpush1.msra.mxu0 0.0
      %1173 = vmatprep.subr.mxu0 0.0
      %1174 = vmatpush1.msra.mxu0 0.0
      %1175 = vmatprep.subr.mxu0 0.0
      %1176 = vmatpush1.msra.mxu0 0.0
      %1177 = vmatprep.subr.mxu0 0.0
      %1178 = vmatpush1.msra.mxu0 0.0
      %1179 = vmatprep.subr.mxu0 0.0
      %1180 = vmatpush1.msra.mxu0 0.0
      %1181 = vmatprep.subr.mxu0 0.0
      %1182 = vmatpush1.msra.mxu0 0.0
      %1183 = vmatprep.subr.mxu0 0.0
      %1184 = vmatpush1.msra.mxu0 0.0
      %1185 = vmatprep.subr.mxu0 0.0
      %1186 = vmatpush1.msra.mxu0 0.0
      %1187 = vmatprep.mubr.f32.mxu0 0.0
      %1188 = vmatmul.mubr.f32.gmra.mrb[0].mxu0 %v1118
      %v1189 = vpop.f32.mrb[0].mxu0
      %v1190 = vadd.f32 0.0, %v1189
      %v1191 = vpop.f32.mrb[0].mxu0
      %1192 = vmatprep.mubr.f32.mxu0 0.0
      %1193 = vmatmul.mubr.f32.gmra.mrb[0].mxu0 %v1121
      %v1194 = vpop.f32.mrb[0].mxu0
      %v1195 = vadd.f32 0.0, %v1194
      %v1196 = vpop.f32.mrb[0].mxu0
      %1197 = vdwg.mxu0
      %s1198 = scalar_lea.vmem %s1, 512
      %v1199 = vld [vmem:[%s1198] sm:$0xff]
      %v1200 = vld [vmem:[%s1198 + $0x8] sm:$0xff]
      %v1201 = vld [vmem:[%s1198 + $0x10] sm:$0xff]
      %v1202 = vld [vmem:[%s1198 + $0x18] sm:$0xff]
      %v1203 = vld [vmem:[%s1198 + $0x20] sm:$0xff]
      %v1204 = vld [vmem:[%s1198 + $0x28] sm:$0xff]
      %v1205 = vld [vmem:[%s1198 + $0x30] sm:$0xff]
      %v1206 = vld [vmem:[%s1198 + $0x38] sm:$0xff]
      %v1207 = vld [vmem:[%s1198 + $0x40] sm:$0xff]
      %v1208 = vld [vmem:[%s1198 + $0x48] sm:$0xff]
      %v1209 = vld [vmem:[%s1198 + $0x50] sm:$0xff]
      %v1210 = vld [vmem:[%s1198 + $0x58] sm:$0xff]
      %v1211 = vld [vmem:[%s1198 + $0x60] sm:$0xff]
      %v1212 = vld [vmem:[%s1198 + $0x68] sm:$0xff]
      %v1213 = vld [vmem:[%s1198 + $0x70] sm:$0xff]
      %v1214 = vld [vmem:[%s1198 + $0x78] sm:$0xff]
      %v1215 = vld [vmem:[%s1198 + $0x80] sm:$0xff]
      %v1216 = vld [vmem:[%s1198 + $0x88] sm:$0xff]
      %v1217 = vld [vmem:[%s1198 + $0x90] sm:$0xff]
      %v1218 = vld [vmem:[%s1198 + $0x98] sm:$0xff]
      %v1219 = vld [vmem:[%s1198 + $0xa0] sm:$0xff]
      %v1220 = vld [vmem:[%s1198 + $0xa8] sm:$0xff]
      %v1221 = vld [vmem:[%s1198 + $0xb0] sm:$0xff]
      %v1222 = vld [vmem:[%s1198 + $0xb8] sm:$0xff]
      %v1223 = vld [vmem:[%s1198 + $0xc0] sm:$0xff]
      %v1224 = vld [vmem:[%s1198 + $0xc8] sm:$0xff]
      %v1225 = vld [vmem:[%s1198 + $0xd0] sm:$0xff]
      %v1226 = vld [vmem:[%s1198 + $0xd8] sm:$0xff]
      %v1227 = vld [vmem:[%s1198 + $0xe0] sm:$0xff]
      %v1228 = vld [vmem:[%s1198 + $0xe8] sm:$0xff]
      %v1229 = vld [vmem:[%s1198 + $0xf0] sm:$0xff]
      %v1230 = vld [vmem:[%s1198 + $0xf8] sm:$0xff]
      %v1232 = vsel %vm245, %v1199, 0
      %v1235 = vsel %vm245, %v1200, 0
      %v1238 = vsel %vm245, %v1201, 0
      %v1241 = vsel %vm245, %v1202, 0
      %v1244 = vsel %vm245, %v1203, 0
      %v1247 = vsel %vm245, %v1204, 0
      %v1250 = vsel %vm245, %v1205, 0
      %v1253 = vsel %vm245, %v1206, 0
      %v1256 = vsel %vm245, %v1207, 0
      %v1259 = vsel %vm245, %v1208, 0
      %v1262 = vsel %vm245, %v1209, 0
      %v1265 = vsel %vm245, %v1210, 0
      %v1268 = vsel %vm245, %v1211, 0
      %v1271 = vsel %vm245, %v1212, 0
      %v1274 = vsel %vm245, %v1213, 0
      %v1277 = vsel %vm245, %v1214, 0
      %v1280 = vsel %vm245, %v1215, 0
      %v1283 = vsel %vm245, %v1216, 0
      %v1286 = vsel %vm245, %v1217, 0
      %v1289 = vsel %vm245, %v1218, 0
      %v1292 = vsel %vm245, %v1219, 0
      %v1295 = vsel %vm245, %v1220, 0
      %v1298 = vsel %vm245, %v1221, 0
      %v1301 = vsel %vm245, %v1222, 0
      %v1304 = vsel %vm245, %v1223, 0
      %v1307 = vsel %vm245, %v1224, 0
      %v1310 = vsel %vm245, %v1225, 0
      %v1313 = vsel %vm245, %v1226, 0
      %v1316 = vsel %vm245, %v1227, 0
      %v1319 = vsel %vm245, %v1228, 0
      %v1322 = vsel %vm245, %v1229, 0
      %v1325 = vsel %vm245, %v1230, 0
      %1327 = vmatprep.subr.mxu0 0.0
      %1328 = vmatpush1.msra.mxu0 %v1190
      %1329 = vmatprep.subr.mxu0 0.0
      %1330 = vmatpush1.msra.mxu0 %v1195
      %1331 = vmatprep.subr.mxu0 0.0
      %1332 = vmatpush1.msra.mxu0 0.0
      %1333 = vmatprep.subr.mxu0 0.0
      %1334 = vmatpush1.msra.mxu0 0.0
      %1335 = vmatprep.subr.mxu0 0.0
      %1336 = vmatpush1.msra.mxu0 0.0
      %1337 = vmatprep.subr.mxu0 0.0
      %1338 = vmatpush1.msra.mxu0 0.0
      %1339 = vmatprep.subr.mxu0 0.0
      %1340 = vmatpush1.msra.mxu0 0.0
      %1341 = vmatprep.subr.mxu0 0.0
      %1342 = vmatpush1.msra.mxu0 0.0
      %1343 = vmatprep.subr.mxu0 0.0
      %1344 = vmatpush1.msra.mxu0 0.0
      %1345 = vmatprep.subr.mxu0 0.0
      %1346 = vmatpush1.msra.mxu0 0.0
      %1347 = vmatprep.subr.mxu0 0.0
      %1348 = vmatpush1.msra.mxu0 0.0
      %1349 = vmatprep.subr.mxu0 0.0
      %1350 = vmatpush1.msra.mxu0 0.0
      %1351 = vmatprep.subr.mxu0 0.0
      %1352 = vmatpush1.msra.mxu0 0.0
      %1353 = vmatprep.subr.mxu0 0.0
      %1354 = vmatpush1.msra.mxu0 0.0
      %1355 = vmatprep.subr.mxu0 0.0
      %1356 = vmatpush1.msra.mxu0 0.0
      %1357 = vmatprep.subr.mxu0 0.0
      %1358 = vmatpush1.msra.mxu0 0.0
      %1359 = vmatprep.subr.mxu0 0.0
      %1360 = vmatpush1.msra.mxu0 0.0
      %1361 = vmatprep.subr.mxu0 0.0
      %1362 = vmatpush1.msra.mxu0 0.0
      %1363 = vmatprep.subr.mxu0 0.0
      %1364 = vmatpush1.msra.mxu0 0.0
      %1365 = vmatprep.subr.mxu0 0.0
      %1366 = vmatpush1.msra.mxu0 0.0
      %1367 = vmatprep.subr.mxu0 0.0
      %1368 = vmatpush1.msra.mxu0 0.0
      %1369 = vmatprep.subr.mxu0 0.0
      %1370 = vmatpush1.msra.mxu0 0.0
      %1371 = vmatprep.subr.mxu0 0.0
      %1372 = vmatpush1.msra.mxu0 0.0
      %1373 = vmatprep.subr.mxu0 0.0
      %1374 = vmatpush1.msra.mxu0 0.0
      %1375 = vmatprep.subr.mxu0 0.0
      %1376 = vmatpush1.msra.mxu0 0.0
      %1377 = vmatprep.subr.mxu0 0.0
      %1378 = vmatpush1.msra.mxu0 0.0
      %1379 = vmatprep.subr.mxu0 0.0
      %1380 = vmatpush1.msra.mxu0 0.0
      %1381 = vmatprep.subr.mxu0 0.0
      %1382 = vmatpush1.msra.mxu0 0.0
      %1383 = vmatprep.subr.mxu0 0.0
      %1384 = vmatpush1.msra.mxu0 0.0
      %1385 = vmatprep.subr.mxu0 0.0
      %1386 = vmatpush1.msra.mxu0 0.0
      %1387 = vmatprep.subr.mxu0 0.0
      %1388 = vmatpush1.msra.mxu0 0.0
      %1389 = vmatprep.subr.mxu0 0.0
      %1390 = vmatpush1.msra.mxu0 0.0
      %1391 = vmatprep.mubr.f32.mxu0 0.0
      %1392 = vmatmul.mubr.f32.gmra.mrb[0].mxu0 %v1232
      %v1393 = vpop.f32.mrb[0].mxu0
      %v1394 = vadd.f32 0.0, %v1393
      %v1395 = vpop.f32.mrb[0].mxu0
      %1396 = vmatprep.mubr.f32.mxu0 0.0
      %1397 = vmatmul.mubr.f32.gmra.mrb[0].mxu0 %v1235
      %v1398 = vpop.f32.mrb[0].mxu0
      %v1399 = vadd.f32 0.0, %v1398
      %v1400 = vpop.f32.mrb[0].mxu0
      %1401 = vmatprep.mubr.f32.mxu0 0.0
      %1402 = vmatmul.mubr.f32.gmra.mrb[0].mxu0 %v1238
      %v1403 = vpop.f32.mrb[0].mxu0
      %v1404 = vadd.f32 0.0, %v1403
      %v1405 = vpop.f32.mrb[0].mxu0
      %1406 = vmatprep.mubr.f32.mxu0 0.0
      %1407 = vmatmul.mubr.f32.gmra.mrb[0].mxu0 %v1241
      %v1408 = vpop.f32.mrb[0].mxu0
      %v1409 = vadd.f32 0.0, %v1408
      %v1410 = vpop.f32.mrb[0].mxu0
      %1411 = vmatprep.mubr.f32.mxu0 0.0
      %1412 = vmatmul.mubr.f32.gmra.mrb[0].mxu0 %v1244
      %v1413 = vpop.f32.mrb[0].mxu0
      %v1414 = vadd.f32 0.0, %v1413
      %v1415 = vpop.f32.mrb[0].mxu0
      %1416 = vmatprep.mubr.f32.mxu0 0.0
      %1417 = vmatmul.mubr.f32.gmra.mrb[0].mxu0 %v1247
      %v1418 = vpop.f32.mrb[0].mxu0
      %v1419 = vadd.f32 0.0, %v1418
      %v1420 = vpop.f32.mrb[0].mxu0
      %1421 = vmatprep.mubr.f32.mxu0 0.0
      %1422 = vmatmul.mubr.f32.gmra.mrb[0].mxu0 %v1250
      %v1423 = vpop.f32.mrb[0].mxu0
      %v1424 = vadd.f32 0.0, %v1423
      %v1425 = vpop.f32.mrb[0].mxu0
      %1426 = vmatprep.mubr.f32.mxu0 0.0
      %1427 = vmatmul.mubr.f32.gmra.mrb[0].mxu0 %v1253
      %v1428 = vpop.f32.mrb[0].mxu0
      %v1429 = vadd.f32 0.0, %v1428
      %v1430 = vpop.f32.mrb[0].mxu0
      %1431 = vmatprep.mubr.f32.mxu0 0.0
      %1432 = vmatmul.mubr.f32.gmra.mrb[0].mxu0 %v1256
      %v1433 = vpop.f32.mrb[0].mxu0
      %v1434 = vadd.f32 0.0, %v1433
      %v1435 = vpop.f32.mrb[0].mxu0
      %1436 = vmatprep.mubr.f32.mxu0 0.0
      %1437 = vmatmul.mubr.f32.gmra.mrb[0].mxu0 %v1259
      %v1438 = vpop.f32.mrb[0].mxu0
      %v1439 = vadd.f32 0.0, %v1438
      %v1440 = vpop.f32.mrb[0].mxu0
      %1441 = vmatprep.mubr.f32.mxu0 0.0
      %1442 = vmatmul.mubr.f32.gmra.mrb[0].mxu0 %v1262
      %v1443 = vpop.f32.mrb[0].mxu0
      %v1444 = vadd.f32 0.0, %v1443
      %v1445 = vpop.f32.mrb[0].mxu0
      %1446 = vmatprep.mubr.f32.mxu0 0.0
      %1447 = vmatmul.mubr.f32.gmra.mrb[0].mxu0 %v1265
      %v1448 = vpop.f32.mrb[0].mxu0
      %v1449 = vadd.f32 0.0, %v1448
      %v1450 = vpop.f32.mrb[0].mxu0
      %1451 = vmatprep.mubr.f32.mxu0 0.0
      %1452 = vmatmul.mubr.f32.gmra.mrb[0].mxu0 %v1268
      %v1453 = vpop.f32.mrb[0].mxu0
      %v1454 = vadd.f32 0.0, %v1453
      %v1455 = vpop.f32.mrb[0].mxu0
      %1456 = vmatprep.mubr.f32.mxu0 0.0
      %1457 = vmatmul.mubr.f32.gmra.mrb[0].mxu0 %v1271
      %v1458 = vpop.f32.mrb[0].mxu0
      %v1459 = vadd.f32 0.0, %v1458
      %v1460 = vpop.f32.mrb[0].mxu0
      %1461 = vmatprep.mubr.f32.mxu0 0.0
      %1462 = vmatmul.mubr.f32.gmra.mrb[0].mxu0 %v1274
      %v1463 = vpop.f32.mrb[0].mxu0
      %v1464 = vadd.f32 0.0, %v1463
      %v1465 = vpop.f32.mrb[0].mxu0
      %1466 = vmatprep.mubr.f32.mxu0 0.0
      %1467 = vmatmul.mubr.f32.gmra.mrb[0].mxu0 %v1277
      %v1468 = vpop.f32.mrb[0].mxu0
      %v1469 = vadd.f32 0.0, %v1468
      %v1470 = vpop.f32.mrb[0].mxu0
      %1471 = vmatprep.mubr.f32.mxu0 0.0
      %1472 = vmatmul.mubr.f32.gmra.mrb[0].mxu0 %v1280
      %v1473 = vpop.f32.mrb[0].mxu0
      %v1474 = vadd.f32 0.0, %v1473
      %v1475 = vpop.f32.mrb[0].mxu0
      %1476 = vmatprep.mubr.f32.mxu0 0.0
      %1477 = vmatmul.mubr.f32.gmra.mrb[0].mxu0 %v1283
      %v1478 = vpop.f32.mrb[0].mxu0
      %v1479 = vadd.f32 0.0, %v1478
      %v1480 = vpop.f32.mrb[0].mxu0
      %1481 = vmatprep.mubr.f32.mxu0 0.0
      %1482 = vmatmul.mubr.f32.gmra.mrb[0].mxu0 %v1286
      %v1483 = vpop.f32.mrb[0].mxu0
      %v1484 = vadd.f32 0.0, %v1483
      %v1485 = vpop.f32.mrb[0].mxu0
      %1486 = vmatprep.mubr.f32.mxu0 0.0
      %1487 = vmatmul.mubr.f32.gmra.mrb[0].mxu0 %v1289
      %v1488 = vpop.f32.mrb[0].mxu0
      %v1489 = vadd.f32 0.0, %v1488
      %v1490 = vpop.f32.mrb[0].mxu0
      %1491 = vmatprep.mubr.f32.mxu0 0.0
      %1492 = vmatmul.mubr.f32.gmra.mrb[0].mxu0 %v1292
      %v1493 = vpop.f32.mrb[0].mxu0
      %v1494 = vadd.f32 0.0, %v1493
      %v1495 = vpop.f32.mrb[0].mxu0
      %1496 = vmatprep.mubr.f32.mxu0 0.0
      %1497 = vmatmul.mubr.f32.gmra.mrb[0].mxu0 %v1295
      %v1498 = vpop.f32.mrb[0].mxu0
      %v1499 = vadd.f32 0.0, %v1498
      %v1500 = vpop.f32.mrb[0].mxu0
      %1501 = vmatprep.mubr.f32.mxu0 0.0
      %1502 = vmatmul.mubr.f32.gmra.mrb[0].mxu0 %v1298
      %v1503 = vpop.f32.mrb[0].mxu0
      %v1504 = vadd.f32 0.0, %v1503
      %v1505 = vpop.f32.mrb[0].mxu0
      %1506 = vmatprep.mubr.f32.mxu0 0.0
      %1507 = vmatmul.mubr.f32.gmra.mrb[0].mxu0 %v1301
      %v1508 = vpop.f32.mrb[0].mxu0
      %v1509 = vadd.f32 0.0, %v1508
      %v1510 = vpop.f32.mrb[0].mxu0
      %1511 = vmatprep.mubr.f32.mxu0 0.0
      %1512 = vmatmul.mubr.f32.gmra.mrb[0].mxu0 %v1304
      %v1513 = vpop.f32.mrb[0].mxu0
      %v1514 = vadd.f32 0.0, %v1513
      %v1515 = vpop.f32.mrb[0].mxu0
      %1516 = vmatprep.mubr.f32.mxu0 0.0
      %1517 = vmatmul.mubr.f32.gmra.mrb[0].mxu0 %v1307
      %v1518 = vpop.f32.mrb[0].mxu0
      %v1519 = vadd.f32 0.0, %v1518
      %v1520 = vpop.f32.mrb[0].mxu0
      %1521 = vmatprep.mubr.f32.mxu0 0.0
      %1522 = vmatmul.mubr.f32.gmra.mrb[0].mxu0 %v1310
      %v1523 = vpop.f32.mrb[0].mxu0
      %v1524 = vadd.f32 0.0, %v1523
      %v1525 = vpop.f32.mrb[0].mxu0
      %1526 = vmatprep.mubr.f32.mxu0 0.0
      %1527 = vmatmul.mubr.f32.gmra.mrb[0].mxu0 %v1313
      %v1528 = vpop.f32.mrb[0].mxu0
      %v1529 = vadd.f32 0.0, %v1528
      %v1530 = vpop.f32.mrb[0].mxu0
      %1531 = vmatprep.mubr.f32.mxu0 0.0
      %1532 = vmatmul.mubr.f32.gmra.mrb[0].mxu0 %v1316
      %v1533 = vpop.f32.mrb[0].mxu0
      %v1534 = vadd.f32 0.0, %v1533
      %v1535 = vpop.f32.mrb[0].mxu0
      %1536 = vmatprep.mubr.f32.mxu0 0.0
      %1537 = vmatmul.mubr.f32.gmra.mrb[0].mxu0 %v1319
      %v1538 = vpop.f32.mrb[0].mxu0
      %v1539 = vadd.f32 0.0, %v1538
      %v1540 = vpop.f32.mrb[0].mxu0
      %1541 = vmatprep.mubr.f32.mxu0 0.0
      %1542 = vmatmul.mubr.f32.gmra.mrb[0].mxu0 %v1322
      %v1543 = vpop.f32.mrb[0].mxu0
      %v1544 = vadd.f32 0.0, %v1543
      %v1545 = vpop.f32.mrb[0].mxu0
      %1546 = vmatprep.mubr.f32.mxu0 0.0
      %1547 = vmatmul.mubr.f32.gmra.mrb[0].mxu0 %v1325
      %v1548 = vpop.f32.mrb[0].mxu0
      %v1549 = vadd.f32 0.0, %v1548
      %v1550 = vpop.f32.mrb[0].mxu0
      %1551 = vdwg.mxu0
      %v1552 = vadd.f32 %v954, %v1394
      %v1553 = vadd.f32 %v959, %v1399
      %v1554 = vadd.f32 %v964, %v1404
      %v1555 = vadd.f32 %v969, %v1409
      %v1556 = vadd.f32 %v974, %v1414
      %v1557 = vadd.f32 %v979, %v1419
      %v1558 = vadd.f32 %v984, %v1424
      %v1559 = vadd.f32 %v989, %v1429
      %v1560 = vadd.f32 %v994, %v1434
      %v1561 = vadd.f32 %v999, %v1439
      %v1562 = vadd.f32 %v1004, %v1444
      %v1563 = vadd.f32 %v1009, %v1449
      %v1564 = vadd.f32 %v1014, %v1454
      %v1565 = vadd.f32 %v1019, %v1459
      %v1566 = vadd.f32 %v1024, %v1464
      %v1567 = vadd.f32 %v1029, %v1469
      %v1568 = vadd.f32 %v1034, %v1474
      %v1569 = vadd.f32 %v1039, %v1479
      %v1570 = vadd.f32 %v1044, %v1484
      %v1571 = vadd.f32 %v1049, %v1489
      %v1572 = vadd.f32 %v1054, %v1494
      %v1573 = vadd.f32 %v1059, %v1499
      %v1574 = vadd.f32 %v1064, %v1504
      %v1575 = vadd.f32 %v1069, %v1509
      %v1576 = vadd.f32 %v1074, %v1514
      %v1577 = vadd.f32 %v1079, %v1519
      %v1578 = vadd.f32 %v1084, %v1524
      %v1579 = vadd.f32 %v1089, %v1529
      %v1580 = vadd.f32 %v1094, %v1534
      %v1581 = vadd.f32 %v1099, %v1539
      %v1582 = vadd.f32 %v1104, %v1544
      %v1583 = vadd.f32 %v1109, %v1549
      %1584 = vmatprep.subr.mxu0 0.0
      %1585 = vmatpush1.msra.mxu0 %v360
      %1586 = vmatprep.subr.mxu0 0.0
      %1587 = vmatpush1.msra.mxu0 %v361
      %1588 = vmatprep.subr.mxu0 0.0
      %1589 = vmatpush1.msra.mxu0 0.0
      %1590 = vmatprep.subr.mxu0 0.0
      %1591 = vmatpush1.msra.mxu0 0.0
      %1592 = vmatprep.subr.mxu0 0.0
      %1593 = vmatpush1.msra.mxu0 0.0
      %1594 = vmatprep.subr.mxu0 0.0
      %1595 = vmatpush1.msra.mxu0 0.0
      %1596 = vmatprep.subr.mxu0 0.0
      %1597 = vmatpush1.msra.mxu0 0.0
      %1598 = vmatprep.subr.mxu0 0.0
      %1599 = vmatpush1.msra.mxu0 0.0
      %1600 = vmatprep.subr.mxu0 0.0
      %1601 = vmatpush1.msra.mxu0 0.0
      %1602 = vmatprep.subr.mxu0 0.0
      %1603 = vmatpush1.msra.mxu0 0.0
      %1604 = vmatprep.subr.mxu0 0.0
      %1605 = vmatpush1.msra.mxu0 0.0
      %1606 = vmatprep.subr.mxu0 0.0
      %1607 = vmatpush1.msra.mxu0 0.0
      %1608 = vmatprep.subr.mxu0 0.0
      %1609 = vmatpush1.msra.mxu0 0.0
      %1610 = vmatprep.subr.mxu0 0.0
      %1611 = vmatpush1.msra.mxu0 0.0
      %1612 = vmatprep.subr.mxu0 0.0
      %1613 = vmatpush1.msra.mxu0 0.0
      %1614 = vmatprep.subr.mxu0 0.0
      %1615 = vmatpush1.msra.mxu0 0.0
      %1616 = vmatprep.subr.mxu0 0.0
      %1617 = vmatpush1.msra.mxu0 0.0
      %1618 = vmatprep.subr.mxu0 0.0
      %1619 = vmatpush1.msra.mxu0 0.0
      %1620 = vmatprep.subr.mxu0 0.0
      %1621 = vmatpush1.msra.mxu0 0.0
      %1622 = vmatprep.subr.mxu0 0.0
      %1623 = vmatpush1.msra.mxu0 0.0
      %1624 = vmatprep.subr.mxu0 0.0
      %1625 = vmatpush1.msra.mxu0 0.0
      %1626 = vmatprep.subr.mxu0 0.0
      %1627 = vmatpush1.msra.mxu0 0.0
      %1628 = vmatprep.subr.mxu0 0.0
      %1629 = vmatpush1.msra.mxu0 0.0
      %1630 = vmatprep.subr.mxu0 0.0
      %1631 = vmatpush1.msra.mxu0 0.0
      %1632 = vmatprep.subr.mxu0 0.0
      %1633 = vmatpush1.msra.mxu0 0.0
      %1634 = vmatprep.subr.mxu0 0.0
      %1635 = vmatpush1.msra.mxu0 0.0
      %1636 = vmatprep.subr.mxu0 0.0
      %1637 = vmatpush1.msra.mxu0 0.0
      %1638 = vmatprep.subr.mxu0 0.0
      %1639 = vmatpush1.msra.mxu0 0.0
      %1640 = vmatprep.subr.mxu0 0.0
      %1641 = vmatpush1.msra.mxu0 0.0
      %1642 = vmatprep.subr.mxu0 0.0
      %1643 = vmatpush1.msra.mxu0 0.0
      %1644 = vmatprep.subr.mxu0 0.0
      %1645 = vmatpush1.msra.mxu0 0.0
      %1646 = vmatprep.subr.mxu0 0.0
      %1647 = vmatpush1.msra.mxu0 0.0
      %1648 = vmatprep.mubr.f32.mxu0 0.0
      %1649 = vmatmul.mubr.f32.gmra.mrb[0].mxu0 %v1118
      %v1650 = vpop.f32.mrb[0].mxu0
      %v1651 = vadd.f32 0.0, %v1650
      %v1652 = vpop.f32.mrb[0].mxu0
      %1653 = vmatprep.mubr.f32.mxu0 0.0
      %1654 = vmatmul.mubr.f32.gmra.mrb[0].mxu0 %v1121
      %v1655 = vpop.f32.mrb[0].mxu0
      %v1656 = vadd.f32 0.0, %v1655
      %v1657 = vpop.f32.mrb[0].mxu0
      %1658 = vdwg.mxu0
      %s1659 = scalar_lea.vmem %s1, 768
      %v1660 = vld [vmem:[%s1659] sm:$0xff]
      %v1661 = vld [vmem:[%s1659 + $0x8] sm:$0xff]
      %v1662 = vld [vmem:[%s1659 + $0x10] sm:$0xff]
      %v1663 = vld [vmem:[%s1659 + $0x18] sm:$0xff]
      %v1664 = vld [vmem:[%s1659 + $0x20] sm:$0xff]
      %v1665 = vld [vmem:[%s1659 + $0x28] sm:$0xff]
      %v1666 = vld [vmem:[%s1659 + $0x30] sm:$0xff]
      %v1667 = vld [vmem:[%s1659 + $0x38] sm:$0xff]
      %v1668 = vld [vmem:[%s1659 + $0x40] sm:$0xff]
      %v1669 = vld [vmem:[%s1659 + $0x48] sm:$0xff]
      %v1670 = vld [vmem:[%s1659 + $0x50] sm:$0xff]
      %v1671 = vld [vmem:[%s1659 + $0x58] sm:$0xff]
      %v1672 = vld [vmem:[%s1659 + $0x60] sm:$0xff]
      %v1673 = vld [vmem:[%s1659 + $0x68] sm:$0xff]
      %v1674 = vld [vmem:[%s1659 + $0x70] sm:$0xff]
      %v1675 = vld [vmem:[%s1659 + $0x78] sm:$0xff]
      %v1676 = vld [vmem:[%s1659 + $0x80] sm:$0xff]
      %v1677 = vld [vmem:[%s1659 + $0x88] sm:$0xff]
      %v1678 = vld [vmem:[%s1659 + $0x90] sm:$0xff]
      %v1679 = vld [vmem:[%s1659 + $0x98] sm:$0xff]
      %v1680 = vld [vmem:[%s1659 + $0xa0] sm:$0xff]
      %v1681 = vld [vmem:[%s1659 + $0xa8] sm:$0xff]
      %v1682 = vld [vmem:[%s1659 + $0xb0] sm:$0xff]
      %v1683 = vld [vmem:[%s1659 + $0xb8] sm:$0xff]
      %v1684 = vld [vmem:[%s1659 + $0xc0] sm:$0xff]
      %v1685 = vld [vmem:[%s1659 + $0xc8] sm:$0xff]
      %v1686 = vld [vmem:[%s1659 + $0xd0] sm:$0xff]
      %v1687 = vld [vmem:[%s1659 + $0xd8] sm:$0xff]
      %v1688 = vld [vmem:[%s1659 + $0xe0] sm:$0xff]
      %v1689 = vld [vmem:[%s1659 + $0xe8] sm:$0xff]
      %v1690 = vld [vmem:[%s1659 + $0xf0] sm:$0xff]
      %v1691 = vld [vmem:[%s1659 + $0xf8] sm:$0xff]
      %v1693 = vsel %vm245, %v1660, 0
      %v1696 = vsel %vm245, %v1661, 0
      %v1699 = vsel %vm245, %v1662, 0
      %v1702 = vsel %vm245, %v1663, 0
      %v1705 = vsel %vm245, %v1664, 0
      %v1708 = vsel %vm245, %v1665, 0
      %v1711 = vsel %vm245, %v1666, 0
      %v1714 = vsel %vm245, %v1667, 0
      %v1717 = vsel %vm245, %v1668, 0
      %v1720 = vsel %vm245, %v1669, 0
      %v1723 = vsel %vm245, %v1670, 0
      %v1726 = vsel %vm245, %v1671, 0
      %v1729 = vsel %vm245, %v1672, 0
      %v1732 = vsel %vm245, %v1673, 0
      %v1735 = vsel %vm245, %v1674, 0
      %v1738 = vsel %vm245, %v1675, 0
      %v1741 = vsel %vm245, %v1676, 0
      %v1744 = vsel %vm245, %v1677, 0
      %v1747 = vsel %vm245, %v1678, 0
      %v1750 = vsel %vm245, %v1679, 0
      %v1753 = vsel %vm245, %v1680, 0
      %v1756 = vsel %vm245, %v1681, 0
      %v1759 = vsel %vm245, %v1682, 0
      %v1762 = vsel %vm245, %v1683, 0
      %v1765 = vsel %vm245, %v1684, 0
      %v1768 = vsel %vm245, %v1685, 0
      %v1771 = vsel %vm245, %v1686, 0
      %v1774 = vsel %vm245, %v1687, 0
      %v1777 = vsel %vm245, %v1688, 0
      %v1780 = vsel %vm245, %v1689, 0
      %v1783 = vsel %vm245, %v1690, 0
      %v1786 = vsel %vm245, %v1691, 0
      %1788 = vmatprep.subr.mxu0 0.0
      %1789 = vmatpush1.msra.mxu0 %v1651
      %1790 = vmatprep.subr.mxu0 0.0
      %1791 = vmatpush1.msra.mxu0 %v1656
      %1792 = vmatprep.subr.mxu0 0.0
      %1793 = vmatpush1.msra.mxu0 0.0
      %1794 = vmatprep.subr.mxu0 0.0
      %1795 = vmatpush1.msra.mxu0 0.0
      %1796 = vmatprep.subr.mxu0 0.0
      %1797 = vmatpush1.msra.mxu0 0.0
      %1798 = vmatprep.subr.mxu0 0.0
      %1799 = vmatpush1.msra.mxu0 0.0
      %1800 = vmatprep.subr.mxu0 0.0
      %1801 = vmatpush1.msra.mxu0 0.0
      %1802 = vmatprep.subr.mxu0 0.0
      %1803 = vmatpush1.msra.mxu0 0.0
      %1804 = vmatprep.subr.mxu0 0.0
      %1805 = vmatpush1.msra.mxu0 0.0
      %1806 = vmatprep.subr.mxu0 0.0
      %1807 = vmatpush1.msra.mxu0 0.0
      %1808 = vmatprep.subr.mxu0 0.0
      %1809 = vmatpush1.msra.mxu0 0.0
      %1810 = vmatprep.subr.mxu0 0.0
      %1811 = vmatpush1.msra.mxu0 0.0
      %1812 = vmatprep.subr.mxu0 0.0
      %1813 = vmatpush1.msra.mxu0 0.0
      %1814 = vmatprep.subr.mxu0 0.0
      %1815 = vmatpush1.msra.mxu0 0.0
      %1816 = vmatprep.subr.mxu0 0.0
      %1817 = vmatpush1.msra.mxu0 0.0
      %1818 = vmatprep.subr.mxu0 0.0
      %1819 = vmatpush1.msra.mxu0 0.0
      %1820 = vmatprep.subr.mxu0 0.0
      %1821 = vmatpush1.msra.mxu0 0.0
      %1822 = vmatprep.subr.mxu0 0.0
      %1823 = vmatpush1.msra.mxu0 0.0
      %1824 = vmatprep.subr.mxu0 0.0
      %1825 = vmatpush1.msra.mxu0 0.0
      %1826 = vmatprep.subr.mxu0 0.0
      %1827 = vmatpush1.msra.mxu0 0.0
      %1828 = vmatprep.subr.mxu0 0.0
      %1829 = vmatpush1.msra.mxu0 0.0
      %1830 = vmatprep.subr.mxu0 0.0
      %1831 = vmatpush1.msra.mxu0 0.0
      %1832 = vmatprep.subr.mxu0 0.0
      %1833 = vmatpush1.msra.mxu0 0.0
      %1834 = vmatprep.subr.mxu0 0.0
      %1835 = vmatpush1.msra.mxu0 0.0
      %1836 = vmatprep.subr.mxu0 0.0
      %1837 = vmatpush1.msra.mxu0 0.0
      %1838 = vmatprep.subr.mxu0 0.0
      %1839 = vmatpush1.msra.mxu0 0.0
      %1840 = vmatprep.subr.mxu0 0.0
      %1841 = vmatpush1.msra.mxu0 0.0
      %1842 = vmatprep.subr.mxu0 0.0
      %1843 = vmatpush1.msra.mxu0 0.0
      %1844 = vmatprep.subr.mxu0 0.0
      %1845 = vmatpush1.msra.mxu0 0.0
      %1846 = vmatprep.subr.mxu0 0.0
      %1847 = vmatpush1.msra.mxu0 0.0
      %1848 = vmatprep.subr.mxu0 0.0
      %1849 = vmatpush1.msra.mxu0 0.0
      %1850 = vmatprep.subr.mxu0 0.0
      %1851 = vmatpush1.msra.mxu0 0.0
      %1852 = vmatprep.mubr.f32.mxu0 0.0
      %1853 = vmatmul.mubr.f32.gmra.mrb[0].mxu0 %v1693
      %v1854 = vpop.f32.mrb[0].mxu0
      %v1855 = vadd.f32 0.0, %v1854
      %v1856 = vpop.f32.mrb[0].mxu0
      %1857 = vmatprep.mubr.f32.mxu0 0.0
      %1858 = vmatmul.mubr.f32.gmra.mrb[0].mxu0 %v1696
      %v1859 = vpop.f32.mrb[0].mxu0
      %v1860 = vadd.f32 0.0, %v1859
      %v1861 = vpop.f32.mrb[0].mxu0
      %1862 = vmatprep.mubr.f32.mxu0 0.0
      %1863 = vmatmul.mubr.f32.gmra.mrb[0].mxu0 %v1699
      %v1864 = vpop.f32.mrb[0].mxu0
      %v1865 = vadd.f32 0.0, %v1864
      %v1866 = vpop.f32.mrb[0].mxu0
      %1867 = vmatprep.mubr.f32.mxu0 0.0
      %1868 = vmatmul.mubr.f32.gmra.mrb[0].mxu0 %v1702
      %v1869 = vpop.f32.mrb[0].mxu0
      %v1870 = vadd.f32 0.0, %v1869
      %v1871 = vpop.f32.mrb[0].mxu0
      %1872 = vmatprep.mubr.f32.mxu0 0.0
      %1873 = vmatmul.mubr.f32.gmra.mrb[0].mxu0 %v1705
      %v1874 = vpop.f32.mrb[0].mxu0
      %v1875 = vadd.f32 0.0, %v1874
      %v1876 = vpop.f32.mrb[0].mxu0
      %1877 = vmatprep.mubr.f32.mxu0 0.0
      %1878 = vmatmul.mubr.f32.gmra.mrb[0].mxu0 %v1708
      %v1879 = vpop.f32.mrb[0].mxu0
      %v1880 = vadd.f32 0.0, %v1879
      %v1881 = vpop.f32.mrb[0].mxu0
      %1882 = vmatprep.mubr.f32.mxu0 0.0
      %1883 = vmatmul.mubr.f32.gmra.mrb[0].mxu0 %v1711
      %v1884 = vpop.f32.mrb[0].mxu0
      %v1885 = vadd.f32 0.0, %v1884
      %v1886 = vpop.f32.mrb[0].mxu0
      %1887 = vmatprep.mubr.f32.mxu0 0.0
      %1888 = vmatmul.mubr.f32.gmra.mrb[0].mxu0 %v1714
      %v1889 = vpop.f32.mrb[0].mxu0
      %v1890 = vadd.f32 0.0, %v1889
      %v1891 = vpop.f32.mrb[0].mxu0
      %1892 = vmatprep.mubr.f32.mxu0 0.0
      %1893 = vmatmul.mubr.f32.gmra.mrb[0].mxu0 %v1717
      %v1894 = vpop.f32.mrb[0].mxu0
      %v1895 = vadd.f32 0.0, %v1894
      %v1896 = vpop.f32.mrb[0].mxu0
      %1897 = vmatprep.mubr.f32.mxu0 0.0
      %1898 = vmatmul.mubr.f32.gmra.mrb[0].mxu0 %v1720
      %v1899 = vpop.f32.mrb[0].mxu0
      %v1900 = vadd.f32 0.0, %v1899
      %v1901 = vpop.f32.mrb[0].mxu0
      %1902 = vmatprep.mubr.f32.mxu0 0.0
      %1903 = vmatmul.mubr.f32.gmra.mrb[0].mxu0 %v1723
      %v1904 = vpop.f32.mrb[0].mxu0
      %v1905 = vadd.f32 0.0, %v1904
      %v1906 = vpop.f32.mrb[0].mxu0
      %1907 = vmatprep.mubr.f32.mxu0 0.0
      %1908 = vmatmul.mubr.f32.gmra.mrb[0].mxu0 %v1726
      %v1909 = vpop.f32.mrb[0].mxu0
      %v1910 = vadd.f32 0.0, %v1909
      %v1911 = vpop.f32.mrb[0].mxu0
      %1912 = vmatprep.mubr.f32.mxu0 0.0
      %1913 = vmatmul.mubr.f32.gmra.mrb[0].mxu0 %v1729
      %v1914 = vpop.f32.mrb[0].mxu0
      %v1915 = vadd.f32 0.0, %v1914
      %v1916 = vpop.f32.mrb[0].mxu0
      %1917 = vmatprep.mubr.f32.mxu0 0.0
      %1918 = vmatmul.mubr.f32.gmra.mrb[0].mxu0 %v1732
      %v1919 = vpop.f32.mrb[0].mxu0
      %v1920 = vadd.f32 0.0, %v1919
      %v1921 = vpop.f32.mrb[0].mxu0
      %1922 = vmatprep.mubr.f32.mxu0 0.0
      %1923 = vmatmul.mubr.f32.gmra.mrb[0].mxu0 %v1735
      %v1924 = vpop.f32.mrb[0].mxu0
      %v1925 = vadd.f32 0.0, %v1924
      %v1926 = vpop.f32.mrb[0].mxu0
      %1927 = vmatprep.mubr.f32.mxu0 0.0
      %1928 = vmatmul.mubr.f32.gmra.mrb[0].mxu0 %v1738
      %v1929 = vpop.f32.mrb[0].mxu0
      %v1930 = vadd.f32 0.0, %v1929
      %v1931 = vpop.f32.mrb[0].mxu0
      %1932 = vmatprep.mubr.f32.mxu0 0.0
      %1933 = vmatmul.mubr.f32.gmra.mrb[0].mxu0 %v1741
      %v1934 = vpop.f32.mrb[0].mxu0
      %v1935 = vadd.f32 0.0, %v1934
      %v1936 = vpop.f32.mrb[0].mxu0
      %1937 = vmatprep.mubr.f32.mxu0 0.0
      %1938 = vmatmul.mubr.f32.gmra.mrb[0].mxu0 %v1744
      %v1939 = vpop.f32.mrb[0].mxu0
      %v1940 = vadd.f32 0.0, %v1939
      %v1941 = vpop.f32.mrb[0].mxu0
      %1942 = vmatprep.mubr.f32.mxu0 0.0
      %1943 = vmatmul.mubr.f32.gmra.mrb[0].mxu0 %v1747
      %v1944 = vpop.f32.mrb[0].mxu0
      %v1945 = vadd.f32 0.0, %v1944
      %v1946 = vpop.f32.mrb[0].mxu0
      %1947 = vmatprep.mubr.f32.mxu0 0.0
      %1948 = vmatmul.mubr.f32.gmra.mrb[0].mxu0 %v1750
      %v1949 = vpop.f32.mrb[0].mxu0
      %v1950 = vadd.f32 0.0, %v1949
      %v1951 = vpop.f32.mrb[0].mxu0
      %1952 = vmatprep.mubr.f32.mxu0 0.0
      %1953 = vmatmul.mubr.f32.gmra.mrb[0].mxu0 %v1753
      %v1954 = vpop.f32.mrb[0].mxu0
      %v1955 = vadd.f32 0.0, %v1954
      %v1956 = vpop.f32.mrb[0].mxu0
      %1957 = vmatprep.mubr.f32.mxu0 0.0
      %1958 = vmatmul.mubr.f32.gmra.mrb[0].mxu0 %v1756
      %v1959 = vpop.f32.mrb[0].mxu0
      %v1960 = vadd.f32 0.0, %v1959
      %v1961 = vpop.f32.mrb[0].mxu0
      %1962 = vmatprep.mubr.f32.mxu0 0.0
      %1963 = vmatmul.mubr.f32.gmra.mrb[0].mxu0 %v1759
      %v1964 = vpop.f32.mrb[0].mxu0
      %v1965 = vadd.f32 0.0, %v1964
      %v1966 = vpop.f32.mrb[0].mxu0
      %1967 = vmatprep.mubr.f32.mxu0 0.0
      %1968 = vmatmul.mubr.f32.gmra.mrb[0].mxu0 %v1762
      %v1969 = vpop.f32.mrb[0].mxu0
      %v1970 = vadd.f32 0.0, %v1969
      %v1971 = vpop.f32.mrb[0].mxu0
      %1972 = vmatprep.mubr.f32.mxu0 0.0
      %1973 = vmatmul.mubr.f32.gmra.mrb[0].mxu0 %v1765
      %v1974 = vpop.f32.mrb[0].mxu0
      %v1975 = vadd.f32 0.0, %v1974
      %v1976 = vpop.f32.mrb[0].mxu0
      %1977 = vmatprep.mubr.f32.mxu0 0.0
      %1978 = vmatmul.mubr.f32.gmra.mrb[0].mxu0 %v1768
      %v1979 = vpop.f32.mrb[0].mxu0
      %v1980 = vadd.f32 0.0, %v1979
      %v1981 = vpop.f32.mrb[0].mxu0
      %1982 = vmatprep.mubr.f32.mxu0 0.0
      %1983 = vmatmul.mubr.f32.gmra.mrb[0].mxu0 %v1771
      %v1984 = vpop.f32.mrb[0].mxu0
      %v1985 = vadd.f32 0.0, %v1984
      %v1986 = vpop.f32.mrb[0].mxu0
      %1987 = vmatprep.mubr.f32.mxu0 0.0
      %1988 = vmatmul.mubr.f32.gmra.mrb[0].mxu0 %v1774
      %v1989 = vpop.f32.mrb[0].mxu0
      %v1990 = vadd.f32 0.0, %v1989
      %v1991 = vpop.f32.mrb[0].mxu0
      %1992 = vmatprep.mubr.f32.mxu0 0.0
      %1993 = vmatmul.mubr.f32.gmra.mrb[0].mxu0 %v1777
      %v1994 = vpop.f32.mrb[0].mxu0
      %v1995 = vadd.f32 0.0, %v1994
      %v1996 = vpop.f32.mrb[0].mxu0
      %1997 = vmatprep.mubr.f32.mxu0 0.0
      %1998 = vmatmul.mubr.f32.gmra.mrb[0].mxu0 %v1780
      %v1999 = vpop.f32.mrb[0].mxu0
      %v2000 = vadd.f32 0.0, %v1999
      %v2001 = vpop.f32.mrb[0].mxu0
      %2002 = vmatprep.mubr.f32.mxu0 0.0
      %2003 = vmatmul.mubr.f32.gmra.mrb[0].mxu0 %v1783
      %v2004 = vpop.f32.mrb[0].mxu0
      %v2005 = vadd.f32 0.0, %v2004
      %v2006 = vpop.f32.mrb[0].mxu0
      %2007 = vmatprep.mubr.f32.mxu0 0.0
      %2008 = vmatmul.mubr.f32.gmra.mrb[0].mxu0 %v1786
      %v2009 = vpop.f32.mrb[0].mxu0
      %v2010 = vadd.f32 0.0, %v2009
      %v2011 = vpop.f32.mrb[0].mxu0
      %2012 = vdwg.mxu0
      %v2013 = vadd.f32 %v1552, %v1855
      %v2014 = vadd.f32 %v1553, %v1860
      %v2015 = vadd.f32 %v1554, %v1865
      %v2016 = vadd.f32 %v1555, %v1870
      %v2017 = vadd.f32 %v1556, %v1875
      %v2018 = vadd.f32 %v1557, %v1880
      %v2019 = vadd.f32 %v1558, %v1885
      %v2020 = vadd.f32 %v1559, %v1890
      %v2021 = vadd.f32 %v1560, %v1895
      %v2022 = vadd.f32 %v1561, %v1900
      %v2023 = vadd.f32 %v1562, %v1905
      %v2024 = vadd.f32 %v1563, %v1910
      %v2025 = vadd.f32 %v1564, %v1915
      %v2026 = vadd.f32 %v1565, %v1920
      %v2027 = vadd.f32 %v1566, %v1925
      %v2028 = vadd.f32 %v1567, %v1930
      %v2029 = vadd.f32 %v1568, %v1935
      %v2030 = vadd.f32 %v1569, %v1940
      %v2031 = vadd.f32 %v1570, %v1945
      %v2032 = vadd.f32 %v1571, %v1950
      %v2033 = vadd.f32 %v1572, %v1955
      %v2034 = vadd.f32 %v1573, %v1960
      %v2035 = vadd.f32 %v1574, %v1965
      %v2036 = vadd.f32 %v1575, %v1970
      %v2037 = vadd.f32 %v1576, %v1975
      %v2038 = vadd.f32 %v1577, %v1980
      %v2039 = vadd.f32 %v1578, %v1985
      %v2040 = vadd.f32 %v1579, %v1990
      %v2041 = vadd.f32 %v1580, %v1995
      %v2042 = vadd.f32 %v1581, %v2000
      %v2043 = vadd.f32 %v1582, %v2005
      %v2044 = vadd.f32 %v1583, %v2010
      %s2045 = scalar_lea.vmem %s219, 32
      %v2046 = vld [vmem:[%s2045] sm:$0xff]
      %v2047 = vld [vmem:[%s2045 + $0x8] sm:$0xff]
      %v2048 = vsel %vm239, %v2046, 0.0
      %v2049 = vsel %vm240, %v2047, 0.0
      %v2051 = vsel %vm245, %v2048, 0
      %v2054 = vsel %vm245, %v2049, 0
      %2056 = vmatprep.subr.mxu0 0.0
      %2057 = vmatpush1.msra.mxu0 %v243
      %2058 = vmatprep.subr.mxu0 0.0
      %2059 = vmatpush1.msra.mxu0 %v244
      %2060 = vmatprep.subr.mxu0 0.0
      %2061 = vmatpush1.msra.mxu0 0.0
      %2062 = vmatprep.subr.mxu0 0.0
      %2063 = vmatpush1.msra.mxu0 0.0
      %2064 = vmatprep.subr.mxu0 0.0
      %2065 = vmatpush1.msra.mxu0 0.0
      %2066 = vmatprep.subr.mxu0 0.0
      %2067 = vmatpush1.msra.mxu0 0.0
      %2068 = vmatprep.subr.mxu0 0.0
      %2069 = vmatpush1.msra.mxu0 0.0
      %2070 = vmatprep.subr.mxu0 0.0
      %2071 = vmatpush1.msra.mxu0 0.0
      %2072 = vmatprep.subr.mxu0 0.0
      %2073 = vmatpush1.msra.mxu0 0.0
      %2074 = vmatprep.subr.mxu0 0.0
      %2075 = vmatpush1.msra.mxu0 0.0
      %2076 = vmatprep.subr.mxu0 0.0
      %2077 = vmatpush1.msra.mxu0 0.0
      %2078 = vmatprep.subr.mxu0 0.0
      %2079 = vmatpush1.msra.mxu0 0.0
      %2080 = vmatprep.subr.mxu0 0.0
      %2081 = vmatpush1.msra.mxu0 0.0
      %2082 = vmatprep.subr.mxu0 0.0
      %2083 = vmatpush1.msra.mxu0 0.0
      %2084 = vmatprep.subr.mxu0 0.0
      %2085 = vmatpush1.msra.mxu0 0.0
      %2086 = vmatprep.subr.mxu0 0.0
      %2087 = vmatpush1.msra.mxu0 0.0
      %2088 = vmatprep.subr.mxu0 0.0
      %2089 = vmatpush1.msra.mxu0 0.0
      %2090 = vmatprep.subr.mxu0 0.0
      %2091 = vmatpush1.msra.mxu0 0.0
      %2092 = vmatprep.subr.mxu0 0.0
      %2093 = vmatpush1.msra.mxu0 0.0
      %2094 = vmatprep.subr.mxu0 0.0
      %2095 = vmatpush1.msra.mxu0 0.0
      %2096 = vmatprep.subr.mxu0 0.0
      %2097 = vmatpush1.msra.mxu0 0.0
      %2098 = vmatprep.subr.mxu0 0.0
      %2099 = vmatpush1.msra.mxu0 0.0
      %2100 = vmatprep.subr.mxu0 0.0
      %2101 = vmatpush1.msra.mxu0 0.0
      %2102 = vmatprep.subr.mxu0 0.0
      %2103 = vmatpush1.msra.mxu0 0.0
      %2104 = vmatprep.subr.mxu0 0.0
      %2105 = vmatpush1.msra.mxu0 0.0
      %2106 = vmatprep.subr.mxu0 0.0
      %2107 = vmatpush1.msra.mxu0 0.0
      %2108 = vmatprep.subr.mxu0 0.0
      %2109 = vmatpush1.msra.mxu0 0.0
      %2110 = vmatprep.subr.mxu0 0.0
      %2111 = vmatpush1.msra.mxu0 0.0
      %2112 = vmatprep.subr.mxu0 0.0
      %2113 = vmatpush1.msra.mxu0 0.0
      %2114 = vmatprep.subr.mxu0 0.0
      %2115 = vmatpush1.msra.mxu0 0.0
      %2116 = vmatprep.subr.mxu0 0.0
      %2117 = vmatpush1.msra.mxu0 0.0
      %2118 = vmatprep.subr.mxu0 0.0
      %2119 = vmatpush1.msra.mxu0 0.0
      %2120 = vmatprep.mubr.f32.mxu0 0.0
      %2121 = vmatmul.mubr.f32.gmra.mrb[0].mxu0 %v2051
      %v2122 = vpop.f32.mrb[0].mxu0
      %v2123 = vadd.f32 0.0, %v2122
      %v2124 = vpop.f32.mrb[0].mxu0
      %2125 = vmatprep.mubr.f32.mxu0 0.0
      %2126 = vmatmul.mubr.f32.gmra.mrb[0].mxu0 %v2054
      %v2127 = vpop.f32.mrb[0].mxu0
      %v2128 = vadd.f32 0.0, %v2127
      %v2129 = vpop.f32.mrb[0].mxu0
      %2130 = vdwg.mxu0
      %s2131 = scalar_lea.vmem %s1, 1024
      %v2132 = vld [vmem:[%s2131] sm:$0xff]
      %v2133 = vld [vmem:[%s2131 + $0x8] sm:$0xff]
      %v2134 = vld [vmem:[%s2131 + $0x10] sm:$0xff]
      %v2135 = vld [vmem:[%s2131 + $0x18] sm:$0xff]
      %v2136 = vld [vmem:[%s2131 + $0x20] sm:$0xff]
      %v2137 = vld [vmem:[%s2131 + $0x28] sm:$0xff]
      %v2138 = vld [vmem:[%s2131 + $0x30] sm:$0xff]
      %v2139 = vld [vmem:[%s2131 + $0x38] sm:$0xff]
      %v2140 = vld [vmem:[%s2131 + $0x40] sm:$0xff]
      %v2141 = vld [vmem:[%s2131 + $0x48] sm:$0xff]
      %v2142 = vld [vmem:[%s2131 + $0x50] sm:$0xff]
      %v2143 = vld [vmem:[%s2131 + $0x58] sm:$0xff]
      %v2144 = vld [vmem:[%s2131 + $0x60] sm:$0xff]
      %v2145 = vld [vmem:[%s2131 + $0x68] sm:$0xff]
      %v2146 = vld [vmem:[%s2131 + $0x70] sm:$0xff]
      %v2147 = vld [vmem:[%s2131 + $0x78] sm:$0xff]
      %v2148 = vld [vmem:[%s2131 + $0x80] sm:$0xff]
      %v2149 = vld [vmem:[%s2131 + $0x88] sm:$0xff]
      %v2150 = vld [vmem:[%s2131 + $0x90] sm:$0xff]
      %v2151 = vld [vmem:[%s2131 + $0x98] sm:$0xff]
      %v2152 = vld [vmem:[%s2131 + $0xa0] sm:$0xff]
      %v2153 = vld [vmem:[%s2131 + $0xa8] sm:$0xff]
      %v2154 = vld [vmem:[%s2131 + $0xb0] sm:$0xff]
      %v2155 = vld [vmem:[%s2131 + $0xb8] sm:$0xff]
      %v2156 = vld [vmem:[%s2131 + $0xc0] sm:$0xff]
      %v2157 = vld [vmem:[%s2131 + $0xc8] sm:$0xff]
      %v2158 = vld [vmem:[%s2131 + $0xd0] sm:$0xff]
      %v2159 = vld [vmem:[%s2131 + $0xd8] sm:$0xff]
      %v2160 = vld [vmem:[%s2131 + $0xe0] sm:$0xff]
      %v2161 = vld [vmem:[%s2131 + $0xe8] sm:$0xff]
      %v2162 = vld [vmem:[%s2131 + $0xf0] sm:$0xff]
      %v2163 = vld [vmem:[%s2131 + $0xf8] sm:$0xff]
      %v2165 = vsel %vm245, %v2132, 0
      %v2168 = vsel %vm245, %v2133, 0
      %v2171 = vsel %vm245, %v2134, 0
      %v2174 = vsel %vm245, %v2135, 0
      %v2177 = vsel %vm245, %v2136, 0
      %v2180 = vsel %vm245, %v2137, 0
      %v2183 = vsel %vm245, %v2138, 0
      %v2186 = vsel %vm245, %v2139, 0
      %v2189 = vsel %vm245, %v2140, 0
      %v2192 = vsel %vm245, %v2141, 0
      %v2195 = vsel %vm245, %v2142, 0
      %v2198 = vsel %vm245, %v2143, 0
      %v2201 = vsel %vm245, %v2144, 0
      %v2204 = vsel %vm245, %v2145, 0
      %v2207 = vsel %vm245, %v2146, 0
      %v2210 = vsel %vm245, %v2147, 0
      %v2213 = vsel %vm245, %v2148, 0
      %v2216 = vsel %vm245, %v2149, 0
      %v2219 = vsel %vm245, %v2150, 0
      %v2222 = vsel %vm245, %v2151, 0
      %v2225 = vsel %vm245, %v2152, 0
      %v2228 = vsel %vm245, %v2153, 0
      %v2231 = vsel %vm245, %v2154, 0
      %v2234 = vsel %vm245, %v2155, 0
      %v2237 = vsel %vm245, %v2156, 0
      %v2240 = vsel %vm245, %v2157, 0
      %v2243 = vsel %vm245, %v2158, 0
      %v2246 = vsel %vm245, %v2159, 0
      %v2249 = vsel %vm245, %v2160, 0
      %v2252 = vsel %vm245, %v2161, 0
      %v2255 = vsel %vm245, %v2162, 0
      %v2258 = vsel %vm245, %v2163, 0
      %2260 = vmatprep.subr.mxu0 0.0
      %2261 = vmatpush1.msra.mxu0 %v2123
      %2262 = vmatprep.subr.mxu0 0.0
      %2263 = vmatpush1.msra.mxu0 %v2128
      %2264 = vmatprep.subr.mxu0 0.0
      %2265 = vmatpush1.msra.mxu0 0.0
      %2266 = vmatprep.subr.mxu0 0.0
      %2267 = vmatpush1.msra.mxu0 0.0
      %2268 = vmatprep.subr.mxu0 0.0
      %2269 = vmatpush1.msra.mxu0 0.0
      %2270 = vmatprep.subr.mxu0 0.0
      %2271 = vmatpush1.msra.mxu0 0.0
      %2272 = vmatprep.subr.mxu0 0.0
      %2273 = vmatpush1.msra.mxu0 0.0
      %2274 = vmatprep.subr.mxu0 0.0
      %2275 = vmatpush1.msra.mxu0 0.0
      %2276 = vmatprep.subr.mxu0 0.0
      %2277 = vmatpush1.msra.mxu0 0.0
      %2278 = vmatprep.subr.mxu0 0.0
      %2279 = vmatpush1.msra.mxu0 0.0
      %2280 = vmatprep.subr.mxu0 0.0
      %2281 = vmatpush1.msra.mxu0 0.0
      %2282 = vmatprep.subr.mxu0 0.0
      %2283 = vmatpush1.msra.mxu0 0.0
      %2284 = vmatprep.subr.mxu0 0.0
      %2285 = vmatpush1.msra.mxu0 0.0
      %2286 = vmatprep.subr.mxu0 0.0
      %2287 = vmatpush1.msra.mxu0 0.0
      %2288 = vmatprep.subr.mxu0 0.0
      %2289 = vmatpush1.msra.mxu0 0.0
      %2290 = vmatprep.subr.mxu0 0.0
      %2291 = vmatpush1.msra.mxu0 0.0
      %2292 = vmatprep.subr.mxu0 0.0
      %2293 = vmatpush1.msra.mxu0 0.0
      %2294 = vmatprep.subr.mxu0 0.0
      %2295 = vmatpush1.msra.mxu0 0.0
      %2296 = vmatprep.subr.mxu0 0.0
      %2297 = vmatpush1.msra.mxu0 0.0
      %2298 = vmatprep.subr.mxu0 0.0
      %2299 = vmatpush1.msra.mxu0 0.0
      %2300 = vmatprep.subr.mxu0 0.0
      %2301 = vmatpush1.msra.mxu0 0.0
      %2302 = vmatprep.subr.mxu0 0.0
      %2303 = vmatpush1.msra.mxu0 0.0
      %2304 = vmatprep.subr.mxu0 0.0
      %2305 = vmatpush1.msra.mxu0 0.0
      %2306 = vmatprep.subr.mxu0 0.0
      %2307 = vmatpush1.msra.mxu0 0.0
      %2308 = vmatprep.subr.mxu0 0.0
      %2309 = vmatpush1.msra.mxu0 0.0
      %2310 = vmatprep.subr.mxu0 0.0
      %2311 = vmatpush1.msra.mxu0 0.0
      %2312 = vmatprep.subr.mxu0 0.0
      %2313 = vmatpush1.msra.mxu0 0.0
      %2314 = vmatprep.subr.mxu0 0.0
      %2315 = vmatpush1.msra.mxu0 0.0
      %2316 = vmatprep.subr.mxu0 0.0
      %2317 = vmatpush1.msra.mxu0 0.0
      %2318 = vmatprep.subr.mxu0 0.0
      %2319 = vmatpush1.msra.mxu0 0.0
      %2320 = vmatprep.subr.mxu0 0.0
      %2321 = vmatpush1.msra.mxu0 0.0
      %2322 = vmatprep.subr.mxu0 0.0
      %2323 = vmatpush1.msra.mxu0 0.0
      %2324 = vmatprep.mubr.f32.mxu0 0.0
      %2325 = vmatmul.mubr.f32.gmra.mrb[0].mxu0 %v2165
      %v2326 = vpop.f32.mrb[0].mxu0
      %v2327 = vadd.f32 0.0, %v2326
      %v2328 = vpop.f32.mrb[0].mxu0
      %2329 = vmatprep.mubr.f32.mxu0 0.0
      %2330 = vmatmul.mubr.f32.gmra.mrb[0].mxu0 %v2168
      %v2331 = vpop.f32.mrb[0].mxu0
      %v2332 = vadd.f32 0.0, %v2331
      %v2333 = vpop.f32.mrb[0].mxu0
      %2334 = vmatprep.mubr.f32.mxu0 0.0
      %2335 = vmatmul.mubr.f32.gmra.mrb[0].mxu0 %v2171
      %v2336 = vpop.f32.mrb[0].mxu0
      %v2337 = vadd.f32 0.0, %v2336
      %v2338 = vpop.f32.mrb[0].mxu0
      %2339 = vmatprep.mubr.f32.mxu0 0.0
      %2340 = vmatmul.mubr.f32.gmra.mrb[0].mxu0 %v2174
      %v2341 = vpop.f32.mrb[0].mxu0
      %v2342 = vadd.f32 0.0, %v2341
      %v2343 = vpop.f32.mrb[0].mxu0
      %2344 = vmatprep.mubr.f32.mxu0 0.0
      %2345 = vmatmul.mubr.f32.gmra.mrb[0].mxu0 %v2177
      %v2346 = vpop.f32.mrb[0].mxu0
      %v2347 = vadd.f32 0.0, %v2346
      %v2348 = vpop.f32.mrb[0].mxu0
      %2349 = vmatprep.mubr.f32.mxu0 0.0
      %2350 = vmatmul.mubr.f32.gmra.mrb[0].mxu0 %v2180
      %v2351 = vpop.f32.mrb[0].mxu0
      %v2352 = vadd.f32 0.0, %v2351
      %v2353 = vpop.f32.mrb[0].mxu0
      %2354 = vmatprep.mubr.f32.mxu0 0.0
      %2355 = vmatmul.mubr.f32.gmra.mrb[0].mxu0 %v2183
      %v2356 = vpop.f32.mrb[0].mxu0
      %v2357 = vadd.f32 0.0, %v2356
      %v2358 = vpop.f32.mrb[0].mxu0
      %2359 = vmatprep.mubr.f32.mxu0 0.0
      %2360 = vmatmul.mubr.f32.gmra.mrb[0].mxu0 %v2186
      %v2361 = vpop.f32.mrb[0].mxu0
      %v2362 = vadd.f32 0.0, %v2361
      %v2363 = vpop.f32.mrb[0].mxu0
      %2364 = vmatprep.mubr.f32.mxu0 0.0
      %2365 = vmatmul.mubr.f32.gmra.mrb[0].mxu0 %v2189
      %v2366 = vpop.f32.mrb[0].mxu0
      %v2367 = vadd.f32 0.0, %v2366
      %v2368 = vpop.f32.mrb[0].mxu0
      %2369 = vmatprep.mubr.f32.mxu0 0.0
      %2370 = vmatmul.mubr.f32.gmra.mrb[0].mxu0 %v2192
      %v2371 = vpop.f32.mrb[0].mxu0
      %v2372 = vadd.f32 0.0, %v2371
      %v2373 = vpop.f32.mrb[0].mxu0
      %2374 = vmatprep.mubr.f32.mxu0 0.0
      %2375 = vmatmul.mubr.f32.gmra.mrb[0].mxu0 %v2195
      %v2376 = vpop.f32.mrb[0].mxu0
      %v2377 = vadd.f32 0.0, %v2376
      %v2378 = vpop.f32.mrb[0].mxu0
      %2379 = vmatprep.mubr.f32.mxu0 0.0
      %2380 = vmatmul.mubr.f32.gmra.mrb[0].mxu0 %v2198
      %v2381 = vpop.f32.mrb[0].mxu0
      %v2382 = vadd.f32 0.0, %v2381
      %v2383 = vpop.f32.mrb[0].mxu0
      %2384 = vmatprep.mubr.f32.mxu0 0.0
      %2385 = vmatmul.mubr.f32.gmra.mrb[0].mxu0 %v2201
      %v2386 = vpop.f32.mrb[0].mxu0
      %v2387 = vadd.f32 0.0, %v2386
      %v2388 = vpop.f32.mrb[0].mxu0
      %2389 = vmatprep.mubr.f32.mxu0 0.0
      %2390 = vmatmul.mubr.f32.gmra.mrb[0].mxu0 %v2204
      %v2391 = vpop.f32.mrb[0].mxu0
      %v2392 = vadd.f32 0.0, %v2391
      %v2393 = vpop.f32.mrb[0].mxu0
      %2394 = vmatprep.mubr.f32.mxu0 0.0
      %2395 = vmatmul.mubr.f32.gmra.mrb[0].mxu0 %v2207
      %v2396 = vpop.f32.mrb[0].mxu0
      %v2397 = vadd.f32 0.0, %v2396
      %v2398 = vpop.f32.mrb[0].mxu0
      %2399 = vmatprep.mubr.f32.mxu0 0.0
      %2400 = vmatmul.mubr.f32.gmra.mrb[0].mxu0 %v2210
      %v2401 = vpop.f32.mrb[0].mxu0
      %v2402 = vadd.f32 0.0, %v2401
      %v2403 = vpop.f32.mrb[0].mxu0
      %2404 = vmatprep.mubr.f32.mxu0 0.0
      %2405 = vmatmul.mubr.f32.gmra.mrb[0].mxu0 %v2213
      %v2406 = vpop.f32.mrb[0].mxu0
      %v2407 = vadd.f32 0.0, %v2406
      %v2408 = vpop.f32.mrb[0].mxu0
      %2409 = vmatprep.mubr.f32.mxu0 0.0
      %2410 = vmatmul.mubr.f32.gmra.mrb[0].mxu0 %v2216
      %v2411 = vpop.f32.mrb[0].mxu0
      %v2412 = vadd.f32 0.0, %v2411
      %v2413 = vpop.f32.mrb[0].mxu0
      %2414 = vmatprep.mubr.f32.mxu0 0.0
      %2415 = vmatmul.mubr.f32.gmra.mrb[0].mxu0 %v2219
      %v2416 = vpop.f32.mrb[0].mxu0
      %v2417 = vadd.f32 0.0, %v2416
      %v2418 = vpop.f32.mrb[0].mxu0
      %2419 = vmatprep.mubr.f32.mxu0 0.0
      %2420 = vmatmul.mubr.f32.gmra.mrb[0].mxu0 %v2222
      %v2421 = vpop.f32.mrb[0].mxu0
      %v2422 = vadd.f32 0.0, %v2421
      %v2423 = vpop.f32.mrb[0].mxu0
      %2424 = vmatprep.mubr.f32.mxu0 0.0
      %2425 = vmatmul.mubr.f32.gmra.mrb[0].mxu0 %v2225
      %v2426 = vpop.f32.mrb[0].mxu0
      %v2427 = vadd.f32 0.0, %v2426
      %v2428 = vpop.f32.mrb[0].mxu0
      %2429 = vmatprep.mubr.f32.mxu0 0.0
      %2430 = vmatmul.mubr.f32.gmra.mrb[0].mxu0 %v2228
      %v2431 = vpop.f32.mrb[0].mxu0
      %v2432 = vadd.f32 0.0, %v2431
      %v2433 = vpop.f32.mrb[0].mxu0
      %2434 = vmatprep.mubr.f32.mxu0 0.0
      %2435 = vmatmul.mubr.f32.gmra.mrb[0].mxu0 %v2231
      %v2436 = vpop.f32.mrb[0].mxu0
      %v2437 = vadd.f32 0.0, %v2436
      %v2438 = vpop.f32.mrb[0].mxu0
      %2439 = vmatprep.mubr.f32.mxu0 0.0
      %2440 = vmatmul.mubr.f32.gmra.mrb[0].mxu0 %v2234
      %v2441 = vpop.f32.mrb[0].mxu0
      %v2442 = vadd.f32 0.0, %v2441
      %v2443 = vpop.f32.mrb[0].mxu0
      %2444 = vmatprep.mubr.f32.mxu0 0.0
      %2445 = vmatmul.mubr.f32.gmra.mrb[0].mxu0 %v2237
      %v2446 = vpop.f32.mrb[0].mxu0
      %v2447 = vadd.f32 0.0, %v2446
      %v2448 = vpop.f32.mrb[0].mxu0
      %2449 = vmatprep.mubr.f32.mxu0 0.0
      %2450 = vmatmul.mubr.f32.gmra.mrb[0].mxu0 %v2240
      %v2451 = vpop.f32.mrb[0].mxu0
      %v2452 = vadd.f32 0.0, %v2451
      %v2453 = vpop.f32.mrb[0].mxu0
      %2454 = vmatprep.mubr.f32.mxu0 0.0
      %2455 = vmatmul.mubr.f32.gmra.mrb[0].mxu0 %v2243
      %v2456 = vpop.f32.mrb[0].mxu0
      %v2457 = vadd.f32 0.0, %v2456
      %v2458 = vpop.f32.mrb[0].mxu0
      %2459 = vmatprep.mubr.f32.mxu0 0.0
      %2460 = vmatmul.mubr.f32.gmra.mrb[0].mxu0 %v2246
      %v2461 = vpop.f32.mrb[0].mxu0
      %v2462 = vadd.f32 0.0, %v2461
      %v2463 = vpop.f32.mrb[0].mxu0
      %2464 = vmatprep.mubr.f32.mxu0 0.0
      %2465 = vmatmul.mubr.f32.gmra.mrb[0].mxu0 %v2249
      %v2466 = vpop.f32.mrb[0].mxu0
      %v2467 = vadd.f32 0.0, %v2466
      %v2468 = vpop.f32.mrb[0].mxu0
      %2469 = vmatprep.mubr.f32.mxu0 0.0
      %2470 = vmatmul.mubr.f32.gmra.mrb[0].mxu0 %v2252
      %v2471 = vpop.f32.mrb[0].mxu0
      %v2472 = vadd.f32 0.0, %v2471
      %v2473 = vpop.f32.mrb[0].mxu0
      %2474 = vmatprep.mubr.f32.mxu0 0.0
      %2475 = vmatmul.mubr.f32.gmra.mrb[0].mxu0 %v2255
      %v2476 = vpop.f32.mrb[0].mxu0
      %v2477 = vadd.f32 0.0, %v2476
      %v2478 = vpop.f32.mrb[0].mxu0
      %2479 = vmatprep.mubr.f32.mxu0 0.0
      %2480 = vmatmul.mubr.f32.gmra.mrb[0].mxu0 %v2258
      %v2481 = vpop.f32.mrb[0].mxu0
      %v2482 = vadd.f32 0.0, %v2481
      %v2483 = vpop.f32.mrb[0].mxu0
      %2484 = vdwg.mxu0
      %v2485 = vadd.f32 %v2013, %v2327
      %v2486 = vadd.f32 %v2014, %v2332
      %v2487 = vadd.f32 %v2015, %v2337
      %v2488 = vadd.f32 %v2016, %v2342
      %v2489 = vadd.f32 %v2017, %v2347
      %v2490 = vadd.f32 %v2018, %v2352
      %v2491 = vadd.f32 %v2019, %v2357
      %v2492 = vadd.f32 %v2020, %v2362
      %v2493 = vadd.f32 %v2021, %v2367
      %v2494 = vadd.f32 %v2022, %v2372
      %v2495 = vadd.f32 %v2023, %v2377
      %v2496 = vadd.f32 %v2024, %v2382
      %v2497 = vadd.f32 %v2025, %v2387
      %v2498 = vadd.f32 %v2026, %v2392
      %v2499 = vadd.f32 %v2027, %v2397
      %v2500 = vadd.f32 %v2028, %v2402
      %v2501 = vadd.f32 %v2029, %v2407
      %v2502 = vadd.f32 %v2030, %v2412
      %v2503 = vadd.f32 %v2031, %v2417
      %v2504 = vadd.f32 %v2032, %v2422
      %v2505 = vadd.f32 %v2033, %v2427
      %v2506 = vadd.f32 %v2034, %v2432
      %v2507 = vadd.f32 %v2035, %v2437
      %v2508 = vadd.f32 %v2036, %v2442
      %v2509 = vadd.f32 %v2037, %v2447
      %v2510 = vadd.f32 %v2038, %v2452
      %v2511 = vadd.f32 %v2039, %v2457
      %v2512 = vadd.f32 %v2040, %v2462
      %v2513 = vadd.f32 %v2041, %v2467
      %v2514 = vadd.f32 %v2042, %v2472
      %v2515 = vadd.f32 %v2043, %v2477
      %v2516 = vadd.f32 %v2044, %v2482
      %2517 = vmatprep.subr.mxu0 0.0
      %2518 = vmatpush1.msra.mxu0 %v360
      %2519 = vmatprep.subr.mxu0 0.0
      %2520 = vmatpush1.msra.mxu0 %v361
      %2521 = vmatprep.subr.mxu0 0.0
      %2522 = vmatpush1.msra.mxu0 0.0
      %2523 = vmatprep.subr.mxu0 0.0
      %2524 = vmatpush1.msra.mxu0 0.0
      %2525 = vmatprep.subr.mxu0 0.0
      %2526 = vmatpush1.msra.mxu0 0.0
      %2527 = vmatprep.subr.mxu0 0.0
      %2528 = vmatpush1.msra.mxu0 0.0
      %2529 = vmatprep.subr.mxu0 0.0
      %2530 = vmatpush1.msra.mxu0 0.0
      %2531 = vmatprep.subr.mxu0 0.0
      %2532 = vmatpush1.msra.mxu0 0.0
      %2533 = vmatprep.subr.mxu0 0.0
      %2534 = vmatpush1.msra.mxu0 0.0
      %2535 = vmatprep.subr.mxu0 0.0
      %2536 = vmatpush1.msra.mxu0 0.0
      %2537 = vmatprep.subr.mxu0 0.0
      %2538 = vmatpush1.msra.mxu0 0.0
      %2539 = vmatprep.subr.mxu0 0.0
      %2540 = vmatpush1.msra.mxu0 0.0
      %2541 = vmatprep.subr.mxu0 0.0
      %2542 = vmatpush1.msra.mxu0 0.0
      %2543 = vmatprep.subr.mxu0 0.0
      %2544 = vmatpush1.msra.mxu0 0.0
      %2545 = vmatprep.subr.mxu0 0.0
      %2546 = vmatpush1.msra.mxu0 0.0
      %2547 = vmatprep.subr.mxu0 0.0
      %2548 = vmatpush1.msra.mxu0 0.0
      %2549 = vmatprep.subr.mxu0 0.0
      %2550 = vmatpush1.msra.mxu0 0.0
      %2551 = vmatprep.subr.mxu0 0.0
      %2552 = vmatpush1.msra.mxu0 0.0
      %2553 = vmatprep.subr.mxu0 0.0
      %2554 = vmatpush1.msra.mxu0 0.0
      %2555 = vmatprep.subr.mxu0 0.0
      %2556 = vmatpush1.msra.mxu0 0.0
      %2557 = vmatprep.subr.mxu0 0.0
      %2558 = vmatpush1.msra.mxu0 0.0
      %2559 = vmatprep.subr.mxu0 0.0
      %2560 = vmatpush1.msra.mxu0 0.0
      %2561 = vmatprep.subr.mxu0 0.0
      %2562 = vmatpush1.msra.mxu0 0.0
      %2563 = vmatprep.subr.mxu0 0.0
      %2564 = vmatpush1.msra.mxu0 0.0
      %2565 = vmatprep.subr.mxu0 0.0
      %2566 = vmatpush1.msra.mxu0 0.0
      %2567 = vmatprep.subr.mxu0 0.0
      %2568 = vmatpush1.msra.mxu0 0.0
      %2569 = vmatprep.subr.mxu0 0.0
      %2570 = vmatpush1.msra.mxu0 0.0
      %2571 = vmatprep.subr.mxu0 0.0
      %2572 = vmatpush1.msra.mxu0 0.0
      %2573 = vmatprep.subr.mxu0 0.0
      %2574 = vmatpush1.msra.mxu0 0.0
      %2575 = vmatprep.subr.mxu0 0.0
      %2576 = vmatpush1.msra.mxu0 0.0
      %2577 = vmatprep.subr.mxu0 0.0
      %2578 = vmatpush1.msra.mxu0 0.0
      %2579 = vmatprep.subr.mxu0 0.0
      %2580 = vmatpush1.msra.mxu0 0.0
      %2581 = vmatprep.mubr.f32.mxu0 0.0
      %2582 = vmatmul.mubr.f32.gmra.mrb[0].mxu0 %v2051
      %v2583 = vpop.f32.mrb[0].mxu0
      %v2584 = vadd.f32 0.0, %v2583
      %v2585 = vpop.f32.mrb[0].mxu0
      %2586 = vmatprep.mubr.f32.mxu0 0.0
      %2587 = vmatmul.mubr.f32.gmra.mrb[0].mxu0 %v2054
      %v2588 = vpop.f32.mrb[0].mxu0
      %v2589 = vadd.f32 0.0, %v2588
      %v2590 = vpop.f32.mrb[0].mxu0
      %2591 = vdwg.mxu0
      %s2592 = scalar_lea.vmem %s1, 1280
      %v2593 = vld [vmem:[%s2592] sm:$0xff]
      %v2594 = vld [vmem:[%s2592 + $0x8] sm:$0xff]
      %v2595 = vld [vmem:[%s2592 + $0x10] sm:$0xff]
      %v2596 = vld [vmem:[%s2592 + $0x18] sm:$0xff]
      %v2597 = vld [vmem:[%s2592 + $0x20] sm:$0xff]
      %v2598 = vld [vmem:[%s2592 + $0x28] sm:$0xff]
      %v2599 = vld [vmem:[%s2592 + $0x30] sm:$0xff]
      %v2600 = vld [vmem:[%s2592 + $0x38] sm:$0xff]
      %v2601 = vld [vmem:[%s2592 + $0x40] sm:$0xff]
      %v2602 = vld [vmem:[%s2592 + $0x48] sm:$0xff]
      %v2603 = vld [vmem:[%s2592 + $0x50] sm:$0xff]
      %v2604 = vld [vmem:[%s2592 + $0x58] sm:$0xff]
      %v2605 = vld [vmem:[%s2592 + $0x60] sm:$0xff]
      %v2606 = vld [vmem:[%s2592 + $0x68] sm:$0xff]
      %v2607 = vld [vmem:[%s2592 + $0x70] sm:$0xff]
      %v2608 = vld [vmem:[%s2592 + $0x78] sm:$0xff]
      %v2609 = vld [vmem:[%s2592 + $0x80] sm:$0xff]
      %v2610 = vld [vmem:[%s2592 + $0x88] sm:$0xff]
      %v2611 = vld [vmem:[%s2592 + $0x90] sm:$0xff]
      %v2612 = vld [vmem:[%s2592 + $0x98] sm:$0xff]
      %v2613 = vld [vmem:[%s2592 + $0xa0] sm:$0xff]
      %v2614 = vld [vmem:[%s2592 + $0xa8] sm:$0xff]
      %v2615 = vld [vmem:[%s2592 + $0xb0] sm:$0xff]
      %v2616 = vld [vmem:[%s2592 + $0xb8] sm:$0xff]
      %v2617 = vld [vmem:[%s2592 + $0xc0] sm:$0xff]
      %v2618 = vld [vmem:[%s2592 + $0xc8] sm:$0xff]
      %v2619 = vld [vmem:[%s2592 + $0xd0] sm:$0xff]
      %v2620 = vld [vmem:[%s2592 + $0xd8] sm:$0xff]
      %v2621 = vld [vmem:[%s2592 + $0xe0] sm:$0xff]
      %v2622 = vld [vmem:[%s2592 + $0xe8] sm:$0xff]
      %v2623 = vld [vmem:[%s2592 + $0xf0] sm:$0xff]
      %v2624 = vld [vmem:[%s2592 + $0xf8] sm:$0xff]
      %v2626 = vsel %vm245, %v2593, 0
      %v2629 = vsel %vm245, %v2594, 0
      %v2632 = vsel %vm245, %v2595, 0
      %v2635 = vsel %vm245, %v2596, 0
      %v2638 = vsel %vm245, %v2597, 0
      %v2641 = vsel %vm245, %v2598, 0
      %v2644 = vsel %vm245, %v2599, 0
      %v2647 = vsel %vm245, %v2600, 0
      %v2650 = vsel %vm245, %v2601, 0
      %v2653 = vsel %vm245, %v2602, 0
      %v2656 = vsel %vm245, %v2603, 0
      %v2659 = vsel %vm245, %v2604, 0
      %v2662 = vsel %vm245, %v2605, 0
      %v2665 = vsel %vm245, %v2606, 0
      %v2668 = vsel %vm245, %v2607, 0
      %v2671 = vsel %vm245, %v2608, 0
      %v2674 = vsel %vm245, %v2609, 0
      %v2677 = vsel %vm245, %v2610, 0
      %v2680 = vsel %vm245, %v2611, 0
      %v2683 = vsel %vm245, %v2612, 0
      %v2686 = vsel %vm245, %v2613, 0
      %v2689 = vsel %vm245, %v2614, 0
      %v2692 = vsel %vm245, %v2615, 0
      %v2695 = vsel %vm245, %v2616, 0
      %v2698 = vsel %vm245, %v2617, 0
      %v2701 = vsel %vm245, %v2618, 0
      %v2704 = vsel %vm245, %v2619, 0
      %v2707 = vsel %vm245, %v2620, 0
      %v2710 = vsel %vm245, %v2621, 0
      %v2713 = vsel %vm245, %v2622, 0
      %v2716 = vsel %vm245, %v2623, 0
      %v2719 = vsel %vm245, %v2624, 0
      %2721 = vmatprep.subr.mxu0 0.0
      %2722 = vmatpush1.msra.mxu0 %v2584
      %2723 = vmatprep.subr.mxu0 0.0
      %2724 = vmatpush1.msra.mxu0 %v2589
      %2725 = vmatprep.subr.mxu0 0.0
      %2726 = vmatpush1.msra.mxu0 0.0
      %2727 = vmatprep.subr.mxu0 0.0
      %2728 = vmatpush1.msra.mxu0 0.0
      %2729 = vmatprep.subr.mxu0 0.0
      %2730 = vmatpush1.msra.mxu0 0.0
      %2731 = vmatprep.subr.mxu0 0.0
      %2732 = vmatpush1.msra.mxu0 0.0
      %2733 = vmatprep.subr.mxu0 0.0
      %2734 = vmatpush1.msra.mxu0 0.0
      %2735 = vmatprep.subr.mxu0 0.0
      %2736 = vmatpush1.msra.mxu0 0.0
      %2737 = vmatprep.subr.mxu0 0.0
      %2738 = vmatpush1.msra.mxu0 0.0
      %2739 = vmatprep.subr.mxu0 0.0
      %2740 = vmatpush1.msra.mxu0 0.0
      %2741 = vmatprep.subr.mxu0 0.0
      %2742 = vmatpush1.msra.mxu0 0.0
      %2743 = vmatprep.subr.mxu0 0.0
      %2744 = vmatpush1.msra.mxu0 0.0
      %2745 = vmatprep.subr.mxu0 0.0
      %2746 = vmatpush1.msra.mxu0 0.0
      %2747 = vmatprep.subr.mxu0 0.0
      %2748 = vmatpush1.msra.mxu0 0.0
      %2749 = vmatprep.subr.mxu0 0.0
      %2750 = vmatpush1.msra.mxu0 0.0
      %2751 = vmatprep.subr.mxu0 0.0
      %2752 = vmatpush1.msra.mxu0 0.0
      %2753 = vmatprep.subr.mxu0 0.0
      %2754 = vmatpush1.msra.mxu0 0.0
      %2755 = vmatprep.subr.mxu0 0.0
      %2756 = vmatpush1.msra.mxu0 0.0
      %2757 = vmatprep.subr.mxu0 0.0
      %2758 = vmatpush1.msra.mxu0 0.0
      %2759 = vmatprep.subr.mxu0 0.0
      %2760 = vmatpush1.msra.mxu0 0.0
      %2761 = vmatprep.subr.mxu0 0.0
      %2762 = vmatpush1.msra.mxu0 0.0
      %2763 = vmatprep.subr.mxu0 0.0
      %2764 = vmatpush1.msra.mxu0 0.0
      %2765 = vmatprep.subr.mxu0 0.0
      %2766 = vmatpush1.msra.mxu0 0.0
      %2767 = vmatprep.subr.mxu0 0.0
      %2768 = vmatpush1.msra.mxu0 0.0
      %2769 = vmatprep.subr.mxu0 0.0
      %2770 = vmatpush1.msra.mxu0 0.0
      %2771 = vmatprep.subr.mxu0 0.0
      %2772 = vmatpush1.msra.mxu0 0.0
      %2773 = vmatprep.subr.mxu0 0.0
      %2774 = vmatpush1.msra.mxu0 0.0
      %2775 = vmatprep.subr.mxu0 0.0
      %2776 = vmatpush1.msra.mxu0 0.0
      %2777 = vmatprep.subr.mxu0 0.0
      %2778 = vmatpush1.msra.mxu0 0.0
      %2779 = vmatprep.subr.mxu0 0.0
      %2780 = vmatpush1.msra.mxu0 0.0
      %2781 = vmatprep.subr.mxu0 0.0
      %2782 = vmatpush1.msra.mxu0 0.0
      %2783 = vmatprep.subr.mxu0 0.0
      %2784 = vmatpush1.msra.mxu0 0.0
      %2785 = vmatprep.mubr.f32.mxu0 0.0
      %2786 = vmatmul.mubr.f32.gmra.mrb[0].mxu0 %v2626
      %v2787 = vpop.f32.mrb[0].mxu0
      %v2788 = vadd.f32 0.0, %v2787
      %v2789 = vpop.f32.mrb[0].mxu0
      %2790 = vmatprep.mubr.f32.mxu0 0.0
      %2791 = vmatmul.mubr.f32.gmra.mrb[0].mxu0 %v2629
      %v2792 = vpop.f32.mrb[0].mxu0
      %v2793 = vadd.f32 0.0, %v2792
      %v2794 = vpop.f32.mrb[0].mxu0
      %2795 = vmatprep.mubr.f32.mxu0 0.0
      %2796 = vmatmul.mubr.f32.gmra.mrb[0].mxu0 %v2632
      %v2797 = vpop.f32.mrb[0].mxu0
      %v2798 = vadd.f32 0.0, %v2797
      %v2799 = vpop.f32.mrb[0].mxu0
      %2800 = vmatprep.mubr.f32.mxu0 0.0
      %2801 = vmatmul.mubr.f32.gmra.mrb[0].mxu0 %v2635
      %v2802 = vpop.f32.mrb[0].mxu0
      %v2803 = vadd.f32 0.0, %v2802
      %v2804 = vpop.f32.mrb[0].mxu0
      %2805 = vmatprep.mubr.f32.mxu0 0.0
      %2806 = vmatmul.mubr.f32.gmra.mrb[0].mxu0 %v2638
      %v2807 = vpop.f32.mrb[0].mxu0
      %v2808 = vadd.f32 0.0, %v2807
      %v2809 = vpop.f32.mrb[0].mxu0
      %2810 = vmatprep.mubr.f32.mxu0 0.0
      %2811 = vmatmul.mubr.f32.gmra.mrb[0].mxu0 %v2641
      %v2812 = vpop.f32.mrb[0].mxu0
      %v2813 = vadd.f32 0.0, %v2812
      %v2814 = vpop.f32.mrb[0].mxu0
      %2815 = vmatprep.mubr.f32.mxu0 0.0
      %2816 = vmatmul.mubr.f32.gmra.mrb[0].mxu0 %v2644
      %v2817 = vpop.f32.mrb[0].mxu0
      %v2818 = vadd.f32 0.0, %v2817
      %v2819 = vpop.f32.mrb[0].mxu0
      %2820 = vmatprep.mubr.f32.mxu0 0.0
      %2821 = vmatmul.mubr.f32.gmra.mrb[0].mxu0 %v2647
      %v2822 = vpop.f32.mrb[0].mxu0
      %v2823 = vadd.f32 0.0, %v2822
      %v2824 = vpop.f32.mrb[0].mxu0
      %2825 = vmatprep.mubr.f32.mxu0 0.0
      %2826 = vmatmul.mubr.f32.gmra.mrb[0].mxu0 %v2650
      %v2827 = vpop.f32.mrb[0].mxu0
      %v2828 = vadd.f32 0.0, %v2827
      %v2829 = vpop.f32.mrb[0].mxu0
      %2830 = vmatprep.mubr.f32.mxu0 0.0
      %2831 = vmatmul.mubr.f32.gmra.mrb[0].mxu0 %v2653
      %v2832 = vpop.f32.mrb[0].mxu0
      %v2833 = vadd.f32 0.0, %v2832
      %v2834 = vpop.f32.mrb[0].mxu0
      %2835 = vmatprep.mubr.f32.mxu0 0.0
      %2836 = vmatmul.mubr.f32.gmra.mrb[0].mxu0 %v2656
      %v2837 = vpop.f32.mrb[0].mxu0
      %v2838 = vadd.f32 0.0, %v2837
      %v2839 = vpop.f32.mrb[0].mxu0
      %2840 = vmatprep.mubr.f32.mxu0 0.0
      %2841 = vmatmul.mubr.f32.gmra.mrb[0].mxu0 %v2659
      %v2842 = vpop.f32.mrb[0].mxu0
      %v2843 = vadd.f32 0.0, %v2842
      %v2844 = vpop.f32.mrb[0].mxu0
      %2845 = vmatprep.mubr.f32.mxu0 0.0
      %2846 = vmatmul.mubr.f32.gmra.mrb[0].mxu0 %v2662
      %v2847 = vpop.f32.mrb[0].mxu0
      %v2848 = vadd.f32 0.0, %v2847
      %v2849 = vpop.f32.mrb[0].mxu0
      %2850 = vmatprep.mubr.f32.mxu0 0.0
      %2851 = vmatmul.mubr.f32.gmra.mrb[0].mxu0 %v2665
      %v2852 = vpop.f32.mrb[0].mxu0
      %v2853 = vadd.f32 0.0, %v2852
      %v2854 = vpop.f32.mrb[0].mxu0
      %2855 = vmatprep.mubr.f32.mxu0 0.0
      %2856 = vmatmul.mubr.f32.gmra.mrb[0].mxu0 %v2668
      %v2857 = vpop.f32.mrb[0].mxu0
      %v2858 = vadd.f32 0.0, %v2857
      %v2859 = vpop.f32.mrb[0].mxu0
      %2860 = vmatprep.mubr.f32.mxu0 0.0
      %2861 = vmatmul.mubr.f32.gmra.mrb[0].mxu0 %v2671
      %v2862 = vpop.f32.mrb[0].mxu0
      %v2863 = vadd.f32 0.0, %v2862
      %v2864 = vpop.f32.mrb[0].mxu0
      %2865 = vmatprep.mubr.f32.mxu0 0.0
      %2866 = vmatmul.mubr.f32.gmra.mrb[0].mxu0 %v2674
      %v2867 = vpop.f32.mrb[0].mxu0
      %v2868 = vadd.f32 0.0, %v2867
      %v2869 = vpop.f32.mrb[0].mxu0
      %2870 = vmatprep.mubr.f32.mxu0 0.0
      %2871 = vmatmul.mubr.f32.gmra.mrb[0].mxu0 %v2677
      %v2872 = vpop.f32.mrb[0].mxu0
      %v2873 = vadd.f32 0.0, %v2872
      %v2874 = vpop.f32.mrb[0].mxu0
      %2875 = vmatprep.mubr.f32.mxu0 0.0
      %2876 = vmatmul.mubr.f32.gmra.mrb[0].mxu0 %v2680
      %v2877 = vpop.f32.mrb[0].mxu0
      %v2878 = vadd.f32 0.0, %v2877
      %v2879 = vpop.f32.mrb[0].mxu0
      %2880 = vmatprep.mubr.f32.mxu0 0.0
      %2881 = vmatmul.mubr.f32.gmra.mrb[0].mxu0 %v2683
      %v2882 = vpop.f32.mrb[0].mxu0
      %v2883 = vadd.f32 0.0, %v2882
      %v2884 = vpop.f32.mrb[0].mxu0
      %2885 = vmatprep.mubr.f32.mxu0 0.0
      %2886 = vmatmul.mubr.f32.gmra.mrb[0].mxu0 %v2686
      %v2887 = vpop.f32.mrb[0].mxu0
      %v2888 = vadd.f32 0.0, %v2887
      %v2889 = vpop.f32.mrb[0].mxu0
      %2890 = vmatprep.mubr.f32.mxu0 0.0
      %2891 = vmatmul.mubr.f32.gmra.mrb[0].mxu0 %v2689
      %v2892 = vpop.f32.mrb[0].mxu0
      %v2893 = vadd.f32 0.0, %v2892
      %v2894 = vpop.f32.mrb[0].mxu0
      %2895 = vmatprep.mubr.f32.mxu0 0.0
      %2896 = vmatmul.mubr.f32.gmra.mrb[0].mxu0 %v2692
      %v2897 = vpop.f32.mrb[0].mxu0
      %v2898 = vadd.f32 0.0, %v2897
      %v2899 = vpop.f32.mrb[0].mxu0
      %2900 = vmatprep.mubr.f32.mxu0 0.0
      %2901 = vmatmul.mubr.f32.gmra.mrb[0].mxu0 %v2695
      %v2902 = vpop.f32.mrb[0].mxu0
      %v2903 = vadd.f32 0.0, %v2902
      %v2904 = vpop.f32.mrb[0].mxu0
      %2905 = vmatprep.mubr.f32.mxu0 0.0
      %2906 = vmatmul.mubr.f32.gmra.mrb[0].mxu0 %v2698
      %v2907 = vpop.f32.mrb[0].mxu0
      %v2908 = vadd.f32 0.0, %v2907
      %v2909 = vpop.f32.mrb[0].mxu0
      %2910 = vmatprep.mubr.f32.mxu0 0.0
      %2911 = vmatmul.mubr.f32.gmra.mrb[0].mxu0 %v2701
      %v2912 = vpop.f32.mrb[0].mxu0
      %v2913 = vadd.f32 0.0, %v2912
      %v2914 = vpop.f32.mrb[0].mxu0
      %2915 = vmatprep.mubr.f32.mxu0 0.0
      %2916 = vmatmul.mubr.f32.gmra.mrb[0].mxu0 %v2704
      %v2917 = vpop.f32.mrb[0].mxu0
      %v2918 = vadd.f32 0.0, %v2917
      %v2919 = vpop.f32.mrb[0].mxu0
      %2920 = vmatprep.mubr.f32.mxu0 0.0
      %2921 = vmatmul.mubr.f32.gmra.mrb[0].mxu0 %v2707
      %v2922 = vpop.f32.mrb[0].mxu0
      %v2923 = vadd.f32 0.0, %v2922
      %v2924 = vpop.f32.mrb[0].mxu0
      %2925 = vmatprep.mubr.f32.mxu0 0.0
      %2926 = vmatmul.mubr.f32.gmra.mrb[0].mxu0 %v2710
      %v2927 = vpop.f32.mrb[0].mxu0
      %v2928 = vadd.f32 0.0, %v2927
      %v2929 = vpop.f32.mrb[0].mxu0
      %2930 = vmatprep.mubr.f32.mxu0 0.0
      %2931 = vmatmul.mubr.f32.gmra.mrb[0].mxu0 %v2713
      %v2932 = vpop.f32.mrb[0].mxu0
      %v2933 = vadd.f32 0.0, %v2932
      %v2934 = vpop.f32.mrb[0].mxu0
      %2935 = vmatprep.mubr.f32.mxu0 0.0
      %2936 = vmatmul.mubr.f32.gmra.mrb[0].mxu0 %v2716
      %v2937 = vpop.f32.mrb[0].mxu0
      %v2938 = vadd.f32 0.0, %v2937
      %v2939 = vpop.f32.mrb[0].mxu0
      %2940 = vmatprep.mubr.f32.mxu0 0.0
      %2941 = vmatmul.mubr.f32.gmra.mrb[0].mxu0 %v2719
      %v2942 = vpop.f32.mrb[0].mxu0
      %v2943 = vadd.f32 0.0, %v2942
      %v2944 = vpop.f32.mrb[0].mxu0
      %2945 = vdwg.mxu0
      %v2946 = vadd.f32 %v2485, %v2788
      %v2947 = vadd.f32 %v2486, %v2793
      %v2948 = vadd.f32 %v2487, %v2798
      %v2949 = vadd.f32 %v2488, %v2803
      %v2950 = vadd.f32 %v2489, %v2808
      %v2951 = vadd.f32 %v2490, %v2813
      %v2952 = vadd.f32 %v2491, %v2818
      %v2953 = vadd.f32 %v2492, %v2823
      %v2954 = vadd.f32 %v2493, %v2828
      %v2955 = vadd.f32 %v2494, %v2833
      %v2956 = vadd.f32 %v2495, %v2838
      %v2957 = vadd.f32 %v2496, %v2843
      %v2958 = vadd.f32 %v2497, %v2848
      %v2959 = vadd.f32 %v2498, %v2853
      %v2960 = vadd.f32 %v2499, %v2858
      %v2961 = vadd.f32 %v2500, %v2863
      %v2962 = vadd.f32 %v2501, %v2868
      %v2963 = vadd.f32 %v2502, %v2873
      %v2964 = vadd.f32 %v2503, %v2878
      %v2965 = vadd.f32 %v2504, %v2883
      %v2966 = vadd.f32 %v2505, %v2888
      %v2967 = vadd.f32 %v2506, %v2893
      %v2968 = vadd.f32 %v2507, %v2898
      %v2969 = vadd.f32 %v2508, %v2903
      %v2970 = vadd.f32 %v2509, %v2908
      %v2971 = vadd.f32 %v2510, %v2913
      %v2972 = vadd.f32 %v2511, %v2918
      %v2973 = vadd.f32 %v2512, %v2923
      %v2974 = vadd.f32 %v2513, %v2928
      %v2975 = vadd.f32 %v2514, %v2933
      %v2976 = vadd.f32 %v2515, %v2938
      %v2977 = vadd.f32 %v2516, %v2943
      %s2978 = scalar_lea.vmem %s219, 48
      %v2979 = vld [vmem:[%s2978] sm:$0xff]
      %v2980 = vld [vmem:[%s2978 + $0x8] sm:$0xff]
      %v2981 = vsel %vm239, %v2979, 0.0
      %v2982 = vsel %vm240, %v2980, 0.0
      %v2984 = vsel %vm245, %v2981, 0
      %v2987 = vsel %vm245, %v2982, 0
      %2989 = vmatprep.subr.mxu0 0.0
      %2990 = vmatpush1.msra.mxu0 %v243
      %2991 = vmatprep.subr.mxu0 0.0
      %2992 = vmatpush1.msra.mxu0 %v244
      %2993 = vmatprep.subr.mxu0 0.0
      %2994 = vmatpush1.msra.mxu0 0.0
      %2995 = vmatprep.subr.mxu0 0.0
      %2996 = vmatpush1.msra.mxu0 0.0
      %2997 = vmatprep.subr.mxu0 0.0
      %2998 = vmatpush1.msra.mxu0 0.0
      %2999 = vmatprep.subr.mxu0 0.0
      %3000 = vmatpush1.msra.mxu0 0.0
      %3001 = vmatprep.subr.mxu0 0.0
      %3002 = vmatpush1.msra.mxu0 0.0
      %3003 = vmatprep.subr.mxu0 0.0
      %3004 = vmatpush1.msra.mxu0 0.0
      %3005 = vmatprep.subr.mxu0 0.0
      %3006 = vmatpush1.msra.mxu0 0.0
      %3007 = vmatprep.subr.mxu0 0.0
      %3008 = vmatpush1.msra.mxu0 0.0
      %3009 = vmatprep.subr.mxu0 0.0
      %3010 = vmatpush1.msra.mxu0 0.0
      %3011 = vmatprep.subr.mxu0 0.0
      %3012 = vmatpush1.msra.mxu0 0.0
      %3013 = vmatprep.subr.mxu0 0.0
      %3014 = vmatpush1.msra.mxu0 0.0
      %3015 = vmatprep.subr.mxu0 0.0
      %3016 = vmatpush1.msra.mxu0 0.0
      %3017 = vmatprep.subr.mxu0 0.0
      %3018 = vmatpush1.msra.mxu0 0.0
      %3019 = vmatprep.subr.mxu0 0.0
      %3020 = vmatpush1.msra.mxu0 0.0
      %3021 = vmatprep.subr.mxu0 0.0
      %3022 = vmatpush1.msra.mxu0 0.0
      %3023 = vmatprep.subr.mxu0 0.0
      %3024 = vmatpush1.msra.mxu0 0.0
      %3025 = vmatprep.subr.mxu0 0.0
      %3026 = vmatpush1.msra.mxu0 0.0
      %3027 = vmatprep.subr.mxu0 0.0
      %3028 = vmatpush1.msra.mxu0 0.0
      %3029 = vmatprep.subr.mxu0 0.0
      %3030 = vmatpush1.msra.mxu0 0.0
      %3031 = vmatprep.subr.mxu0 0.0
      %3032 = vmatpush1.msra.mxu0 0.0
      %3033 = vmatprep.subr.mxu0 0.0
      %3034 = vmatpush1.msra.mxu0 0.0
      %3035 = vmatprep.subr.mxu0 0.0
      %3036 = vmatpush1.msra.mxu0 0.0
      %3037 = vmatprep.subr.mxu0 0.0
      %3038 = vmatpush1.msra.mxu0 0.0
      %3039 = vmatprep.subr.mxu0 0.0
      %3040 = vmatpush1.msra.mxu0 0.0
      %3041 = vmatprep.subr.mxu0 0.0
      %3042 = vmatpush1.msra.mxu0 0.0
      %3043 = vmatprep.subr.mxu0 0.0
      %3044 = vmatpush1.msra.mxu0 0.0
      %3045 = vmatprep.subr.mxu0 0.0
      %3046 = vmatpush1.msra.mxu0 0.0
      %3047 = vmatprep.subr.mxu0 0.0
      %3048 = vmatpush1.msra.mxu0 0.0
      %3049 = vmatprep.subr.mxu0 0.0
      %3050 = vmatpush1.msra.mxu0 0.0
      %3051 = vmatprep.subr.mxu0 0.0
      %3052 = vmatpush1.msra.mxu0 0.0
      %3053 = vmatprep.mubr.f32.mxu0 0.0
      %3054 = vmatmul.mubr.f32.gmra.mrb[0].mxu0 %v2984
      %v3055 = vpop.f32.mrb[0].mxu0
      %v3056 = vadd.f32 0.0, %v3055
      %v3057 = vpop.f32.mrb[0].mxu0
      %3058 = vmatprep.mubr.f32.mxu0 0.0
      %3059 = vmatmul.mubr.f32.gmra.mrb[0].mxu0 %v2987
      %v3060 = vpop.f32.mrb[0].mxu0
      %v3061 = vadd.f32 0.0, %v3060
      %v3062 = vpop.f32.mrb[0].mxu0
      %3063 = vdwg.mxu0
      %s3064 = scalar_lea.vmem %s1, 1536
      %v3065 = vld [vmem:[%s3064] sm:$0xff]
      %v3066 = vld [vmem:[%s3064 + $0x8] sm:$0xff]
      %v3067 = vld [vmem:[%s3064 + $0x10] sm:$0xff]
      %v3068 = vld [vmem:[%s3064 + $0x18] sm:$0xff]
      %v3069 = vld [vmem:[%s3064 + $0x20] sm:$0xff]
      %v3070 = vld [vmem:[%s3064 + $0x28] sm:$0xff]
      %v3071 = vld [vmem:[%s3064 + $0x30] sm:$0xff]
      %v3072 = vld [vmem:[%s3064 + $0x38] sm:$0xff]
      %v3073 = vld [vmem:[%s3064 + $0x40] sm:$0xff]
      %v3074 = vld [vmem:[%s3064 + $0x48] sm:$0xff]
      %v3075 = vld [vmem:[%s3064 + $0x50] sm:$0xff]
      %v3076 = vld [vmem:[%s3064 + $0x58] sm:$0xff]
      %v3077 = vld [vmem:[%s3064 + $0x60] sm:$0xff]
      %v3078 = vld [vmem:[%s3064 + $0x68] sm:$0xff]
      %v3079 = vld [vmem:[%s3064 + $0x70] sm:$0xff]
      %v3080 = vld [vmem:[%s3064 + $0x78] sm:$0xff]
      %v3081 = vld [vmem:[%s3064 + $0x80] sm:$0xff]
      %v3082 = vld [vmem:[%s3064 + $0x88] sm:$0xff]
      %v3083 = vld [vmem:[%s3064 + $0x90] sm:$0xff]
      %v3084 = vld [vmem:[%s3064 + $0x98] sm:$0xff]
      %v3085 = vld [vmem:[%s3064 + $0xa0] sm:$0xff]
      %v3086 = vld [vmem:[%s3064 + $0xa8] sm:$0xff]
      %v3087 = vld [vmem:[%s3064 + $0xb0] sm:$0xff]
      %v3088 = vld [vmem:[%s3064 + $0xb8] sm:$0xff]
      %v3089 = vld [vmem:[%s3064 + $0xc0] sm:$0xff]
      %v3090 = vld [vmem:[%s3064 + $0xc8] sm:$0xff]
      %v3091 = vld [vmem:[%s3064 + $0xd0] sm:$0xff]
      %v3092 = vld [vmem:[%s3064 + $0xd8] sm:$0xff]
      %v3093 = vld [vmem:[%s3064 + $0xe0] sm:$0xff]
      %v3094 = vld [vmem:[%s3064 + $0xe8] sm:$0xff]
      %v3095 = vld [vmem:[%s3064 + $0xf0] sm:$0xff]
      %v3096 = vld [vmem:[%s3064 + $0xf8] sm:$0xff]
      %v3098 = vsel %vm245, %v3065, 0
      %v3101 = vsel %vm245, %v3066, 0
      %v3104 = vsel %vm245, %v3067, 0
      %v3107 = vsel %vm245, %v3068, 0
      %v3110 = vsel %vm245, %v3069, 0
      %v3113 = vsel %vm245, %v3070, 0
      %v3116 = vsel %vm245, %v3071, 0
      %v3119 = vsel %vm245, %v3072, 0
      %v3122 = vsel %vm245, %v3073, 0
      %v3125 = vsel %vm245, %v3074, 0
      %v3128 = vsel %vm245, %v3075, 0
      %v3131 = vsel %vm245, %v3076, 0
      %v3134 = vsel %vm245, %v3077, 0
      %v3137 = vsel %vm245, %v3078, 0
      %v3140 = vsel %vm245, %v3079, 0
      %v3143 = vsel %vm245, %v3080, 0
      %v3146 = vsel %vm245, %v3081, 0
      %v3149 = vsel %vm245, %v3082, 0
      %v3152 = vsel %vm245, %v3083, 0
      %v3155 = vsel %vm245, %v3084, 0
      %v3158 = vsel %vm245, %v3085, 0
      %v3161 = vsel %vm245, %v3086, 0
      %v3164 = vsel %vm245, %v3087, 0
      %v3167 = vsel %vm245, %v3088, 0
      %v3170 = vsel %vm245, %v3089, 0
      %v3173 = vsel %vm245, %v3090, 0
      %v3176 = vsel %vm245, %v3091, 0
      %v3179 = vsel %vm245, %v3092, 0
      %v3182 = vsel %vm245, %v3093, 0
      %v3185 = vsel %vm245, %v3094, 0
      %v3188 = vsel %vm245, %v3095, 0
      %v3191 = vsel %vm245, %v3096, 0
      %3193 = vmatprep.subr.mxu0 0.0
      %3194 = vmatpush1.msra.mxu0 %v3056
      %3195 = vmatprep.subr.mxu0 0.0
      %3196 = vmatpush1.msra.mxu0 %v3061
      %3197 = vmatprep.subr.mxu0 0.0
      %3198 = vmatpush1.msra.mxu0 0.0
      %3199 = vmatprep.subr.mxu0 0.0
      %3200 = vmatpush1.msra.mxu0 0.0
      %3201 = vmatprep.subr.mxu0 0.0
      %3202 = vmatpush1.msra.mxu0 0.0
      %3203 = vmatprep.subr.mxu0 0.0
      %3204 = vmatpush1.msra.mxu0 0.0
      %3205 = vmatprep.subr.mxu0 0.0
      %3206 = vmatpush1.msra.mxu0 0.0
      %3207 = vmatprep.subr.mxu0 0.0
      %3208 = vmatpush1.msra.mxu0 0.0
      %3209 = vmatprep.subr.mxu0 0.0
      %3210 = vmatpush1.msra.mxu0 0.0
      %3211 = vmatprep.subr.mxu0 0.0
      %3212 = vmatpush1.msra.mxu0 0.0
      %3213 = vmatprep.subr.mxu0 0.0
      %3214 = vmatpush1.msra.mxu0 0.0
      %3215 = vmatprep.subr.mxu0 0.0
      %3216 = vmatpush1.msra.mxu0 0.0
      %3217 = vmatprep.subr.mxu0 0.0
      %3218 = vmatpush1.msra.mxu0 0.0
      %3219 = vmatprep.subr.mxu0 0.0
      %3220 = vmatpush1.msra.mxu0 0.0
      %3221 = vmatprep.subr.mxu0 0.0
      %3222 = vmatpush1.msra.mxu0 0.0
      %3223 = vmatprep.subr.mxu0 0.0
      %3224 = vmatpush1.msra.mxu0 0.0
      %3225 = vmatprep.subr.mxu0 0.0
      %3226 = vmatpush1.msra.mxu0 0.0
      %3227 = vmatprep.subr.mxu0 0.0
      %3228 = vmatpush1.msra.mxu0 0.0
      %3229 = vmatprep.subr.mxu0 0.0
      %3230 = vmatpush1.msra.mxu0 0.0
      %3231 = vmatprep.subr.mxu0 0.0
      %3232 = vmatpush1.msra.mxu0 0.0
      %3233 = vmatprep.subr.mxu0 0.0
      %3234 = vmatpush1.msra.mxu0 0.0
      %3235 = vmatprep.subr.mxu0 0.0
      %3236 = vmatpush1.msra.mxu0 0.0
      %3237 = vmatprep.subr.mxu0 0.0
      %3238 = vmatpush1.msra.mxu0 0.0
      %3239 = vmatprep.subr.mxu0 0.0
      %3240 = vmatpush1.msra.mxu0 0.0
      %3241 = vmatprep.subr.mxu0 0.0
      %3242 = vmatpush1.msra.mxu0 0.0
      %3243 = vmatprep.subr.mxu0 0.0
      %3244 = vmatpush1.msra.mxu0 0.0
      %3245 = vmatprep.subr.mxu0 0.0
      %3246 = vmatpush1.msra.mxu0 0.0
      %3247 = vmatprep.subr.mxu0 0.0
      %3248 = vmatpush1.msra.mxu0 0.0
      %3249 = vmatprep.subr.mxu0 0.0
      %3250 = vmatpush1.msra.mxu0 0.0
      %3251 = vmatprep.subr.mxu0 0.0
      %3252 = vmatpush1.msra.mxu0 0.0
      %3253 = vmatprep.subr.mxu0 0.0
      %3254 = vmatpush1.msra.mxu0 0.0
      %3255 = vmatprep.subr.mxu0 0.0
      %3256 = vmatpush1.msra.mxu0 0.0
      %3257 = vmatprep.mubr.f32.mxu0 0.0
      %3258 = vmatmul.mubr.f32.gmra.mrb[0].mxu0 %v3098
      %v3259 = vpop.f32.mrb[0].mxu0
      %v3260 = vadd.f32 0.0, %v3259
      %v3261 = vpop.f32.mrb[0].mxu0
      %3262 = vmatprep.mubr.f32.mxu0 0.0
      %3263 = vmatmul.mubr.f32.gmra.mrb[0].mxu0 %v3101
      %v3264 = vpop.f32.mrb[0].mxu0
      %v3265 = vadd.f32 0.0, %v3264
      %v3266 = vpop.f32.mrb[0].mxu0
      %3267 = vmatprep.mubr.f32.mxu0 0.0
      %3268 = vmatmul.mubr.f32.gmra.mrb[0].mxu0 %v3104
      %v3269 = vpop.f32.mrb[0].mxu0
      %v3270 = vadd.f32 0.0, %v3269
      %v3271 = vpop.f32.mrb[0].mxu0
      %3272 = vmatprep.mubr.f32.mxu0 0.0
      %3273 = vmatmul.mubr.f32.gmra.mrb[0].mxu0 %v3107
      %v3274 = vpop.f32.mrb[0].mxu0
      %v3275 = vadd.f32 0.0, %v3274
      %v3276 = vpop.f32.mrb[0].mxu0
      %3277 = vmatprep.mubr.f32.mxu0 0.0
      %3278 = vmatmul.mubr.f32.gmra.mrb[0].mxu0 %v3110
      %v3279 = vpop.f32.mrb[0].mxu0
      %v3280 = vadd.f32 0.0, %v3279
      %v3281 = vpop.f32.mrb[0].mxu0
      %3282 = vmatprep.mubr.f32.mxu0 0.0
      %3283 = vmatmul.mubr.f32.gmra.mrb[0].mxu0 %v3113
      %v3284 = vpop.f32.mrb[0].mxu0
      %v3285 = vadd.f32 0.0, %v3284
      %v3286 = vpop.f32.mrb[0].mxu0
      %3287 = vmatprep.mubr.f32.mxu0 0.0
      %3288 = vmatmul.mubr.f32.gmra.mrb[0].mxu0 %v3116
      %v3289 = vpop.f32.mrb[0].mxu0
      %v3290 = vadd.f32 0.0, %v3289
      %v3291 = vpop.f32.mrb[0].mxu0
      %3292 = vmatprep.mubr.f32.mxu0 0.0
      %3293 = vmatmul.mubr.f32.gmra.mrb[0].mxu0 %v3119
      %v3294 = vpop.f32.mrb[0].mxu0
      %v3295 = vadd.f32 0.0, %v3294
      %v3296 = vpop.f32.mrb[0].mxu0
      %3297 = vmatprep.mubr.f32.mxu0 0.0
      %3298 = vmatmul.mubr.f32.gmra.mrb[0].mxu0 %v3122
      %v3299 = vpop.f32.mrb[0].mxu0
      %v3300 = vadd.f32 0.0, %v3299
      %v3301 = vpop.f32.mrb[0].mxu0
      %3302 = vmatprep.mubr.f32.mxu0 0.0
      %3303 = vmatmul.mubr.f32.gmra.mrb[0].mxu0 %v3125
      %v3304 = vpop.f32.mrb[0].mxu0
      %v3305 = vadd.f32 0.0, %v3304
      %v3306 = vpop.f32.mrb[0].mxu0
      %3307 = vmatprep.mubr.f32.mxu0 0.0
      %3308 = vmatmul.mubr.f32.gmra.mrb[0].mxu0 %v3128
      %v3309 = vpop.f32.mrb[0].mxu0
      %v3310 = vadd.f32 0.0, %v3309
      %v3311 = vpop.f32.mrb[0].mxu0
      %3312 = vmatprep.mubr.f32.mxu0 0.0
      %3313 = vmatmul.mubr.f32.gmra.mrb[0].mxu0 %v3131
      %v3314 = vpop.f32.mrb[0].mxu0
      %v3315 = vadd.f32 0.0, %v3314
      %v3316 = vpop.f32.mrb[0].mxu0
      %3317 = vmatprep.mubr.f32.mxu0 0.0
      %3318 = vmatmul.mubr.f32.gmra.mrb[0].mxu0 %v3134
      %v3319 = vpop.f32.mrb[0].mxu0
      %v3320 = vadd.f32 0.0, %v3319
      %v3321 = vpop.f32.mrb[0].mxu0
      %3322 = vmatprep.mubr.f32.mxu0 0.0
      %3323 = vmatmul.mubr.f32.gmra.mrb[0].mxu0 %v3137
      %v3324 = vpop.f32.mrb[0].mxu0
      %v3325 = vadd.f32 0.0, %v3324
      %v3326 = vpop.f32.mrb[0].mxu0
      %3327 = vmatprep.mubr.f32.mxu0 0.0
      %3328 = vmatmul.mubr.f32.gmra.mrb[0].mxu0 %v3140
      %v3329 = vpop.f32.mrb[0].mxu0
      %v3330 = vadd.f32 0.0, %v3329
      %v3331 = vpop.f32.mrb[0].mxu0
      %3332 = vmatprep.mubr.f32.mxu0 0.0
      %3333 = vmatmul.mubr.f32.gmra.mrb[0].mxu0 %v3143
      %v3334 = vpop.f32.mrb[0].mxu0
      %v3335 = vadd.f32 0.0, %v3334
      %v3336 = vpop.f32.mrb[0].mxu0
      %3337 = vmatprep.mubr.f32.mxu0 0.0
      %3338 = vmatmul.mubr.f32.gmra.mrb[0].mxu0 %v3146
      %v3339 = vpop.f32.mrb[0].mxu0
      %v3340 = vadd.f32 0.0, %v3339
      %v3341 = vpop.f32.mrb[0].mxu0
      %3342 = vmatprep.mubr.f32.mxu0 0.0
      %3343 = vmatmul.mubr.f32.gmra.mrb[0].mxu0 %v3149
      %v3344 = vpop.f32.mrb[0].mxu0
      %v3345 = vadd.f32 0.0, %v3344
      %v3346 = vpop.f32.mrb[0].mxu0
      %3347 = vmatprep.mubr.f32.mxu0 0.0
      %3348 = vmatmul.mubr.f32.gmra.mrb[0].mxu0 %v3152
      %v3349 = vpop.f32.mrb[0].mxu0
      %v3350 = vadd.f32 0.0, %v3349
      %v3351 = vpop.f32.mrb[0].mxu0
      %3352 = vmatprep.mubr.f32.mxu0 0.0
      %3353 = vmatmul.mubr.f32.gmra.mrb[0].mxu0 %v3155
      %v3354 = vpop.f32.mrb[0].mxu0
      %v3355 = vadd.f32 0.0, %v3354
      %v3356 = vpop.f32.mrb[0].mxu0
      %3357 = vmatprep.mubr.f32.mxu0 0.0
      %3358 = vmatmul.mubr.f32.gmra.mrb[0].mxu0 %v3158
      %v3359 = vpop.f32.mrb[0].mxu0
      %v3360 = vadd.f32 0.0, %v3359
      %v3361 = vpop.f32.mrb[0].mxu0
      %3362 = vmatprep.mubr.f32.mxu0 0.0
      %3363 = vmatmul.mubr.f32.gmra.mrb[0].mxu0 %v3161
      %v3364 = vpop.f32.mrb[0].mxu0
      %v3365 = vadd.f32 0.0, %v3364
      %v3366 = vpop.f32.mrb[0].mxu0
      %3367 = vmatprep.mubr.f32.mxu0 0.0
      %3368 = vmatmul.mubr.f32.gmra.mrb[0].mxu0 %v3164
      %v3369 = vpop.f32.mrb[0].mxu0
      %v3370 = vadd.f32 0.0, %v3369
      %v3371 = vpop.f32.mrb[0].mxu0
      %3372 = vmatprep.mubr.f32.mxu0 0.0
      %3373 = vmatmul.mubr.f32.gmra.mrb[0].mxu0 %v3167
      %v3374 = vpop.f32.mrb[0].mxu0
      %v3375 = vadd.f32 0.0, %v3374
      %v3376 = vpop.f32.mrb[0].mxu0
      %3377 = vmatprep.mubr.f32.mxu0 0.0
      %3378 = vmatmul.mubr.f32.gmra.mrb[0].mxu0 %v3170
      %v3379 = vpop.f32.mrb[0].mxu0
      %v3380 = vadd.f32 0.0, %v3379
      %v3381 = vpop.f32.mrb[0].mxu0
      %3382 = vmatprep.mubr.f32.mxu0 0.0
      %3383 = vmatmul.mubr.f32.gmra.mrb[0].mxu0 %v3173
      %v3384 = vpop.f32.mrb[0].mxu0
      %v3385 = vadd.f32 0.0, %v3384
      %v3386 = vpop.f32.mrb[0].mxu0
      %3387 = vmatprep.mubr.f32.mxu0 0.0
      %3388 = vmatmul.mubr.f32.gmra.mrb[0].mxu0 %v3176
      %v3389 = vpop.f32.mrb[0].mxu0
      %v3390 = vadd.f32 0.0, %v3389
      %v3391 = vpop.f32.mrb[0].mxu0
      %3392 = vmatprep.mubr.f32.mxu0 0.0
      %3393 = vmatmul.mubr.f32.gmra.mrb[0].mxu0 %v3179
      %v3394 = vpop.f32.mrb[0].mxu0
      %v3395 = vadd.f32 0.0, %v3394
      %v3396 = vpop.f32.mrb[0].mxu0
      %3397 = vmatprep.mubr.f32.mxu0 0.0
      %3398 = vmatmul.mubr.f32.gmra.mrb[0].mxu0 %v3182
      %v3399 = vpop.f32.mrb[0].mxu0
      %v3400 = vadd.f32 0.0, %v3399
      %v3401 = vpop.f32.mrb[0].mxu0
      %3402 = vmatprep.mubr.f32.mxu0 0.0
      %3403 = vmatmul.mubr.f32.gmra.mrb[0].mxu0 %v3185
      %v3404 = vpop.f32.mrb[0].mxu0
      %v3405 = vadd.f32 0.0, %v3404
      %v3406 = vpop.f32.mrb[0].mxu0
      %3407 = vmatprep.mubr.f32.mxu0 0.0
      %3408 = vmatmul.mubr.f32.gmra.mrb[0].mxu0 %v3188
      %v3409 = vpop.f32.mrb[0].mxu0
      %v3410 = vadd.f32 0.0, %v3409
      %v3411 = vpop.f32.mrb[0].mxu0
      %3412 = vmatprep.mubr.f32.mxu0 0.0
      %3413 = vmatmul.mubr.f32.gmra.mrb[0].mxu0 %v3191
      %v3414 = vpop.f32.mrb[0].mxu0
      %v3415 = vadd.f32 0.0, %v3414
      %v3416 = vpop.f32.mrb[0].mxu0
      %3417 = vdwg.mxu0
      %v3418 = vadd.f32 %v2946, %v3260
      %v3419 = vadd.f32 %v2947, %v3265
      %v3420 = vadd.f32 %v2948, %v3270
      %v3421 = vadd.f32 %v2949, %v3275
      %v3422 = vadd.f32 %v2950, %v3280
      %v3423 = vadd.f32 %v2951, %v3285
      %v3424 = vadd.f32 %v2952, %v3290
      %v3425 = vadd.f32 %v2953, %v3295
      %v3426 = vadd.f32 %v2954, %v3300
      %v3427 = vadd.f32 %v2955, %v3305
      %v3428 = vadd.f32 %v2956, %v3310
      %v3429 = vadd.f32 %v2957, %v3315
      %v3430 = vadd.f32 %v2958, %v3320
      %v3431 = vadd.f32 %v2959, %v3325
      %v3432 = vadd.f32 %v2960, %v3330
      %v3433 = vadd.f32 %v2961, %v3335
      %v3434 = vadd.f32 %v2962, %v3340
      %v3435 = vadd.f32 %v2963, %v3345
      %v3436 = vadd.f32 %v2964, %v3350
      %v3437 = vadd.f32 %v2965, %v3355
      %v3438 = vadd.f32 %v2966, %v3360
      %v3439 = vadd.f32 %v2967, %v3365
      %v3440 = vadd.f32 %v2968, %v3370
      %v3441 = vadd.f32 %v2969, %v3375
      %v3442 = vadd.f32 %v2970, %v3380
      %v3443 = vadd.f32 %v2971, %v3385
      %v3444 = vadd.f32 %v2972, %v3390
      %v3445 = vadd.f32 %v2973, %v3395
      %v3446 = vadd.f32 %v2974, %v3400
      %v3447 = vadd.f32 %v2975, %v3405
      %v3448 = vadd.f32 %v2976, %v3410
      %v3449 = vadd.f32 %v2977, %v3415
      %3450 = vmatprep.subr.mxu0 0.0
      %3451 = vmatpush1.msra.mxu0 %v360
      %3452 = vmatprep.subr.mxu0 0.0
      %3453 = vmatpush1.msra.mxu0 %v361
      %3454 = vmatprep.subr.mxu0 0.0
      %3455 = vmatpush1.msra.mxu0 0.0
      %3456 = vmatprep.subr.mxu0 0.0
      %3457 = vmatpush1.msra.mxu0 0.0
      %3458 = vmatprep.subr.mxu0 0.0
      %3459 = vmatpush1.msra.mxu0 0.0
      %3460 = vmatprep.subr.mxu0 0.0
      %3461 = vmatpush1.msra.mxu0 0.0
      %3462 = vmatprep.subr.mxu0 0.0
      %3463 = vmatpush1.msra.mxu0 0.0
      %3464 = vmatprep.subr.mxu0 0.0
      %3465 = vmatpush1.msra.mxu0 0.0
      %3466 = vmatprep.subr.mxu0 0.0
      %3467 = vmatpush1.msra.mxu0 0.0
      %3468 = vmatprep.subr.mxu0 0.0
      %3469 = vmatpush1.msra.mxu0 0.0
      %3470 = vmatprep.subr.mxu0 0.0
      %3471 = vmatpush1.msra.mxu0 0.0
      %3472 = vmatprep.subr.mxu0 0.0
      %3473 = vmatpush1.msra.mxu0 0.0
      %3474 = vmatprep.subr.mxu0 0.0
      %3475 = vmatpush1.msra.mxu0 0.0
      %3476 = vmatprep.subr.mxu0 0.0
      %3477 = vmatpush1.msra.mxu0 0.0
      %3478 = vmatprep.subr.mxu0 0.0
      %3479 = vmatpush1.msra.mxu0 0.0
      %3480 = vmatprep.subr.mxu0 0.0
      %3481 = vmatpush1.msra.mxu0 0.0
      %3482 = vmatprep.subr.mxu0 0.0
      %3483 = vmatpush1.msra.mxu0 0.0
      %3484 = vmatprep.subr.mxu0 0.0
      %3485 = vmatpush1.msra.mxu0 0.0
      %3486 = vmatprep.subr.mxu0 0.0
      %3487 = vmatpush1.msra.mxu0 0.0
      %3488 = vmatprep.subr.mxu0 0.0
      %3489 = vmatpush1.msra.mxu0 0.0
      %3490 = vmatprep.subr.mxu0 0.0
      %3491 = vmatpush1.msra.mxu0 0.0
      %3492 = vmatprep.subr.mxu0 0.0
      %3493 = vmatpush1.msra.mxu0 0.0
      %3494 = vmatprep.subr.mxu0 0.0
      %3495 = vmatpush1.msra.mxu0 0.0
      %3496 = vmatprep.subr.mxu0 0.0
      %3497 = vmatpush1.msra.mxu0 0.0
      %3498 = vmatprep.subr.mxu0 0.0
      %3499 = vmatpush1.msra.mxu0 0.0
      %3500 = vmatprep.subr.mxu0 0.0
      %3501 = vmatpush1.msra.mxu0 0.0
      %3502 = vmatprep.subr.mxu0 0.0
      %3503 = vmatpush1.msra.mxu0 0.0
      %3504 = vmatprep.subr.mxu0 0.0
      %3505 = vmatpush1.msra.mxu0 0.0
      %3506 = vmatprep.subr.mxu0 0.0
      %3507 = vmatpush1.msra.mxu0 0.0
      %3508 = vmatprep.subr.mxu0 0.0
      %3509 = vmatpush1.msra.mxu0 0.0
      %3510 = vmatprep.subr.mxu0 0.0
      %3511 = vmatpush1.msra.mxu0 0.0
      %3512 = vmatprep.subr.mxu0 0.0
      %3513 = vmatpush1.msra.mxu0 0.0
      %3514 = vmatprep.mubr.f32.mxu0 0.0
      %3515 = vmatmul.mubr.f32.gmra.mrb[0].mxu0 %v2984
      %v3516 = vpop.f32.mrb[0].mxu0
      %v3517 = vadd.f32 0.0, %v3516
      %v3518 = vpop.f32.mrb[0].mxu0
      %3519 = vmatprep.mubr.f32.mxu0 0.0
      %3520 = vmatmul.mubr.f32.gmra.mrb[0].mxu0 %v2987
      %v3521 = vpop.f32.mrb[0].mxu0
      %v3522 = vadd.f32 0.0, %v3521
      %v3523 = vpop.f32.mrb[0].mxu0
      %3524 = vdwg.mxu0
      %s3525 = scalar_lea.vmem %s1, 1792
      %v3526 = vld [vmem:[%s3525] sm:$0xff]
      %v3527 = vld [vmem:[%s3525 + $0x8] sm:$0xff]
      %v3528 = vld [vmem:[%s3525 + $0x10] sm:$0xff]
      %v3529 = vld [vmem:[%s3525 + $0x18] sm:$0xff]
      %v3530 = vld [vmem:[%s3525 + $0x20] sm:$0xff]
      %v3531 = vld [vmem:[%s3525 + $0x28] sm:$0xff]
      %v3532 = vld [vmem:[%s3525 + $0x30] sm:$0xff]
      %v3533 = vld [vmem:[%s3525 + $0x38] sm:$0xff]
      %v3534 = vld [vmem:[%s3525 + $0x40] sm:$0xff]
      %v3535 = vld [vmem:[%s3525 + $0x48] sm:$0xff]
      %v3536 = vld [vmem:[%s3525 + $0x50] sm:$0xff]
      %v3537 = vld [vmem:[%s3525 + $0x58] sm:$0xff]
      %v3538 = vld [vmem:[%s3525 + $0x60] sm:$0xff]
      %v3539 = vld [vmem:[%s3525 + $0x68] sm:$0xff]
      %v3540 = vld [vmem:[%s3525 + $0x70] sm:$0xff]
      %v3541 = vld [vmem:[%s3525 + $0x78] sm:$0xff]
      %v3542 = vld [vmem:[%s3525 + $0x80] sm:$0xff]
      %v3543 = vld [vmem:[%s3525 + $0x88] sm:$0xff]
      %v3544 = vld [vmem:[%s3525 + $0x90] sm:$0xff]
      %v3545 = vld [vmem:[%s3525 + $0x98] sm:$0xff]
      %v3546 = vld [vmem:[%s3525 + $0xa0] sm:$0xff]
      %v3547 = vld [vmem:[%s3525 + $0xa8] sm:$0xff]
      %v3548 = vld [vmem:[%s3525 + $0xb0] sm:$0xff]
      %v3549 = vld [vmem:[%s3525 + $0xb8] sm:$0xff]
      %v3550 = vld [vmem:[%s3525 + $0xc0] sm:$0xff]
      %v3551 = vld [vmem:[%s3525 + $0xc8] sm:$0xff]
      %v3552 = vld [vmem:[%s3525 + $0xd0] sm:$0xff]
      %v3553 = vld [vmem:[%s3525 + $0xd8] sm:$0xff]
      %v3554 = vld [vmem:[%s3525 + $0xe0] sm:$0xff]
      %v3555 = vld [vmem:[%s3525 + $0xe8] sm:$0xff]
      %v3556 = vld [vmem:[%s3525 + $0xf0] sm:$0xff]
      %v3557 = vld [vmem:[%s3525 + $0xf8] sm:$0xff]
      %v3559 = vsel %vm245, %v3526, 0
      %v3562 = vsel %vm245, %v3527, 0
      %v3565 = vsel %vm245, %v3528, 0
      %v3568 = vsel %vm245, %v3529, 0
      %v3571 = vsel %vm245, %v3530, 0
      %v3574 = vsel %vm245, %v3531, 0
      %v3577 = vsel %vm245, %v3532, 0
      %v3580 = vsel %vm245, %v3533, 0
      %v3583 = vsel %vm245, %v3534, 0
      %v3586 = vsel %vm245, %v3535, 0
      %v3589 = vsel %vm245, %v3536, 0
      %v3592 = vsel %vm245, %v3537, 0
      %v3595 = vsel %vm245, %v3538, 0
      %v3598 = vsel %vm245, %v3539, 0
      %v3601 = vsel %vm245, %v3540, 0
      %v3604 = vsel %vm245, %v3541, 0
      %v3607 = vsel %vm245, %v3542, 0
      %v3610 = vsel %vm245, %v3543, 0
      %v3613 = vsel %vm245, %v3544, 0
      %v3616 = vsel %vm245, %v3545, 0
      %v3619 = vsel %vm245, %v3546, 0
      %v3622 = vsel %vm245, %v3547, 0
      %v3625 = vsel %vm245, %v3548, 0
      %v3628 = vsel %vm245, %v3549, 0
      %v3631 = vsel %vm245, %v3550, 0
      %v3634 = vsel %vm245, %v3551, 0
      %v3637 = vsel %vm245, %v3552, 0
      %v3640 = vsel %vm245, %v3553, 0
      %v3643 = vsel %vm245, %v3554, 0
      %v3646 = vsel %vm245, %v3555, 0
      %v3649 = vsel %vm245, %v3556, 0
      %v3652 = vsel %vm245, %v3557, 0
      %3654 = vmatprep.subr.mxu0 0.0
      %3655 = vmatpush1.msra.mxu0 %v3517
      %3656 = vmatprep.subr.mxu0 0.0
      %3657 = vmatpush1.msra.mxu0 %v3522
      %3658 = vmatprep.subr.mxu0 0.0
      %3659 = vmatpush1.msra.mxu0 0.0
      %3660 = vmatprep.subr.mxu0 0.0
      %3661 = vmatpush1.msra.mxu0 0.0
      %3662 = vmatprep.subr.mxu0 0.0
      %3663 = vmatpush1.msra.mxu0 0.0
      %3664 = vmatprep.subr.mxu0 0.0
      %3665 = vmatpush1.msra.mxu0 0.0
      %3666 = vmatprep.subr.mxu0 0.0
      %3667 = vmatpush1.msra.mxu0 0.0
      %3668 = vmatprep.subr.mxu0 0.0
      %3669 = vmatpush1.msra.mxu0 0.0
      %3670 = vmatprep.subr.mxu0 0.0
      %3671 = vmatpush1.msra.mxu0 0.0
      %3672 = vmatprep.subr.mxu0 0.0
      %3673 = vmatpush1.msra.mxu0 0.0
      %3674 = vmatprep.subr.mxu0 0.0
      %3675 = vmatpush1.msra.mxu0 0.0
      %3676 = vmatprep.subr.mxu0 0.0
      %3677 = vmatpush1.msra.mxu0 0.0
      %3678 = vmatprep.subr.mxu0 0.0
      %3679 = vmatpush1.msra.mxu0 0.0
      %3680 = vmatprep.subr.mxu0 0.0
      %3681 = vmatpush1.msra.mxu0 0.0
      %3682 = vmatprep.subr.mxu0 0.0
      %3683 = vmatpush1.msra.mxu0 0.0
      %3684 = vmatprep.subr.mxu0 0.0
      %3685 = vmatpush1.msra.mxu0 0.0
      %3686 = vmatprep.subr.mxu0 0.0
      %3687 = vmatpush1.msra.mxu0 0.0
      %3688 = vmatprep.subr.mxu0 0.0
      %3689 = vmatpush1.msra.mxu0 0.0
      %3690 = vmatprep.subr.mxu0 0.0
      %3691 = vmatpush1.msra.mxu0 0.0
      %3692 = vmatprep.subr.mxu0 0.0
      %3693 = vmatpush1.msra.mxu0 0.0
      %3694 = vmatprep.subr.mxu0 0.0
      %3695 = vmatpush1.msra.mxu0 0.0
      %3696 = vmatprep.subr.mxu0 0.0
      %3697 = vmatpush1.msra.mxu0 0.0
      %3698 = vmatprep.subr.mxu0 0.0
      %3699 = vmatpush1.msra.mxu0 0.0
      %3700 = vmatprep.subr.mxu0 0.0
      %3701 = vmatpush1.msra.mxu0 0.0
      %3702 = vmatprep.subr.mxu0 0.0
      %3703 = vmatpush1.msra.mxu0 0.0
      %3704 = vmatprep.subr.mxu0 0.0
      %3705 = vmatpush1.msra.mxu0 0.0
      %3706 = vmatprep.subr.mxu0 0.0
      %3707 = vmatpush1.msra.mxu0 0.0
      %3708 = vmatprep.subr.mxu0 0.0
      %3709 = vmatpush1.msra.mxu0 0.0
      %3710 = vmatprep.subr.mxu0 0.0
      %3711 = vmatpush1.msra.mxu0 0.0
      %3712 = vmatprep.subr.mxu0 0.0
      %3713 = vmatpush1.msra.mxu0 0.0
      %3714 = vmatprep.subr.mxu0 0.0
      %3715 = vmatpush1.msra.mxu0 0.0
      %3716 = vmatprep.subr.mxu0 0.0
      %3717 = vmatpush1.msra.mxu0 0.0
      %3718 = vmatprep.mubr.f32.mxu0 0.0
      %3719 = vmatmul.mubr.f32.gmra.mrb[0].mxu0 %v3559
      %v3720 = vpop.f32.mrb[0].mxu0
      %v3721 = vadd.f32 0.0, %v3720
      %v3722 = vpop.f32.mrb[0].mxu0
      %3723 = vmatprep.mubr.f32.mxu0 0.0
      %3724 = vmatmul.mubr.f32.gmra.mrb[0].mxu0 %v3562
      %v3725 = vpop.f32.mrb[0].mxu0
      %v3726 = vadd.f32 0.0, %v3725
      %v3727 = vpop.f32.mrb[0].mxu0
      %3728 = vmatprep.mubr.f32.mxu0 0.0
      %3729 = vmatmul.mubr.f32.gmra.mrb[0].mxu0 %v3565
      %v3730 = vpop.f32.mrb[0].mxu0
      %v3731 = vadd.f32 0.0, %v3730
      %v3732 = vpop.f32.mrb[0].mxu0
      %3733 = vmatprep.mubr.f32.mxu0 0.0
      %3734 = vmatmul.mubr.f32.gmra.mrb[0].mxu0 %v3568
      %v3735 = vpop.f32.mrb[0].mxu0
      %v3736 = vadd.f32 0.0, %v3735
      %v3737 = vpop.f32.mrb[0].mxu0
      %3738 = vmatprep.mubr.f32.mxu0 0.0
      %3739 = vmatmul.mubr.f32.gmra.mrb[0].mxu0 %v3571
      %v3740 = vpop.f32.mrb[0].mxu0
      %v3741 = vadd.f32 0.0, %v3740
      %v3742 = vpop.f32.mrb[0].mxu0
      %3743 = vmatprep.mubr.f32.mxu0 0.0
      %3744 = vmatmul.mubr.f32.gmra.mrb[0].mxu0 %v3574
      %v3745 = vpop.f32.mrb[0].mxu0
      %v3746 = vadd.f32 0.0, %v3745
      %v3747 = vpop.f32.mrb[0].mxu0
      %3748 = vmatprep.mubr.f32.mxu0 0.0
      %3749 = vmatmul.mubr.f32.gmra.mrb[0].mxu0 %v3577
      %v3750 = vpop.f32.mrb[0].mxu0
      %v3751 = vadd.f32 0.0, %v3750
      %v3752 = vpop.f32.mrb[0].mxu0
      %3753 = vmatprep.mubr.f32.mxu0 0.0
      %3754 = vmatmul.mubr.f32.gmra.mrb[0].mxu0 %v3580
      %v3755 = vpop.f32.mrb[0].mxu0
      %v3756 = vadd.f32 0.0, %v3755
      %v3757 = vpop.f32.mrb[0].mxu0
      %3758 = vmatprep.mubr.f32.mxu0 0.0
      %3759 = vmatmul.mubr.f32.gmra.mrb[0].mxu0 %v3583
      %v3760 = vpop.f32.mrb[0].mxu0
      %v3761 = vadd.f32 0.0, %v3760
      %v3762 = vpop.f32.mrb[0].mxu0
      %3763 = vmatprep.mubr.f32.mxu0 0.0
      %3764 = vmatmul.mubr.f32.gmra.mrb[0].mxu0 %v3586
      %v3765 = vpop.f32.mrb[0].mxu0
      %v3766 = vadd.f32 0.0, %v3765
      %v3767 = vpop.f32.mrb[0].mxu0
      %3768 = vmatprep.mubr.f32.mxu0 0.0
      %3769 = vmatmul.mubr.f32.gmra.mrb[0].mxu0 %v3589
      %v3770 = vpop.f32.mrb[0].mxu0
      %v3771 = vadd.f32 0.0, %v3770
      %v3772 = vpop.f32.mrb[0].mxu0
      %3773 = vmatprep.mubr.f32.mxu0 0.0
      %3774 = vmatmul.mubr.f32.gmra.mrb[0].mxu0 %v3592
      %v3775 = vpop.f32.mrb[0].mxu0
      %v3776 = vadd.f32 0.0, %v3775
      %v3777 = vpop.f32.mrb[0].mxu0
      %3778 = vmatprep.mubr.f32.mxu0 0.0
      %3779 = vmatmul.mubr.f32.gmra.mrb[0].mxu0 %v3595
      %v3780 = vpop.f32.mrb[0].mxu0
      %v3781 = vadd.f32 0.0, %v3780
      %v3782 = vpop.f32.mrb[0].mxu0
      %3783 = vmatprep.mubr.f32.mxu0 0.0
      %3784 = vmatmul.mubr.f32.gmra.mrb[0].mxu0 %v3598
      %v3785 = vpop.f32.mrb[0].mxu0
      %v3786 = vadd.f32 0.0, %v3785
      %v3787 = vpop.f32.mrb[0].mxu0
      %3788 = vmatprep.mubr.f32.mxu0 0.0
      %3789 = vmatmul.mubr.f32.gmra.mrb[0].mxu0 %v3601
      %v3790 = vpop.f32.mrb[0].mxu0
      %v3791 = vadd.f32 0.0, %v3790
      %v3792 = vpop.f32.mrb[0].mxu0
      %3793 = vmatprep.mubr.f32.mxu0 0.0
      %3794 = vmatmul.mubr.f32.gmra.mrb[0].mxu0 %v3604
      %v3795 = vpop.f32.mrb[0].mxu0
      %v3796 = vadd.f32 0.0, %v3795
      %v3797 = vpop.f32.mrb[0].mxu0
      %3798 = vmatprep.mubr.f32.mxu0 0.0
      %3799 = vmatmul.mubr.f32.gmra.mrb[0].mxu0 %v3607
      %v3800 = vpop.f32.mrb[0].mxu0
      %v3801 = vadd.f32 0.0, %v3800
      %v3802 = vpop.f32.mrb[0].mxu0
      %3803 = vmatprep.mubr.f32.mxu0 0.0
      %3804 = vmatmul.mubr.f32.gmra.mrb[0].mxu0 %v3610
      %v3805 = vpop.f32.mrb[0].mxu0
      %v3806 = vadd.f32 0.0, %v3805
      %v3807 = vpop.f32.mrb[0].mxu0
      %3808 = vmatprep.mubr.f32.mxu0 0.0
      %3809 = vmatmul.mubr.f32.gmra.mrb[0].mxu0 %v3613
      %v3810 = vpop.f32.mrb[0].mxu0
      %v3811 = vadd.f32 0.0, %v3810
      %v3812 = vpop.f32.mrb[0].mxu0
      %3813 = vmatprep.mubr.f32.mxu0 0.0
      %3814 = vmatmul.mubr.f32.gmra.mrb[0].mxu0 %v3616
      %v3815 = vpop.f32.mrb[0].mxu0
      %v3816 = vadd.f32 0.0, %v3815
      %v3817 = vpop.f32.mrb[0].mxu0
      %3818 = vmatprep.mubr.f32.mxu0 0.0
      %3819 = vmatmul.mubr.f32.gmra.mrb[0].mxu0 %v3619
      %v3820 = vpop.f32.mrb[0].mxu0
      %v3821 = vadd.f32 0.0, %v3820
      %v3822 = vpop.f32.mrb[0].mxu0
      %3823 = vmatprep.mubr.f32.mxu0 0.0
      %3824 = vmatmul.mubr.f32.gmra.mrb[0].mxu0 %v3622
      %v3825 = vpop.f32.mrb[0].mxu0
      %v3826 = vadd.f32 0.0, %v3825
      %v3827 = vpop.f32.mrb[0].mxu0
      %3828 = vmatprep.mubr.f32.mxu0 0.0
      %3829 = vmatmul.mubr.f32.gmra.mrb[0].mxu0 %v3625
      %v3830 = vpop.f32.mrb[0].mxu0
      %v3831 = vadd.f32 0.0, %v3830
      %v3832 = vpop.f32.mrb[0].mxu0
      %3833 = vmatprep.mubr.f32.mxu0 0.0
      %3834 = vmatmul.mubr.f32.gmra.mrb[0].mxu0 %v3628
      %v3835 = vpop.f32.mrb[0].mxu0
      %v3836 = vadd.f32 0.0, %v3835
      %v3837 = vpop.f32.mrb[0].mxu0
      %3838 = vmatprep.mubr.f32.mxu0 0.0
      %3839 = vmatmul.mubr.f32.gmra.mrb[0].mxu0 %v3631
      %v3840 = vpop.f32.mrb[0].mxu0
      %v3841 = vadd.f32 0.0, %v3840
      %v3842 = vpop.f32.mrb[0].mxu0
      %3843 = vmatprep.mubr.f32.mxu0 0.0
      %3844 = vmatmul.mubr.f32.gmra.mrb[0].mxu0 %v3634
      %v3845 = vpop.f32.mrb[0].mxu0
      %v3846 = vadd.f32 0.0, %v3845
      %v3847 = vpop.f32.mrb[0].mxu0
      %3848 = vmatprep.mubr.f32.mxu0 0.0
      %3849 = vmatmul.mubr.f32.gmra.mrb[0].mxu0 %v3637
      %v3850 = vpop.f32.mrb[0].mxu0
      %v3851 = vadd.f32 0.0, %v3850
      %v3852 = vpop.f32.mrb[0].mxu0
      %3853 = vmatprep.mubr.f32.mxu0 0.0
      %3854 = vmatmul.mubr.f32.gmra.mrb[0].mxu0 %v3640
      %v3855 = vpop.f32.mrb[0].mxu0
      %v3856 = vadd.f32 0.0, %v3855
      %v3857 = vpop.f32.mrb[0].mxu0
      %3858 = vmatprep.mubr.f32.mxu0 0.0
      %3859 = vmatmul.mubr.f32.gmra.mrb[0].mxu0 %v3643
      %v3860 = vpop.f32.mrb[0].mxu0
      %v3861 = vadd.f32 0.0, %v3860
      %v3862 = vpop.f32.mrb[0].mxu0
      %3863 = vmatprep.mubr.f32.mxu0 0.0
      %3864 = vmatmul.mubr.f32.gmra.mrb[0].mxu0 %v3646
      %v3865 = vpop.f32.mrb[0].mxu0
      %v3866 = vadd.f32 0.0, %v3865
      %v3867 = vpop.f32.mrb[0].mxu0
      %3868 = vmatprep.mubr.f32.mxu0 0.0
      %3869 = vmatmul.mubr.f32.gmra.mrb[0].mxu0 %v3649
      %v3870 = vpop.f32.mrb[0].mxu0
      %v3871 = vadd.f32 0.0, %v3870
      %v3872 = vpop.f32.mrb[0].mxu0
      %3873 = vmatprep.mubr.f32.mxu0 0.0
      %3874 = vmatmul.mubr.f32.gmra.mrb[0].mxu0 %v3652
      %v3875 = vpop.f32.mrb[0].mxu0
      %v3876 = vadd.f32 0.0, %v3875
      %v3877 = vpop.f32.mrb[0].mxu0
      %3878 = vdwg.mxu0
      %v3879 = vadd.f32 %v3418, %v3721
      %v3880 = vadd.f32 %v3419, %v3726
      %v3881 = vadd.f32 %v3420, %v3731
      %v3882 = vadd.f32 %v3421, %v3736
      %v3883 = vadd.f32 %v3422, %v3741
      %v3884 = vadd.f32 %v3423, %v3746
      %v3885 = vadd.f32 %v3424, %v3751
      %v3886 = vadd.f32 %v3425, %v3756
      %v3887 = vadd.f32 %v3426, %v3761
      %v3888 = vadd.f32 %v3427, %v3766
      %v3889 = vadd.f32 %v3428, %v3771
      %v3890 = vadd.f32 %v3429, %v3776
      %v3891 = vadd.f32 %v3430, %v3781
      %v3892 = vadd.f32 %v3431, %v3786
      %v3893 = vadd.f32 %v3432, %v3791
      %v3894 = vadd.f32 %v3433, %v3796
      %v3895 = vadd.f32 %v3434, %v3801
      %v3896 = vadd.f32 %v3435, %v3806
      %v3897 = vadd.f32 %v3436, %v3811
      %v3898 = vadd.f32 %v3437, %v3816
      %v3899 = vadd.f32 %v3438, %v3821
      %v3900 = vadd.f32 %v3439, %v3826
      %v3901 = vadd.f32 %v3440, %v3831
      %v3902 = vadd.f32 %v3441, %v3836
      %v3903 = vadd.f32 %v3442, %v3841
      %v3904 = vadd.f32 %v3443, %v3846
      %v3905 = vadd.f32 %v3444, %v3851
      %v3906 = vadd.f32 %v3445, %v3856
      %v3907 = vadd.f32 %v3446, %v3861
      %v3908 = vadd.f32 %v3447, %v3866
      %v3909 = vadd.f32 %v3448, %v3871
      %v3910 = vadd.f32 %v3449, %v3876
      %v3911 = vld [vmem:[%s3] sm:$0xff]
      %v3912 = vld [vmem:[%s3 + $0x8] sm:$0xff]
      %v3913 = vld [vmem:[%s3 + $0x10] sm:$0xff]
      %v3914 = vld [vmem:[%s3 + $0x18] sm:$0xff]
      %v3915 = vld [vmem:[%s3 + $0x20] sm:$0xff]
      %v3916 = vld [vmem:[%s3 + $0x28] sm:$0xff]
      %v3917 = vld [vmem:[%s3 + $0x30] sm:$0xff]
      %v3918 = vld [vmem:[%s3 + $0x38] sm:$0xff]
      %v3919 = vld [vmem:[%s3 + $0x40] sm:$0xff]
      %v3920 = vld [vmem:[%s3 + $0x48] sm:$0xff]
      %v3921 = vld [vmem:[%s3 + $0x50] sm:$0xff]
      %v3922 = vld [vmem:[%s3 + $0x58] sm:$0xff]
      %v3923 = vld [vmem:[%s3 + $0x60] sm:$0xff]
      %v3924 = vld [vmem:[%s3 + $0x68] sm:$0xff]
      %v3925 = vld [vmem:[%s3 + $0x70] sm:$0xff]
      %v3926 = vld [vmem:[%s3 + $0x78] sm:$0xff]
      %v3927 = vld [vmem:[%s3 + $0x80] sm:$0xff]
      %v3928 = vld [vmem:[%s3 + $0x88] sm:$0xff]
      %v3929 = vld [vmem:[%s3 + $0x90] sm:$0xff]
      %v3930 = vld [vmem:[%s3 + $0x98] sm:$0xff]
      %v3931 = vld [vmem:[%s3 + $0xa0] sm:$0xff]
      %v3932 = vld [vmem:[%s3 + $0xa8] sm:$0xff]
      %v3933 = vld [vmem:[%s3 + $0xb0] sm:$0xff]
      %v3934 = vld [vmem:[%s3 + $0xb8] sm:$0xff]
      %v3935 = vld [vmem:[%s3 + $0xc0] sm:$0xff]
      %v3936 = vld [vmem:[%s3 + $0xc8] sm:$0xff]
      %v3937 = vld [vmem:[%s3 + $0xd0] sm:$0xff]
      %v3938 = vld [vmem:[%s3 + $0xd8] sm:$0xff]
      %v3939 = vld [vmem:[%s3 + $0xe0] sm:$0xff]
      %v3940 = vld [vmem:[%s3 + $0xe8] sm:$0xff]
      %v3941 = vld [vmem:[%s3 + $0xf0] sm:$0xff]
      %v3942 = vld [vmem:[%s3 + $0xf8] sm:$0xff]
      %3944 = vset.pattern.permute.xlu0 0
      %3945 = vperm.xlu0 %3944, %v3911
      %v3946 = vpop.permute.xlu0 %3945
      %3949 = vset.pattern.permute.xlu0 0
      %3950 = vperm.xlu0 %3949, %v3912
      %v3951 = vpop.permute.xlu0 %3950
      %3954 = vset.pattern.permute.xlu0 0
      %3955 = vperm.xlu0 %3954, %v3913
      %v3956 = vpop.permute.xlu0 %3955
      %3959 = vset.pattern.permute.xlu0 0
      %3960 = vperm.xlu0 %3959, %v3914
      %v3961 = vpop.permute.xlu0 %3960
      %3964 = vset.pattern.permute.xlu0 0
      %3965 = vperm.xlu0 %3964, %v3915
      %v3966 = vpop.permute.xlu0 %3965
      %3969 = vset.pattern.permute.xlu0 0
      %3970 = vperm.xlu0 %3969, %v3916
      %v3971 = vpop.permute.xlu0 %3970
      %3974 = vset.pattern.permute.xlu0 0
      %3975 = vperm.xlu0 %3974, %v3917
      %v3976 = vpop.permute.xlu0 %3975
      %3979 = vset.pattern.permute.xlu0 0
      %3980 = vperm.xlu0 %3979, %v3918
      %v3981 = vpop.permute.xlu0 %3980
      %3984 = vset.pattern.permute.xlu0 0
      %3985 = vperm.xlu0 %3984, %v3919
      %v3986 = vpop.permute.xlu0 %3985
      %3989 = vset.pattern.permute.xlu0 0
      %3990 = vperm.xlu0 %3989, %v3920
      %v3991 = vpop.permute.xlu0 %3990
      %3994 = vset.pattern.permute.xlu0 0
      %3995 = vperm.xlu0 %3994, %v3921
      %v3996 = vpop.permute.xlu0 %3995
      %3999 = vset.pattern.permute.xlu0 0
      %4000 = vperm.xlu0 %3999, %v3922
      %v4001 = vpop.permute.xlu0 %4000
      %4004 = vset.pattern.permute.xlu0 0
      %4005 = vperm.xlu0 %4004, %v3923
      %v4006 = vpop.permute.xlu0 %4005
      %4009 = vset.pattern.permute.xlu0 0
      %4010 = vperm.xlu0 %4009, %v3924
      %v4011 = vpop.permute.xlu0 %4010
      %4014 = vset.pattern.permute.xlu0 0
      %4015 = vperm.xlu0 %4014, %v3925
      %v4016 = vpop.permute.xlu0 %4015
      %4019 = vset.pattern.permute.xlu0 0
      %4020 = vperm.xlu0 %4019, %v3926
      %v4021 = vpop.permute.xlu0 %4020
      %4024 = vset.pattern.permute.xlu0 0
      %4025 = vperm.xlu0 %4024, %v3927
      %v4026 = vpop.permute.xlu0 %4025
      %4029 = vset.pattern.permute.xlu0 0
      %4030 = vperm.xlu0 %4029, %v3928
      %v4031 = vpop.permute.xlu0 %4030
      %4034 = vset.pattern.permute.xlu0 0
      %4035 = vperm.xlu0 %4034, %v3929
      %v4036 = vpop.permute.xlu0 %4035
      %4039 = vset.pattern.permute.xlu0 0
      %4040 = vperm.xlu0 %4039, %v3930
      %v4041 = vpop.permute.xlu0 %4040
      %4044 = vset.pattern.permute.xlu0 0
      %4045 = vperm.xlu0 %4044, %v3931
      %v4046 = vpop.permute.xlu0 %4045
      %4049 = vset.pattern.permute.xlu0 0
      %4050 = vperm.xlu0 %4049, %v3932
      %v4051 = vpop.permute.xlu0 %4050
      %4054 = vset.pattern.permute.xlu0 0
      %4055 = vperm.xlu0 %4054, %v3933
      %v4056 = vpop.permute.xlu0 %4055
      %4059 = vset.pattern.permute.xlu0 0
      %4060 = vperm.xlu0 %4059, %v3934
      %v4061 = vpop.permute.xlu0 %4060
      %4064 = vset.pattern.permute.xlu0 0
      %4065 = vperm.xlu0 %4064, %v3935
      %v4066 = vpop.permute.xlu0 %4065
      %4069 = vset.pattern.permute.xlu0 0
      %4070 = vperm.xlu0 %4069, %v3936
      %v4071 = vpop.permute.xlu0 %4070
      %4074 = vset.pattern.permute.xlu0 0
      %4075 = vperm.xlu0 %4074, %v3937
      %v4076 = vpop.permute.xlu0 %4075
      %4079 = vset.pattern.permute.xlu0 0
      %4080 = vperm.xlu0 %4079, %v3938
      %v4081 = vpop.permute.xlu0 %4080
      %4084 = vset.pattern.permute.xlu0 0
      %4085 = vperm.xlu0 %4084, %v3939
      %v4086 = vpop.permute.xlu0 %4085
      %4089 = vset.pattern.permute.xlu0 0
      %4090 = vperm.xlu0 %4089, %v3940
      %v4091 = vpop.permute.xlu0 %4090
      %4094 = vset.pattern.permute.xlu0 0
      %4095 = vperm.xlu0 %4094, %v3941
      %v4096 = vpop.permute.xlu0 %4095
      %4099 = vset.pattern.permute.xlu0 0
      %4100 = vperm.xlu0 %4099, %v3942
      %v4101 = vpop.permute.xlu0 %4100
      %v4103 = vadd.f32 %v3879, %v3946
      %v4104 = vadd.f32 %v3880, %v3951
      %v4105 = vadd.f32 %v3881, %v3956
      %v4106 = vadd.f32 %v3882, %v3961
      %v4107 = vadd.f32 %v3883, %v3966
      %v4108 = vadd.f32 %v3884, %v3971
      %v4109 = vadd.f32 %v3885, %v3976
      %v4110 = vadd.f32 %v3886, %v3981
      %v4111 = vadd.f32 %v3887, %v3986
      %v4112 = vadd.f32 %v3888, %v3991
      %v4113 = vadd.f32 %v3889, %v3996
      %v4114 = vadd.f32 %v3890, %v4001
      %v4115 = vadd.f32 %v3891, %v4006
      %v4116 = vadd.f32 %v3892, %v4011
      %v4117 = vadd.f32 %v3893, %v4016
      %v4118 = vadd.f32 %v3894, %v4021
      %v4119 = vadd.f32 %v3895, %v4026
      %v4120 = vadd.f32 %v3896, %v4031
      %v4121 = vadd.f32 %v3897, %v4036
      %v4122 = vadd.f32 %v3898, %v4041
      %v4123 = vadd.f32 %v3899, %v4046
      %v4124 = vadd.f32 %v3900, %v4051
      %v4125 = vadd.f32 %v3901, %v4056
      %v4126 = vadd.f32 %v3902, %v4061
      %v4127 = vadd.f32 %v3903, %v4066
      %v4128 = vadd.f32 %v3904, %v4071
      %v4129 = vadd.f32 %v3905, %v4076
      %v4130 = vadd.f32 %v3906, %v4081
      %v4131 = vadd.f32 %v3907, %v4086
      %v4132 = vadd.f32 %v3908, %v4091
      %v4133 = vadd.f32 %v3909, %v4096
      %v4134 = vadd.f32 %v3910, %v4101
      %v4135 = vmul.f32 %v4103, 0.5
      %v4136 = vmul.f32 %v4104, 0.5
      %v4137 = vmul.f32 %v4105, 0.5
      %v4138 = vmul.f32 %v4106, 0.5
      %v4139 = vmul.f32 %v4107, 0.5
      %v4140 = vmul.f32 %v4108, 0.5
      %v4141 = vmul.f32 %v4109, 0.5
      %v4142 = vmul.f32 %v4110, 0.5
      %v4143 = vmul.f32 %v4111, 0.5
      %v4144 = vmul.f32 %v4112, 0.5
      %v4145 = vmul.f32 %v4113, 0.5
      %v4146 = vmul.f32 %v4114, 0.5
      %v4147 = vmul.f32 %v4115, 0.5
      %v4148 = vmul.f32 %v4116, 0.5
      %v4149 = vmul.f32 %v4117, 0.5
      %v4150 = vmul.f32 %v4118, 0.5
      %v4151 = vmul.f32 %v4119, 0.5
      %v4152 = vmul.f32 %v4120, 0.5
      %v4153 = vmul.f32 %v4121, 0.5
      %v4154 = vmul.f32 %v4122, 0.5
      %v4155 = vmul.f32 %v4123, 0.5
      %v4156 = vmul.f32 %v4124, 0.5
      %v4157 = vmul.f32 %v4125, 0.5
      %v4158 = vmul.f32 %v4126, 0.5
      %v4159 = vmul.f32 %v4127, 0.5
      %v4160 = vmul.f32 %v4128, 0.5
      %v4161 = vmul.f32 %v4129, 0.5
      %v4162 = vmul.f32 %v4130, 0.5
      %v4163 = vmul.f32 %v4131, 0.5
      %v4164 = vmul.f32 %v4132, 0.5
      %v4165 = vmul.f32 %v4133, 0.5
      %v4166 = vmul.f32 %v4134, 0.5
      %v4167 = vtanh.pop %v4135
      %v4168 = vtanh.pop %v4136
      %v4169 = vtanh.pop %v4137
      %v4170 = vtanh.pop %v4138
      %v4171 = vtanh.pop %v4139
      %v4172 = vtanh.pop %v4140
      %v4173 = vtanh.pop %v4141
      %v4174 = vtanh.pop %v4142
      %v4175 = vtanh.pop %v4143
      %v4176 = vtanh.pop %v4144
      %v4177 = vtanh.pop %v4145
      %v4178 = vtanh.pop %v4146
      %v4179 = vtanh.pop %v4147
      %v4180 = vtanh.pop %v4148
      %v4181 = vtanh.pop %v4149
      %v4182 = vtanh.pop %v4150
      %v4183 = vtanh.pop %v4151
      %v4184 = vtanh.pop %v4152
      %v4185 = vtanh.pop %v4153
      %v4186 = vtanh.pop %v4154
      %v4187 = vtanh.pop %v4155
      %v4188 = vtanh.pop %v4156
      %v4189 = vtanh.pop %v4157
      %v4190 = vtanh.pop %v4158
      %v4191 = vtanh.pop %v4159
      %v4192 = vtanh.pop %v4160
      %v4193 = vtanh.pop %v4161
      %v4194 = vtanh.pop %v4162
      %v4195 = vtanh.pop %v4163
      %v4196 = vtanh.pop %v4164
      %v4197 = vtanh.pop %v4165
      %v4198 = vtanh.pop %v4166
      %v4199 = vadd.f32 %v4167, 1.0
      %v4200 = vadd.f32 %v4168, 1.0
      %v4201 = vadd.f32 %v4169, 1.0
      %v4202 = vadd.f32 %v4170, 1.0
      %v4203 = vadd.f32 %v4171, 1.0
      %v4204 = vadd.f32 %v4172, 1.0
      %v4205 = vadd.f32 %v4173, 1.0
      %v4206 = vadd.f32 %v4174, 1.0
      %v4207 = vadd.f32 %v4175, 1.0
      %v4208 = vadd.f32 %v4176, 1.0
      %v4209 = vadd.f32 %v4177, 1.0
      %v4210 = vadd.f32 %v4178, 1.0
      %v4211 = vadd.f32 %v4179, 1.0
      %v4212 = vadd.f32 %v4180, 1.0
      %v4213 = vadd.f32 %v4181, 1.0
      %v4214 = vadd.f32 %v4182, 1.0
      %v4215 = vadd.f32 %v4183, 1.0
      %v4216 = vadd.f32 %v4184, 1.0
      %v4217 = vadd.f32 %v4185, 1.0
      %v4218 = vadd.f32 %v4186, 1.0
      %v4219 = vadd.f32 %v4187, 1.0
      %v4220 = vadd.f32 %v4188, 1.0
      %v4221 = vadd.f32 %v4189, 1.0
      %v4222 = vadd.f32 %v4190, 1.0
      %v4223 = vadd.f32 %v4191, 1.0
      %v4224 = vadd.f32 %v4192, 1.0
      %v4225 = vadd.f32 %v4193, 1.0
      %v4226 = vadd.f32 %v4194, 1.0
      %v4227 = vadd.f32 %v4195, 1.0
      %v4228 = vadd.f32 %v4196, 1.0
      %v4229 = vadd.f32 %v4197, 1.0
      %v4230 = vadd.f32 %v4198, 1.0
      %v4231 = vmul.f32 %v4199, 0.5
      %v4232 = vmul.f32 %v4200, 0.5
      %v4233 = vmul.f32 %v4201, 0.5
      %v4234 = vmul.f32 %v4202, 0.5
      %v4235 = vmul.f32 %v4203, 0.5
      %v4236 = vmul.f32 %v4204, 0.5
      %v4237 = vmul.f32 %v4205, 0.5
      %v4238 = vmul.f32 %v4206, 0.5
      %v4239 = vmul.f32 %v4207, 0.5
      %v4240 = vmul.f32 %v4208, 0.5
      %v4241 = vmul.f32 %v4209, 0.5
      %v4242 = vmul.f32 %v4210, 0.5
      %v4243 = vmul.f32 %v4211, 0.5
      %v4244 = vmul.f32 %v4212, 0.5
      %v4245 = vmul.f32 %v4213, 0.5
      %v4246 = vmul.f32 %v4214, 0.5
      %v4247 = vmul.f32 %v4215, 0.5
      %v4248 = vmul.f32 %v4216, 0.5
      %v4249 = vmul.f32 %v4217, 0.5
      %v4250 = vmul.f32 %v4218, 0.5
      %v4251 = vmul.f32 %v4219, 0.5
      %v4252 = vmul.f32 %v4220, 0.5
      %v4253 = vmul.f32 %v4221, 0.5
      %v4254 = vmul.f32 %v4222, 0.5
      %v4255 = vmul.f32 %v4223, 0.5
      %v4256 = vmul.f32 %v4224, 0.5
      %v4257 = vmul.f32 %v4225, 0.5
      %v4258 = vmul.f32 %v4226, 0.5
      %v4259 = vmul.f32 %v4227, 0.5
      %v4260 = vmul.f32 %v4228, 0.5
      %v4261 = vmul.f32 %v4229, 0.5
      %v4262 = vmul.f32 %v4230, 0.5
      %v4263 = vmul.f32 %v4103, %v4231
      %v4264 = vmul.f32 %v4104, %v4232
      %v4265 = vmul.f32 %v4105, %v4233
      %v4266 = vmul.f32 %v4106, %v4234
      %v4267 = vmul.f32 %v4107, %v4235
      %v4268 = vmul.f32 %v4108, %v4236
      %v4269 = vmul.f32 %v4109, %v4237
      %v4270 = vmul.f32 %v4110, %v4238
      %v4271 = vmul.f32 %v4111, %v4239
      %v4272 = vmul.f32 %v4112, %v4240
      %v4273 = vmul.f32 %v4113, %v4241
      %v4274 = vmul.f32 %v4114, %v4242
      %v4275 = vmul.f32 %v4115, %v4243
      %v4276 = vmul.f32 %v4116, %v4244
      %v4277 = vmul.f32 %v4117, %v4245
      %v4278 = vmul.f32 %v4118, %v4246
      %v4279 = vmul.f32 %v4119, %v4247
      %v4280 = vmul.f32 %v4120, %v4248
      %v4281 = vmul.f32 %v4121, %v4249
      %v4282 = vmul.f32 %v4122, %v4250
      %v4283 = vmul.f32 %v4123, %v4251
      %v4284 = vmul.f32 %v4124, %v4252
      %v4285 = vmul.f32 %v4125, %v4253
      %v4286 = vmul.f32 %v4126, %v4254
      %v4287 = vmul.f32 %v4127, %v4255
      %v4288 = vmul.f32 %v4128, %v4256
      %v4289 = vmul.f32 %v4129, %v4257
      %v4290 = vmul.f32 %v4130, %v4258
      %v4291 = vmul.f32 %v4131, %v4259
      %v4292 = vmul.f32 %v4132, %v4260
      %v4293 = vmul.f32 %v4133, %v4261
      %v4294 = vmul.f32 %v4134, %v4262
      %vm4295 = vcmask 64512
      %4296 = vst.msk [vmem:[%s225] sm:$0xff] %vm4295, %v4263
      %4297 = vst.msk [vmem:[%s225 + $0x8] sm:$0xff] %vm4295, %v4264
      %4298 = vst.msk [vmem:[%s225 + $0x10] sm:$0xff] %vm4295, %v4265
      %4299 = vst.msk [vmem:[%s225 + $0x18] sm:$0xff] %vm4295, %v4266
      %4300 = vst.msk [vmem:[%s225 + $0x20] sm:$0xff] %vm4295, %v4267
      %4301 = vst.msk [vmem:[%s225 + $0x28] sm:$0xff] %vm4295, %v4268
      %4302 = vst.msk [vmem:[%s225 + $0x30] sm:$0xff] %vm4295, %v4269
      %4303 = vst.msk [vmem:[%s225 + $0x38] sm:$0xff] %vm4295, %v4270
      %4304 = vst.msk [vmem:[%s225 + $0x40] sm:$0xff] %vm4295, %v4271
      %4305 = vst.msk [vmem:[%s225 + $0x48] sm:$0xff] %vm4295, %v4272
      %4306 = vst.msk [vmem:[%s225 + $0x50] sm:$0xff] %vm4295, %v4273
      %4307 = vst.msk [vmem:[%s225 + $0x58] sm:$0xff] %vm4295, %v4274
      %4308 = vst.msk [vmem:[%s225 + $0x60] sm:$0xff] %vm4295, %v4275
      %4309 = vst.msk [vmem:[%s225 + $0x68] sm:$0xff] %vm4295, %v4276
      %4310 = vst.msk [vmem:[%s225 + $0x70] sm:$0xff] %vm4295, %v4277
      %4311 = vst.msk [vmem:[%s225 + $0x78] sm:$0xff] %vm4295, %v4278
      %4312 = vst.msk [vmem:[%s225 + $0x80] sm:$0xff] %vm4295, %v4279
      %4313 = vst.msk [vmem:[%s225 + $0x88] sm:$0xff] %vm4295, %v4280
      %4314 = vst.msk [vmem:[%s225 + $0x90] sm:$0xff] %vm4295, %v4281
      %4315 = vst.msk [vmem:[%s225 + $0x98] sm:$0xff] %vm4295, %v4282
      %4316 = vst.msk [vmem:[%s225 + $0xa0] sm:$0xff] %vm4295, %v4283
      %4317 = vst.msk [vmem:[%s225 + $0xa8] sm:$0xff] %vm4295, %v4284
      %4318 = vst.msk [vmem:[%s225 + $0xb0] sm:$0xff] %vm4295, %v4285
      %4319 = vst.msk [vmem:[%s225 + $0xb8] sm:$0xff] %vm4295, %v4286
      %4320 = vst.msk [vmem:[%s225 + $0xc0] sm:$0xff] %vm4295, %v4287
      %4321 = vst.msk [vmem:[%s225 + $0xc8] sm:$0xff] %vm4295, %v4288
      %4322 = vst.msk [vmem:[%s225 + $0xd0] sm:$0xff] %vm4295, %v4289
      %4323 = vst.msk [vmem:[%s225 + $0xd8] sm:$0xff] %vm4295, %v4290
      %4324 = vst.msk [vmem:[%s225 + $0xe0] sm:$0xff] %vm4295, %v4291
      %4325 = vst.msk [vmem:[%s225 + $0xe8] sm:$0xff] %vm4295, %v4292
      %4326 = vst.msk [vmem:[%s225 + $0xf0] sm:$0xff] %vm4295, %v4293
      %4327 = vst.msk [vmem:[%s225 + $0xf8] sm:$0xff] %vm4295, %v4294
      %p4328 = scmp.lt.s32.totalorder %s19, 1
      %s4329 = scalar_select %p4328, %s19, 1
      %s4330 = smul.addr %s4329, 32
      %s4331 = smul.addr %s4330, 8
      %s4332 = scalar_lea.vmem %s4, %s4331
      // Predicated region
      $region37: #{tpu_custom_call.1} parent=35 // pred_check
        %p4333 = pneg %p136
      $region38: #{tpu_custom_call.1} parent=35 // pred_check_branch
        %4335 = sbr.rel (%p4333) target = $region40
      $region39: #{tpu_custom_call.1} parent=35 // pred_region
        _
      $region40: #{tpu_custom_call.1} parent=35 // pred_fallthru
        _
    $region36: #{tpu_custom_call.1} parent=5 // pred_fallthru
      _
    %p4336 = scmp.le.s32.totalorder 2, %s10
    // Predicated region
    $region41: #{tpu_custom_call.1} parent=5 // pred_check
      %p4337 = pneg %p4336
    $region42: #{tpu_custom_call.1} parent=5 // pred_check_branch
      %4339 = sbr.rel (%p4337) target = $region44
    $region43: #{tpu_custom_call.1} parent=5 // pred_region
      %s4340 = ssub.s32 %s10, 2
      // Predicated region
      $region45: #{tpu_custom_call.1} parent=43 // pred_check
        %p4341 = pneg %p142
      $region46: #{tpu_custom_call.1} parent=43 // pred_check_branch
        %4343 = sbr.rel (%p4341) target = $region48
      $region47: #{tpu_custom_call.1} parent=43 // pred_region
        %p4344 = scmp.lt.s32.totalorder %s21, 1
        %s4345 = scalar_select %p4344, %s21, 1
        %s4346 = smul.addr %s4345, 32
        %s4347 = smul.addr %s4346, 8
        %s4348 = scalar_lea.vmem %s4, %s4347
      $region48: #{tpu_custom_call.1} parent=43 // pred_fallthru
        _
    $region44: #{tpu_custom_call.1} parent=5 // pred_fallthru
      _
  $region6: #{tpu_custom_call.1} parent=0 // loop_footer
    %s14 = sadd.s32 1, %s10
  $region7: #{tpu_custom_call.1} parent=0 // loop_footer_branch
    %9 = sbr.rel target = $region3
  $region8: #{tpu_custom_call.1} parent=0 // loop_exit
    _

</llo_original>
